<compile_context>
chip_gen: v6e
topology: v6e:2x2x1
jax: 0.10.0
libtpu: 0.0.40
codegen_flags: <defaults>
</compile_context>

<pallas_src>
import functools

import jax
import jax.numpy as jnp
from jax.experimental import pallas as pl
from jax.experimental.pallas import tpu as pltpu

EPS = 1e-6       # matches LayerNorm(eps=1e-06)
NEG_INF = -1e9   # matches masked_fill(mask == 0, -1e9)

_NUM_LAYER_PARAMS = 12
_MATMUL_WEIGHT_IDX = (2, 4, 8, 10)   # wqkv, wo, w1, w2 within a layer param list


# --------------------------------------------------------------------------- #
# Kernel                                                                      #
# --------------------------------------------------------------------------- #
def _layernorm(v, a, b):
    """Matches the custom LayerNorm: unbiased std (N-1), eps added to std."""
    d = v.shape[-1]
    mean = jnp.mean(v, axis=-1, keepdims=True)
    var = jnp.sum((v - mean) ** 2, axis=-1, keepdims=True) * (1.0 / (d - 1))
    std = jnp.sqrt(var)
    # Exact reciprocal here (approx=False) for tighter parity with eval mode.
    return a * (v - mean) * pl.reciprocal(std + EPS, approx=False) + b


def _attention_ffn_layer(x, bias, prm, ctx_scratch, *, num_heads, mdt):
    """One pre-norm encoder layer on an (n, d) activation slab (n = bt*s)."""
    (ln1a_ref, ln1b_ref, wqkv_ref, bqkv_ref, wo_ref, bo_ref,
     ln2a_ref, ln2b_ref, w1_ref, b1_ref, w2_ref, b2_ref) = prm
    n, d = x.shape
    dk = d // num_heads
    bt = bias.shape[0]
    s = n // bt

    # -------- sublayer 0: x + MultiHeadAttention(LayerNorm(x)) --------------
    hn = _layernorm(x, ln1a_ref[...], ln1b_ref[...])
    # Fused QKV: one lane-dense (n, 3d) matmul (weights already in MXU dtype).
    # The 1/sqrt(d_k) scale is pre-folded into the Q columns of wqkv/bqkv.
    qkv = jnp.dot(hn.astype(mdt), wqkv_ref[...],
                  preferred_element_type=jnp.float32) + bqkv_ref[...]
    qkv_m = qkv.astype(mdt)   # single cast; every per-head slice reads this copy

    # Heads: short static loop. Each head's context is written into its
    # lane-contiguous column chunk of the VMEM scratch, then ONE full-K
    # (n, d) @ (d, d) Wo matmul replaces H small (K=d_k) matmuls + adds.
    # TODO(synk): for d_k not a multiple of 128 the per-head column slices are
    #             not lane-tile aligned (fine at toy size; real configs should
    #             use d_k=128 or a head-aligned column layout).
    for hi in range(num_heads):
        lo = hi * dk
        qh = qkv_m[:, lo:lo + dk].reshape(bt, s, dk)
        kh = qkv_m[:, d + lo:d + lo + dk].reshape(bt, s, dk)
        vh = qkv_m[:, 2 * d + lo:2 * d + lo + dk].reshape(bt, s, dk)
        sc = jnp.einsum('bqd,bkd->bqk', qh, kh,
                        preferred_element_type=jnp.float32) + bias      # (bt,s,s)
        m = jnp.max(sc, axis=-1, keepdims=True)
        p = jnp.exp(sc - m)
        p = p * pl.reciprocal(jnp.sum(p, axis=-1, keepdims=True), approx=True)
        ctx = jnp.einsum('bqk,bkd->bqd', p.astype(mdt), vh,
                         preferred_element_type=jnp.float32)            # (bt,s,dk)
        ctx_scratch[:, lo:lo + dk] = ctx.reshape(n, dk).astype(mdt)

    attn = jnp.dot(ctx_scratch[...], wo_ref[...],
                   preferred_element_type=jnp.float32)
    x1 = x + attn + bo_ref[...]           # residual (dropout = identity in eval)

    # -------- sublayer 1: x + PositionwiseFFN(LayerNorm(x)) -----------------
    h2 = _layernorm(x1, ln2a_ref[...], ln2b_ref[...])
    f = jnp.dot(h2.astype(mdt), w1_ref[...],
                preferred_element_type=jnp.float32) + b1_ref[...]
    f = jnp.maximum(f, 0.0)
    f = jnp.dot(f.astype(mdt), w2_ref[...],
                preferred_element_type=jnp.float32) + b2_ref[...]
    return x1 + f


def _encode_kernel(x_ref, mask1_ref, mask2_ref, *refs, num_heads, mdt):
    """Fused EncoderDecoder.encode: encoder1(x, m1) + encoder2(x, m2)."""
    ctx_scratch = refs[-1]
    out_ref = refs[-2]
    p1 = refs[:_NUM_LAYER_PARAMS]
    p2 = refs[_NUM_LAYER_PARAMS:2 * _NUM_LAYER_PARAMS]

    bt, s, d = x_ref.shape
    n = bt * s
    x = x_ref[...].reshape(n, d)                                         # one slab

    # Additive mask biases, hoisted out of the head loops (computed once/step).
    bias1 = jnp.where(mask1_ref[...] == 0.0, jnp.float32(NEG_INF), jnp.float32(0.0))
    bias2 = jnp.where(mask2_ref[...] == 0.0, jnp.float32(NEG_INF), jnp.float32(0.0))

    e1 = _attention_ffn_layer(x, bias1, p1, ctx_scratch,
                              num_heads=num_heads, mdt=mdt)
    e2 = _attention_ffn_layer(x, bias2, p2, ctx_scratch,
                              num_heads=num_heads, mdt=mdt)
    # Training-only Gaussian noise is skipped (eval semantics).
    out_ref[...] = (e1 + e2).reshape(bt, s, d).astype(out_ref.dtype)


# --------------------------------------------------------------------------- #
# Wrapper helpers                                                             #
# --------------------------------------------------------------------------- #
def _vmem_limit_bytes():
    try:
        cap = pltpu.get_tpu_info().vmem_capacity_bytes
    except Exception:  # benign capability query; conservative fallback
        cap = 64 * 1024 * 1024
    # Leave headroom for Mosaic internal scratch:
    #   v7x (64 MiB physical)  -> ~48 MiB, v5e/v6e (128 MiB) -> 96 MiB (cap 100).
    return int(min(cap * 3 // 4, 100 * 1024 * 1024))


def _pick_batch_block(b, s, d, d_ff, vmem_budget_bytes):
    """Largest divisor of b fitting the budget, keeping >=2 grid steps if b>1."""
    # Coarse per-batch-row working-set estimate (bytes): x/out double buffers,
    # qkv (f32 + bf16 copy), per-head scores+probs, FFN intermediate, temps.
    per_row = s * (4 * d * 4 + 3 * d * 6 + 2 * s * 4 + d_ff * 6 + 4 * d * 4)
    bt = max(1, min(b, vmem_budget_bytes // max(per_row, 1)))
    if bt >= b and b > 1:
        bt = max(1, b // 2)   # never collapse the grid to 1 (pipelining / megacore)
    while b % bt:
        bt -= 1
    return bt


_BUFFERED_WEIGHTS_OK = None


def _buffered_weights_supported():
    """One-time (cached) probe for pl.Buffered(1) on grid-invariant inputs."""
    global _BUFFERED_WEIGHTS_OK
    if _BUFFERED_WEIGHTS_OK is not None:
        return _BUFFERED_WEIGHTS_OK

    def _probe(w_ref, x_ref, o_ref):
        o_ref[...] = x_ref[...] + w_ref[...]

    try:
        w = jnp.zeros((8, 128), jnp.float32)
        x = jnp.zeros((16, 128), jnp.float32)
        out = pl.pallas_call(
            _probe,
            out_shape=jax.ShapeDtypeStruct((16, 128), jnp.float32),
            grid=(2,),
            in_specs=[pl.BlockSpec((8, 128), lambda i: (0, 0),
                                   pipeline_mode=pl.Buffered(1)),
                      pl.BlockSpec((8, 128), lambda i: (i, 0))],
            out_specs=pl.BlockSpec((8, 128), lambda i: (i, 0)),
        )(w, x)
        jax.block_until_ready(out)
        _BUFFERED_WEIGHTS_OK = True
    except Exception:  # tiny capability probe only; fallback = default buffering
        _BUFFERED_WEIGHTS_OK = False
    return _BUFFERED_WEIGHTS_OK


# --------------------------------------------------------------------------- #
# Public entry point                                                          #
# --------------------------------------------------------------------------- #
def encode(src, src_mask1, src_mask2, params1, params2, *, num_heads,
           batch_block=None, use_bf16_mxu=True):
    """EncoderDecoder.encode (eval): one fused Pallas kernel for e1(src,m1)+e2(src,m2)."""
    b, s, d = src.shape
    assert d % num_heads == 0, "d_model must be divisible by num_heads"
    d_ff = params1[8].shape[1]

    vmem_limit = _vmem_limit_bytes()
    bt = batch_block if batch_block is not None else _pick_batch_block(
        b, s, d, d_ff, vmem_limit // 2)
    assert b % bt == 0, "batch_block must divide the batch size"

    mdt = jnp.bfloat16 if use_bf16_mxu else jnp.float32

    def prep(params):
        # One-time cast of the matmul weights to the MXU input dtype: halves
        # weight DMA/VMEM residency and removes per-step in-kernel casts.
        return [p.astype(mdt) if i in _MATMUL_WEIGHT_IDX else p.astype(jnp.float32)
                for i, p in enumerate(params)]

    params1 = prep(params1)
    params2 = prep(params2)

    buffered = _buffered_weights_supported()

    def weight_spec(shape):
        nd = len(shape)
        imap = lambda i, _nd=nd: (0,) * _nd     # grid-invariant (replicated) block
        if buffered:
            # Weights never change across grid steps -> single-buffer them.
            return pl.BlockSpec(shape, imap, pipeline_mode=pl.Buffered(1))
        return pl.BlockSpec(shape, imap)

    in_specs = (
        [pl.BlockSpec((bt, s, d), lambda i: (i, 0, 0)),   # src
         pl.BlockSpec((bt, 1, s), lambda i: (i, 0, 0)),   # mask1
         pl.BlockSpec((bt, 1, s), lambda i: (i, 0, 0))]   # mask2
        + [weight_spec(p.shape) for p in params1]
        + [weight_spec(p.shape) for p in params2]
    )

    kernel = functools.partial(_encode_kernel, num_heads=num_heads, mdt=mdt)
    return pl.pallas_call(
        kernel,
        out_shape=jax.ShapeDtypeStruct((b, s, d), src.dtype),
        grid=(b // bt,),
        in_specs=in_specs,
        out_specs=pl.BlockSpec((bt, s, d), lambda i: (i, 0, 0)),
        scratch_shapes=[pltpu.VMEM((bt * s, d), mdt)],   # head-concat scratch
        compiler_params=pltpu.CompilerParams(
            dimension_semantics=("parallel",),   # batch-tile grid; v7x can shard it
            vmem_limit_bytes=vmem_limit,         # derived from chip VMEM capacity
        ),
    )(src, src_mask1, src_mask2, *params1, *params2)


# --------------------------------------------------------------------------- #
# Parameter construction + pure-JAX reference                                 #
# --------------------------------------------------------------------------- #
def make_encoder_layer_params(key, d_model, d_ff, num_heads, scale=0.1):
    """Kernel-layout params for one pre-norm encoder layer.

    Weights are stored [in, out] (PyTorch W.T). Q/K/V are fused into one
    (D, 3D) matrix with 1/sqrt(d_k) pre-folded into the Q columns; Wo stays
    (D, D) so the head concat feeds a single full-K output projection.
    Order: [ln1_a, ln1_b, wqkv, bqkv, wo, bo, ln2_a, ln2_b, w1, b1, w2, b2]
    """
    ks = jax.random.split(key, 12)

    def w(k, shape):
        return (scale * jax.random.normal(k, shape)).astype(jnp.float32)

    wq, bq = w(ks[0], (d_model, d_model)), w(ks[1], (1, d_model))
    wk, bk = w(ks[2], (d_model, d_model)), w(ks[3], (1, d_model))
    wv, bv = w(ks[4], (d_model, d_model)), w(ks[5], (1, d_model))
    wo, bo = w(ks[6], (d_model, d_model)), w(ks[7], (1, d_model))
    w1, b1 = w(ks[8], (d_model, d_ff)), w(ks[9], (1, d_ff))
    w2, b2 = w(ks[10], (d_ff, d_model)), w(ks[11], (1, d_model))

    inv_sqrt_dk = 1.0 / ((d_model // num_heads) ** 0.5)
    wqkv = jnp.concatenate([wq * inv_sqrt_dk, wk, wv], axis=1)   # (D, 3D)
    bqkv = jnp.concatenate([bq * inv_sqrt_dk, bk, bv], axis=1)   # (1, 3D)
    ones = jnp.ones((1, d_model), jnp.float32)
    zeros = jnp.zeros((1, d_model), jnp.float32)
    return [ones, zeros, wqkv, bqkv, wo, bo, ones, zeros, w1, b1, w2, b2]


def _encoder_layer_reference(x, mask, params, *, num_heads):
    """Pure-JAX mirror of the PyTorch eval forward (scale baked into wqkv)."""
    ln1a, ln1b, wqkv, bqkv, wo, bo, ln2a, ln2b, w1, b1, w2, b2 = params
    b, s, d = x.shape
    h = num_heads
    dk = d // h

    def ln(v, a, bb):
        mean = jnp.mean(v, axis=-1, keepdims=True)
        var = jnp.sum((v - mean) ** 2, axis=-1, keepdims=True) / (d - 1)
        return a * (v - mean) / (jnp.sqrt(var) + EPS) + bb

    hn = ln(x, ln1a, ln1b)
    qkv = hn @ wqkv + bqkv
    q, k, v = qkv[..., :d], qkv[..., d:2 * d], qkv[..., 2 * d:]
    q = q.reshape(b, s, h, dk).transpose(0, 2, 1, 3)   # 1/sqrt(dk) already folded
    k = k.reshape(b, s, h, dk).transpose(0, 2, 1, 3)
    v = v.reshape(b, s, h, dk).transpose(0, 2, 1, 3)
    scores = jnp.einsum('bhqd,bhkd->bhqk', q, k)
    scores = jnp.where(mask[:, None, :, :] == 0.0, NEG_INF, scores)
    p = jax.nn.softmax(scores, axis=-1)
    ctx = jnp.einsum('bhqk,bhkd->bhqd', p, v)
    ctx = ctx.transpose(0, 2, 1, 3).reshape(b, s, d)
    x1 = x + ctx @ wo + bo
    h2 = ln(x1, ln2a, ln2b)
    f = jnp.maximum(h2 @ w1 + b1, 0.0)
    return x1 + f @ w2 + b2


def _encode_reference(src, m1, m2, p1, p2, *, num_heads):
    return (_encoder_layer_reference(src, m1, p1, num_heads=num_heads)
            + _encoder_layer_reference(src, m2, p2, num_heads=num_heads))


# --------------------------------------------------------------------------- #
# Test harness (toy shapes — tune with D>=512, S>=128 for real perf work)     #
# --------------------------------------------------------------------------- #
if __name__ == "__main__":
    B, S, D, H, DFF = 2, 8, 32, 4, 64   # batch=2, seq=8, d_model=32, 4 heads, d_ff=64

    root = jax.random.PRNGKey(0)
    k_p1, k_p2, k_x = jax.random.split(root, 3)
    params1 = make_encoder_layer_params(k_p1, D, DFF, H)   # encoder1
    params2 = make_encoder_layer_params(k_p2, D, DFF, H)   # encoder2 (deepcopy twin)

    src = jax.random.normal(k_x, (B, S, D), dtype=jnp.float32)
    src_mask1 = jnp.ones((B, 1, S), jnp.float32).at[:, :, S - 2:].set(0.0)
    src_mask2 = jnp.ones((B, 1, S), jnp.float32).at[:, :, :1].set(0.0)

    ref = _encode_reference(src, src_mask1, src_mask2, params1, params2,
                            num_heads=H)

    # f32-MXU path: tight parity with eval-mode semantics.
    out_f32 = jax.block_until_ready(
        encode(src, src_mask1, src_mask2, params1, params2,
               num_heads=H, use_bf16_mxu=False))
    assert out_f32.shape == (B, S, D)
    err_f32 = float(jnp.max(jnp.abs(out_f32 - ref)))
    assert err_f32 < 1e-2, f"f32 kernel/reference mismatch: max abs err = {err_f32}"

    # Default path: bf16 MXU inputs / f32 accumulation (recommended on all gens).
    out = jax.block_until_ready(
        encode(src, src_mask1, src_mask2, params1, params2, num_heads=H))
    err = float(jnp.max(jnp.abs(out - ref)))
    assert err < 1.5e-1, f"bf16 kernel/reference mismatch: max abs err = {err}"

    print("KERNEL_OK")
</pallas_src>

<mosaic_0001>
module attributes {stable_mosaic.version = 11 : i64} {
  func.func @_probe(%arg0: i32, %arg1: memref<8x128xf32, #tpu.memory_space<vmem>>, %arg2: memref<8x128xf32, #tpu.memory_space<vmem>>, %arg3: memref<8x128xf32, #tpu.memory_space<vmem>>) attributes {dimension_semantics = [#tpu.dimension_semantics<arbitrary>], iteration_bounds = array<i64: 2>, scalar_prefetch = 0 : i64, scratch_operands = 0 : i64, tpu.core_type = #tpu.core_type<tc>, window_params = [{pipeline_mode = #tpu.pipeline_mode<synchronous>, transform_indices = @transform_0, window_bounds = array<i64: 8, 128>}, {transform_indices = @transform_1, window_bounds = array<i64: 8, 128>}, {transform_indices = @transform_2, window_bounds = array<i64: 8, 128>}]} {
    %c0 = arith.constant 0 : index
    %c0_0 = arith.constant 0 : index
    %0 = vector.load %arg2[%c0, %c0_0] : memref<8x128xf32, #tpu.memory_space<vmem>>, vector<8x128xf32>
    %c0_1 = arith.constant 0 : index
    %c0_2 = arith.constant 0 : index
    %1 = vector.load %arg1[%c0_1, %c0_2] : memref<8x128xf32, #tpu.memory_space<vmem>>, vector<8x128xf32>
    %2 = arith.addf %0, %1 : vector<8x128xf32>
    %c0_3 = arith.constant 0 : index
    %c0_4 = arith.constant 0 : index
    %3 = vector.load %arg3[%c0_3, %c0_4] : memref<8x128xf32, #tpu.memory_space<vmem>>, vector<8x128xf32>
    tpu.vector_store %arg3[%c0_3, %c0_4], %2 {strides = array<i32>} : memref<8x128xf32, #tpu.memory_space<vmem>>, vector<8x128xf32>,
    return
  }
  func.func @transform_0(%arg0: i32) -> (i32, i32) {
    %c0_i32 = arith.constant 0 : i32
    %c0_i32_0 = arith.constant 0 : i32
    %c0_i32_1 = arith.constant 0 : i32
    return %c0_i32, %c0_i32_0 : i32, i32
  }
  func.func @transform_1(%arg0: i32) -> (i32, i32) {
    %c0_i32 = arith.constant 0 : i32
    %c0_i32_0 = arith.constant 0 : i32
    return %arg0, %c0_i32 : i32, i32
  }
  func.func @transform_2(%arg0: i32) -> (i32, i32) {
    %c0_i32 = arith.constant 0 : i32
    %c0_i32_0 = arith.constant 0 : i32
    return %arg0, %c0_i32 : i32, i32
  }
}

module attributes {stable_mosaic.version = 11 : i64} {
  func.func @_encode_kernel(%arg0: i32, %arg1: memref<1x8x32xf32, #tpu.memory_space<vmem>>, %arg2: memref<1x1x8xf32, #tpu.memory_space<vmem>>, %arg3: memref<1x1x8xf32, #tpu.memory_space<vmem>>, %arg4: memref<1x32xf32, #tpu.memory_space<vmem>>, %arg5: memref<1x32xf32, #tpu.memory_space<vmem>>, %arg6: memref<32x96xf32, #tpu.memory_space<vmem>>, %arg7: memref<1x96xf32, #tpu.memory_space<vmem>>, %arg8: memref<32x32xf32, #tpu.memory_space<vmem>>, %arg9: memref<1x32xf32, #tpu.memory_space<vmem>>, %arg10: memref<1x32xf32, #tpu.memory_space<vmem>>, %arg11: memref<1x32xf32, #tpu.memory_space<vmem>>, %arg12: memref<32x64xf32, #tpu.memory_space<vmem>>, %arg13: memref<1x64xf32, #tpu.memory_space<vmem>>, %arg14: memref<64x32xf32, #tpu.memory_space<vmem>>, %arg15: memref<1x32xf32, #tpu.memory_space<vmem>>, %arg16: memref<1x32xf32, #tpu.memory_space<vmem>>, %arg17: memref<1x32xf32, #tpu.memory_space<vmem>>, %arg18: memref<32x96xf32, #tpu.memory_space<vmem>>, %arg19: memref<1x96xf32, #tpu.memory_space<vmem>>, %arg20: memref<32x32xf32, #tpu.memory_space<vmem>>, %arg21: memref<1x32xf32, #tpu.memory_space<vmem>>, %arg22: memref<1x32xf32, #tpu.memory_space<vmem>>, %arg23: memref<1x32xf32, #tpu.memory_space<vmem>>, %arg24: memref<32x64xf32, #tpu.memory_space<vmem>>, %arg25: memref<1x64xf32, #tpu.memory_space<vmem>>, %arg26: memref<64x32xf32, #tpu.memory_space<vmem>>, %arg27: memref<1x32xf32, #tpu.memory_space<vmem>>, %arg28: memref<1x8x32xf32, #tpu.memory_space<vmem>>, %arg29: memref<8x32xf32, #tpu.memory_space<vmem>>) attributes {dimension_semantics = [#tpu.dimension_semantics<parallel>], iteration_bounds = array<i64: 2>, scalar_prefetch = 0 : i64, scratch_operands = 1 : i64, tpu.core_type = #tpu.core_type<tc>, window_params = [{transform_indices = @transform_0, window_bounds = array<i64: 1, 8, 32>}, {transform_indices = @transform_1, window_bounds = array<i64: 1, 1, 8>}, {transform_indices = @transform_2, window_bounds = array<i64: 1, 1, 8>}, {pipeline_mode = #tpu.pipeline_mode<synchronous>, transform_indices = @transform_3, window_bounds = array<i64: 1, 32>}, {pipeline_mode = #tpu.pipeline_mode<synchronous>, transform_indices = @transform_4, window_bounds = array<i64: 1, 32>}, {pipeline_mode = #tpu.pipeline_mode<synchronous>, transform_indices = @transform_5, window_bounds = array<i64: 32, 96>}, {pipeline_mode = #tpu.pipeline_mode<synchronous>, transform_indices = @transform_6, window_bounds = array<i64: 1, 96>}, {pipeline_mode = #tpu.pipeline_mode<synchronous>, transform_indices = @transform_7, window_bounds = array<i64: 32, 32>}, {pipeline_mode = #tpu.pipeline_mode<synchronous>, transform_indices = @transform_8, window_bounds = array<i64: 1, 32>}, {pipeline_mode = #tpu.pipeline_mode<synchronous>, transform_indices = @transform_9, window_bounds = array<i64: 1, 32>}, {pipeline_mode = #tpu.pipeline_mode<synchronous>, transform_indices = @transform_10, window_bounds = array<i64: 1, 32>}, {pipeline_mode = #tpu.pipeline_mode<synchronous>, transform_indices = @transform_11, window_bounds = array<i64: 32, 64>}, {pipeline_mode = #tpu.pipeline_mode<synchronous>, transform_indices = @transform_12, window_bounds = array<i64: 1, 64>}, {pipeline_mode = #tpu.pipeline_mode<synchronous>, transform_indices = @transform_13, window_bounds = array<i64: 64, 32>}, {pipeline_mode = #tpu.pipeline_mode<synchronous>, transform_indices = @transform_14, window_bounds = array<i64: 1, 32>}, {pipeline_mode = #tpu.pipeline_mode<synchronous>, transform_indices = @transform_15, window_bounds = array<i64: 1, 32>}, {pipeline_mode = #tpu.pipeline_mode<synchronous>, transform_indices = @transform_16, window_bounds = array<i64: 1, 32>}, {pipeline_mode = #tpu.pipeline_mode<synchronous>, transform_indices = @transform_17, window_bounds = array<i64: 32, 96>}, {pipeline_mode = #tpu.pipeline_mode<synchronous>, transform_indices = @transform_18, window_bounds = array<i64: 1, 96>}, {pipeline_mode = #tpu.pipeline_mode<synchronous>, transform_indices = @transform_19, window_bounds = array<i64: 32, 32>}, {pipeline_mode = #tpu.pipeline_mode<synchronous>, transform_indices = @transform_20, window_bounds = array<i64: 1, 32>}, {pipeline_mode = #tpu.pipeline_mode<synchronous>, transform_indices = @transform_21, window_bounds = array<i64: 1, 32>}, {pipeline_mode = #tpu.pipeline_mode<synchronous>, transform_indices = @transform_22, window_bounds = array<i64: 1, 32>}, {pipeline_mode = #tpu.pipeline_mode<synchronous>, transform_indices = @transform_23, window_bounds = array<i64: 32, 64>}, {pipeline_mode = #tpu.pipeline_mode<synchronous>, transform_indices = @transform_24, window_bounds = array<i64: 1, 64>}, {pipeline_mode = #tpu.pipeline_mode<synchronous>, transform_indices = @transform_25, window_bounds = array<i64: 64, 32>}, {pipeline_mode = #tpu.pipeline_mode<synchronous>, transform_indices = @transform_26, window_bounds = array<i64: 1, 32>}, {transform_indices = @transform_27, window_bounds = array<i64: 1, 8, 32>}]} {
    %c0 = arith.constant 0 : index
    %c0_0 = arith.constant 0 : index
    %c0_1 = arith.constant 0 : index
    %0 = vector.load %arg1[%c0, %c0_0, %c0_1] : memref<1x8x32xf32, #tpu.memory_space<vmem>>, vector<1x8x32xf32>
    %1 = vector.shape_cast %0 : vector<1x8x32xf32> to vector<8x32xf32>
    %c0_2 = arith.constant 0 : index
    %c0_3 = arith.constant 0 : index
    %c0_4 = arith.constant 0 : index
    %2 = vector.load %arg2[%c0_2, %c0_3, %c0_4] : memref<1x1x8xf32, #tpu.memory_space<vmem>>, vector<1x1x8xf32>
    %cst = arith.constant 0.000000e+00 : f32
    %3 = vector.broadcast %cst : f32 to vector<1x1x8xf32>
    %4 = arith.cmpf oeq, %2, %3 : vector<1x1x8xf32>
    %cst_5 = arith.constant -1.000000e+09 : f32
    %cst_6 = arith.constant 0.000000e+00 : f32
    %5 = vector.broadcast %cst_5 : f32 to vector<1x1x8xf32>
    %6 = vector.broadcast %cst_6 : f32 to vector<1x1x8xf32>
    %7 = arith.select %4, %5, %6 : vector<1x1x8xi1>, vector<1x1x8xf32>
    %c0_7 = arith.constant 0 : index
    %c0_8 = arith.constant 0 : index
    %c0_9 = arith.constant 0 : index
    %8 = vector.load %arg3[%c0_7, %c0_8, %c0_9] : memref<1x1x8xf32, #tpu.memory_space<vmem>>, vector<1x1x8xf32>
    %cst_10 = arith.constant 0.000000e+00 : f32
    %9 = vector.broadcast %cst_10 : f32 to vector<1x1x8xf32>
    %10 = arith.cmpf oeq, %8, %9 : vector<1x1x8xf32>
    %cst_11 = arith.constant -1.000000e+09 : f32
    %cst_12 = arith.constant 0.000000e+00 : f32
    %11 = vector.broadcast %cst_11 : f32 to vector<1x1x8xf32>
    %12 = vector.broadcast %cst_12 : f32 to vector<1x1x8xf32>
    %13 = arith.select %10, %11, %12 : vector<1x1x8xi1>, vector<1x1x8xf32>
    %c0_13 = arith.constant 0 : index
    %c0_14 = arith.constant 0 : index
    %14 = vector.load %arg4[%c0_13, %c0_14] : memref<1x32xf32, #tpu.memory_space<vmem>>, vector<1x32xf32>
    %c0_15 = arith.constant 0 : index
    %c0_16 = arith.constant 0 : index
    %15 = vector.load %arg5[%c0_15, %c0_16] : memref<1x32xf32, #tpu.memory_space<vmem>>, vector<1x32xf32>
    %cst_17 = arith.constant dense<0.000000e+00> : vector<8xf32>
    %16 = vector.multi_reduction <add>, %1, %cst_17 [1] : vector<8x32xf32> to vector<8xf32>
    %17 = vector.shape_cast %16 : vector<8xf32> to vector<8x1xf32>
    %cst_18 = arith.constant 3.200000e+01 : f32
    %18 = vector.broadcast %cst_18 : f32 to vector<8x1xf32>
    %19 = arith.divf %17, %18 : vector<8x1xf32>
    %20 = vector.broadcast %19 : vector<8x1xf32> to vector<8x32xf32>
    %21 = arith.subf %1, %20 : vector<8x32xf32>
    %22 = arith.mulf %21, %21 : vector<8x32xf32>
    %cst_19 = arith.constant dense<0.000000e+00> : vector<8xf32>
    %23 = vector.multi_reduction <add>, %22, %cst_19 [1] : vector<8x32xf32> to vector<8xf32>
    %24 = vector.shape_cast %23 : vector<8xf32> to vector<8x1xf32>
    %cst_20 = arith.constant 0.0322580636 : f32
    %25 = vector.broadcast %cst_20 : f32 to vector<8x1xf32>
    %26 = arith.mulf %24, %25 : vector<8x1xf32>
    %27 = math.sqrt %26 : vector<8x1xf32>
    %28 = vector.broadcast %19 : vector<8x1xf32> to vector<8x32xf32>
    %29 = arith.subf %1, %28 : vector<8x32xf32>
    %30 = vector.broadcast %14 : vector<1x32xf32> to vector<8x32xf32>
    %31 = arith.mulf %30, %29 : vector<8x32xf32>
    %cst_21 = arith.constant 9.99999997E-7 : f32
    %32 = vector.broadcast %cst_21 : f32 to vector<8x1xf32>
    %33 = arith.addf %27, %32 : vector<8x1xf32>
    %34 = tpu.reciprocal %33 : vector<8x1xf32> -> vector<8x1xf32>
    %35 = vector.broadcast %34 : vector<8x1xf32> to vector<8x32xf32>
    %36 = arith.mulf %31, %35 : vector<8x32xf32>
    %37 = vector.broadcast %15 : vector<1x32xf32> to vector<8x32xf32>
    %38 = arith.addf %36, %37 : vector<8x32xf32>
    %c0_22 = arith.constant 0 : index
    %c0_23 = arith.constant 0 : index
    %39 = vector.load %arg6[%c0_22, %c0_23] : memref<32x96xf32, #tpu.memory_space<vmem>>, vector<32x96xf32>
    %cst_24 = arith.constant dense<0.000000e+00> : vector<8x96xf32>
    %40 = tpu.matmul %38, %39, %cst_24 {dimension_numbers = #tpu.dot_dimension_numbers<[1], [0], [0], [1], [0, 0, 1, 1], [], []>} : vector<8x32xf32>, vector<32x96xf32>, vector<8x96xf32> -> vector<8x96xf32>
    %c0_25 = arith.constant 0 : index
    %c0_26 = arith.constant 0 : index
    %41 = vector.load %arg7[%c0_25, %c0_26] : memref<1x96xf32, #tpu.memory_space<vmem>>, vector<1x96xf32>
    %42 = vector.broadcast %41 : vector<1x96xf32> to vector<8x96xf32>
    %43 = arith.addf %40, %42 : vector<8x96xf32>
    %44 = vector.extract_strided_slice %43 {offsets = [0, 0], sizes = [8, 8], strides = [1, 1]} : vector<8x96xf32> to vector<8x8xf32>
    %45 = vector.shape_cast %44 : vector<8x8xf32> to vector<1x8x8xf32>
    %46 = vector.extract_strided_slice %43 {offsets = [0, 32], sizes = [8, 8], strides = [1, 1]} : vector<8x96xf32> to vector<8x8xf32>
    %47 = vector.shape_cast %46 : vector<8x8xf32> to vector<1x8x8xf32>
    %48 = vector.extract_strided_slice %43 {offsets = [0, 64], sizes = [8, 8], strides = [1, 1]} : vector<8x96xf32> to vector<8x8xf32>
    %49 = vector.shape_cast %48 : vector<8x8xf32> to vector<1x8x8xf32>
    "tpu.trace_start"() <{level = 10 : i32, message = "bqd,bkd->bqk"}> : () -> ()
    %cst_27 = arith.constant dense<0.000000e+00> : vector<1x8x8xf32>
    %50 = tpu.matmul %45, %47, %cst_27 {dimension_numbers = #tpu.dot_dimension_numbers<[2], [2], [1], [1], [0, 0, 0, 1, 1, 1], [0], [0]>} : vector<1x8x8xf32>, vector<1x8x8xf32>, vector<1x8x8xf32> -> vector<1x8x8xf32>
    "tpu.trace_stop"() : () -> ()
    %51 = vector.broadcast %7 : vector<1x1x8xf32> to vector<1x8x8xf32>
    %52 = arith.addf %50, %51 : vector<1x8x8xf32>
    %cst_28 = arith.constant dense<0xFF800000> : vector<1x8xf32>
    %53 = vector.multi_reduction <maximumf>, %52, %cst_28 [2] : vector<1x8x8xf32> to vector<1x8xf32>
    %54 = vector.shape_cast %53 : vector<1x8xf32> to vector<1x8x1xf32>
    %55 = vector.broadcast %54 : vector<1x8x1xf32> to vector<1x8x8xf32>
    %56 = arith.subf %52, %55 : vector<1x8x8xf32>
    %57 = math.exp %56 : vector<1x8x8xf32>
    %cst_29 = arith.constant dense<0.000000e+00> : vector<1x8xf32>
    %58 = vector.multi_reduction <add>, %57, %cst_29 [2] : vector<1x8x8xf32> to vector<1x8xf32>
    %59 = vector.shape_cast %58 : vector<1x8xf32> to vector<1x8x1xf32>
    %60 = tpu.reciprocal %59 {approx = true} : vector<1x8x1xf32> -> vector<1x8x1xf32>
    %61 = vector.broadcast %60 : vector<1x8x1xf32> to vector<1x8x8xf32>
    %62 = arith.mulf %57, %61 : vector<1x8x8xf32>
    "tpu.trace_start"() <{level = 10 : i32, message = "bqk,bkd->bqd"}> : () -> ()
    %cst_30 = arith.constant dense<0.000000e+00> : vector<1x8x8xf32>
    %63 = tpu.matmul %62, %49, %cst_30 {dimension_numbers = #tpu.dot_dimension_numbers<[2], [1], [1], [2], [0, 0, 0, 1, 1, 2], [0], [0]>} : vector<1x8x8xf32>, vector<1x8x8xf32>, vector<1x8x8xf32> -> vector<1x8x8xf32>
    "tpu.trace_stop"() : () -> ()
    %64 = vector.shape_cast %63 : vector<1x8x8xf32> to vector<8x8xf32>
    %c0_31 = arith.constant 0 : index
    %c0_32 = arith.constant 0 : index
    %65 = vector.load %arg29[%c0_31, %c0_32] : memref<8x32xf32, #tpu.memory_space<vmem>>, vector<8x8xf32>
    tpu.vector_store %arg29[%c0_31, %c0_32], %64 {strides = array<i32>} : memref<8x32xf32, #tpu.memory_space<vmem>>, vector<8x8xf32>,
    %66 = vector.extract_strided_slice %43 {offsets = [0, 8], sizes = [8, 8], strides = [1, 1]} : vector<8x96xf32> to vector<8x8xf32>
    %67 = vector.shape_cast %66 : vector<8x8xf32> to vector<1x8x8xf32>
    %68 = vector.extract_strided_slice %43 {offsets = [0, 40], sizes = [8, 8], strides = [1, 1]} : vector<8x96xf32> to vector<8x8xf32>
    %69 = vector.shape_cast %68 : vector<8x8xf32> to vector<1x8x8xf32>
    %70 = vector.extract_strided_slice %43 {offsets = [0, 72], sizes = [8, 8], strides = [1, 1]} : vector<8x96xf32> to vector<8x8xf32>
    %71 = vector.shape_cast %70 : vector<8x8xf32> to vector<1x8x8xf32>
    "tpu.trace_start"() <{level = 10 : i32, message = "bqd,bkd->bqk"}> : () -> ()
    %cst_33 = arith.constant dense<0.000000e+00> : vector<1x8x8xf32>
    %72 = tpu.matmul %67, %69, %cst_33 {dimension_numbers = #tpu.dot_dimension_numbers<[2], [2], [1], [1], [0, 0, 0, 1, 1, 1], [0], [0]>} : vector<1x8x8xf32>, vector<1x8x8xf32>, vector<1x8x8xf32> -> vector<1x8x8xf32>
    "tpu.trace_stop"() : () -> ()
    %73 = vector.broadcast %7 : vector<1x1x8xf32> to vector<1x8x8xf32>
    %74 = arith.addf %72, %73 : vector<1x8x8xf32>
    %cst_34 = arith.constant dense<0xFF800000> : vector<1x8xf32>
    %75 = vector.multi_reduction <maximumf>, %74, %cst_34 [2] : vector<1x8x8xf32> to vector<1x8xf32>
    %76 = vector.shape_cast %75 : vector<1x8xf32> to vector<1x8x1xf32>
    %77 = vector.broadcast %76 : vector<1x8x1xf32> to vector<1x8x8xf32>
    %78 = arith.subf %74, %77 : vector<1x8x8xf32>
    %79 = math.exp %78 : vector<1x8x8xf32>
    %cst_35 = arith.constant dense<0.000000e+00> : vector<1x8xf32>
    %80 = vector.multi_reduction <add>, %79, %cst_35 [2] : vector<1x8x8xf32> to vector<1x8xf32>
    %81 = vector.shape_cast %80 : vector<1x8xf32> to vector<1x8x1xf32>
    %82 = tpu.reciprocal %81 {approx = true} : vector<1x8x1xf32> -> vector<1x8x1xf32>
    %83 = vector.broadcast %82 : vector<1x8x1xf32> to vector<1x8x8xf32>
    %84 = arith.mulf %79, %83 : vector<1x8x8xf32>
    "tpu.trace_start"() <{level = 10 : i32, message = "bqk,bkd->bqd"}> : () -> ()
    %cst_36 = arith.constant dense<0.000000e+00> : vector<1x8x8xf32>
    %85 = tpu.matmul %84, %71, %cst_36 {dimension_numbers = #tpu.dot_dimension_numbers<[2], [1], [1], [2], [0, 0, 0, 1, 1, 2], [0], [0]>} : vector<1x8x8xf32>, vector<1x8x8xf32>, vector<1x8x8xf32> -> vector<1x8x8xf32>
    "tpu.trace_stop"() : () -> ()
    %86 = vector.shape_cast %85 : vector<1x8x8xf32> to vector<8x8xf32>
    %c0_37 = arith.constant 0 : index
    %c8 = arith.constant 8 : index
    %87 = vector.load %arg29[%c0_37, %c8] : memref<8x32xf32, #tpu.memory_space<vmem>>, vector<8x8xf32>
    tpu.vector_store %arg29[%c0_37, %c8], %86 {strides = array<i32>} : memref<8x32xf32, #tpu.memory_space<vmem>>, vector<8x8xf32>,
    %88 = vector.extract_strided_slice %43 {offsets = [0, 16], sizes = [8, 8], strides = [1, 1]} : vector<8x96xf32> to vector<8x8xf32>
    %89 = vector.shape_cast %88 : vector<8x8xf32> to vector<1x8x8xf32>
    %90 = vector.extract_strided_slice %43 {offsets = [0, 48], sizes = [8, 8], strides = [1, 1]} : vector<8x96xf32> to vector<8x8xf32>
    %91 = vector.shape_cast %90 : vector<8x8xf32> to vector<1x8x8xf32>
    %92 = vector.extract_strided_slice %43 {offsets = [0, 80], sizes = [8, 8], strides = [1, 1]} : vector<8x96xf32> to vector<8x8xf32>
    %93 = vector.shape_cast %92 : vector<8x8xf32> to vector<1x8x8xf32>
    "tpu.trace_start"() <{level = 10 : i32, message = "bqd,bkd->bqk"}> : () -> ()
    %cst_38 = arith.constant dense<0.000000e+00> : vector<1x8x8xf32>
    %94 = tpu.matmul %89, %91, %cst_38 {dimension_numbers = #tpu.dot_dimension_numbers<[2], [2], [1], [1], [0, 0, 0, 1, 1, 1], [0], [0]>} : vector<1x8x8xf32>, vector<1x8x8xf32>, vector<1x8x8xf32> -> vector<1x8x8xf32>
    "tpu.trace_stop"() : () -> ()
    %95 = vector.broadcast %7 : vector<1x1x8xf32> to vector<1x8x8xf32>
    %96 = arith.addf %94, %95 : vector<1x8x8xf32>
    %cst_39 = arith.constant dense<0xFF800000> : vector<1x8xf32>
    %97 = vector.multi_reduction <maximumf>, %96, %cst_39 [2] : vector<1x8x8xf32> to vector<1x8xf32>
    %98 = vector.shape_cast %97 : vector<1x8xf32> to vector<1x8x1xf32>
    %99 = vector.broadcast %98 : vector<1x8x1xf32> to vector<1x8x8xf32>
    %100 = arith.subf %96, %99 : vector<1x8x8xf32>
    %101 = math.exp %100 : vector<1x8x8xf32>
    %cst_40 = arith.constant dense<0.000000e+00> : vector<1x8xf32>
    %102 = vector.multi_reduction <add>, %101, %cst_40 [2] : vector<1x8x8xf32> to vector<1x8xf32>
    %103 = vector.shape_cast %102 : vector<1x8xf32> to vector<1x8x1xf32>
    %104 = tpu.reciprocal %103 {approx = true} : vector<1x8x1xf32> -> vector<1x8x1xf32>
    %105 = vector.broadcast %104 : vector<1x8x1xf32> to vector<1x8x8xf32>
    %106 = arith.mulf %101, %105 : vector<1x8x8xf32>
    "tpu.trace_start"() <{level = 10 : i32, message = "bqk,bkd->bqd"}> : () -> ()
    %cst_41 = arith.constant dense<0.000000e+00> : vector<1x8x8xf32>
    %107 = tpu.matmul %106, %93, %cst_41 {dimension_numbers = #tpu.dot_dimension_numbers<[2], [1], [1], [2], [0, 0, 0, 1, 1, 2], [0], [0]>} : vector<1x8x8xf32>, vector<1x8x8xf32>, vector<1x8x8xf32> -> vector<1x8x8xf32>
    "tpu.trace_stop"() : () -> ()
    %108 = vector.shape_cast %107 : vector<1x8x8xf32> to vector<8x8xf32>
    %c0_42 = arith.constant 0 : index
    %c16 = arith.constant 16 : index
    %109 = vector.load %arg29[%c0_42, %c16] : memref<8x32xf32, #tpu.memory_space<vmem>>, vector<8x8xf32>
    tpu.vector_store %arg29[%c0_42, %c16], %108 {strides = array<i32>} : memref<8x32xf32, #tpu.memory_space<vmem>>, vector<8x8xf32>,
    %110 = vector.extract_strided_slice %43 {offsets = [0, 24], sizes = [8, 8], strides = [1, 1]} : vector<8x96xf32> to vector<8x8xf32>
    %111 = vector.shape_cast %110 : vector<8x8xf32> to vector<1x8x8xf32>
    %112 = vector.extract_strided_slice %43 {offsets = [0, 56], sizes = [8, 8], strides = [1, 1]} : vector<8x96xf32> to vector<8x8xf32>
    %113 = vector.shape_cast %112 : vector<8x8xf32> to vector<1x8x8xf32>
    %114 = vector.extract_strided_slice %43 {offsets = [0, 88], sizes = [8, 8], strides = [1, 1]} : vector<8x96xf32> to vector<8x8xf32>
    %115 = vector.shape_cast %114 : vector<8x8xf32> to vector<1x8x8xf32>
    "tpu.trace_start"() <{level = 10 : i32, message = "bqd,bkd->bqk"}> : () -> ()
    %cst_43 = arith.constant dense<0.000000e+00> : vector<1x8x8xf32>
    %116 = tpu.matmul %111, %113, %cst_43 {dimension_numbers = #tpu.dot_dimension_numbers<[2], [2], [1], [1], [0, 0, 0, 1, 1, 1], [0], [0]>} : vector<1x8x8xf32>, vector<1x8x8xf32>, vector<1x8x8xf32> -> vector<1x8x8xf32>
    "tpu.trace_stop"() : () -> ()
    %117 = vector.broadcast %7 : vector<1x1x8xf32> to vector<1x8x8xf32>
    %118 = arith.addf %116, %117 : vector<1x8x8xf32>
    %cst_44 = arith.constant dense<0xFF800000> : vector<1x8xf32>
    %119 = vector.multi_reduction <maximumf>, %118, %cst_44 [2] : vector<1x8x8xf32> to vector<1x8xf32>
    %120 = vector.shape_cast %119 : vector<1x8xf32> to vector<1x8x1xf32>
    %121 = vector.broadcast %120 : vector<1x8x1xf32> to vector<1x8x8xf32>
    %122 = arith.subf %118, %121 : vector<1x8x8xf32>
    %123 = math.exp %122 : vector<1x8x8xf32>
    %cst_45 = arith.constant dense<0.000000e+00> : vector<1x8xf32>
    %124 = vector.multi_reduction <add>, %123, %cst_45 [2] : vector<1x8x8xf32> to vector<1x8xf32>
    %125 = vector.shape_cast %124 : vector<1x8xf32> to vector<1x8x1xf32>
    %126 = tpu.reciprocal %125 {approx = true} : vector<1x8x1xf32> -> vector<1x8x1xf32>
    %127 = vector.broadcast %126 : vector<1x8x1xf32> to vector<1x8x8xf32>
    %128 = arith.mulf %123, %127 : vector<1x8x8xf32>
    "tpu.trace_start"() <{level = 10 : i32, message = "bqk,bkd->bqd"}> : () -> ()
    %cst_46 = arith.constant dense<0.000000e+00> : vector<1x8x8xf32>
    %129 = tpu.matmul %128, %115, %cst_46 {dimension_numbers = #tpu.dot_dimension_numbers<[2], [1], [1], [2], [0, 0, 0, 1, 1, 2], [0], [0]>} : vector<1x8x8xf32>, vector<1x8x8xf32>, vector<1x8x8xf32> -> vector<1x8x8xf32>
    "tpu.trace_stop"() : () -> ()
    %130 = vector.shape_cast %129 : vector<1x8x8xf32> to vector<8x8xf32>
    %c0_47 = arith.constant 0 : index
    %c24 = arith.constant 24 : index
    %131 = vector.load %arg29[%c0_47, %c24] : memref<8x32xf32, #tpu.memory_space<vmem>>, vector<8x8xf32>
    tpu.vector_store %arg29[%c0_47, %c24], %130 {strides = array<i32>} : memref<8x32xf32, #tpu.memory_space<vmem>>, vector<8x8xf32>,
    %c0_48 = arith.constant 0 : index
    %c0_49 = arith.constant 0 : index
    %132 = vector.load %arg29[%c0_48, %c0_49] : memref<8x32xf32, #tpu.memory_space<vmem>>, vector<8x32xf32>
    %c0_50 = arith.constant 0 : index
    %c0_51 = arith.constant 0 : index
    %133 = vector.load %arg8[%c0_50, %c0_51] : memref<32x32xf32, #tpu.memory_space<vmem>>, vector<32x32xf32>
    %cst_52 = arith.constant dense<0.000000e+00> : vector<8x32xf32>
    %134 = tpu.matmul %132, %133, %cst_52 {dimension_numbers = #tpu.dot_dimension_numbers<[1], [0], [0], [1], [0, 0, 1, 1], [], []>} : vector<8x32xf32>, vector<32x32xf32>, vector<8x32xf32> -> vector<8x32xf32>
    %135 = arith.addf %1, %134 : vector<8x32xf32>
    %c0_53 = arith.constant 0 : index
    %c0_54 = arith.constant 0 : index
    %136 = vector.load %arg9[%c0_53, %c0_54] : memref<1x32xf32, #tpu.memory_space<vmem>>, vector<1x32xf32>
    %137 = vector.broadcast %136 : vector<1x32xf32> to vector<8x32xf32>
    %138 = arith.addf %135, %137 : vector<8x32xf32>
    %c0_55 = arith.constant 0 : index
    %c0_56 = arith.constant 0 : index
    %139 = vector.load %arg10[%c0_55, %c0_56] : memref<1x32xf32, #tpu.memory_space<vmem>>, vector<1x32xf32>
    %c0_57 = arith.constant 0 : index
    %c0_58 = arith.constant 0 : index
    %140 = vector.load %arg11[%c0_57, %c0_58] : memref<1x32xf32, #tpu.memory_space<vmem>>, vector<1x32xf32>
    %cst_59 = arith.constant dense<0.000000e+00> : vector<8xf32>
    %141 = vector.multi_reduction <add>, %138, %cst_59 [1] : vector<8x32xf32> to vector<8xf32>
    %142 = vector.shape_cast %141 : vector<8xf32> to vector<8x1xf32>
    %cst_60 = arith.constant 3.200000e+01 : f32
    %143 = vector.broadcast %cst_60 : f32 to vector<8x1xf32>
    %144 = arith.divf %142, %143 : vector<8x1xf32>
    %145 = vector.broadcast %144 : vector<8x1xf32> to vector<8x32xf32>
    %146 = arith.subf %138, %145 : vector<8x32xf32>
    %147 = arith.mulf %146, %146 : vector<8x32xf32>
    %cst_61 = arith.constant dense<0.000000e+00> : vector<8xf32>
    %148 = vector.multi_reduction <add>, %147, %cst_61 [1] : vector<8x32xf32> to vector<8xf32>
    %149 = vector.shape_cast %148 : vector<8xf32> to vector<8x1xf32>
    %cst_62 = arith.constant 0.0322580636 : f32
    %150 = vector.broadcast %cst_62 : f32 to vector<8x1xf32>
    %151 = arith.mulf %149, %150 : vector<8x1xf32>
    %152 = math.sqrt %151 : vector<8x1xf32>
    %153 = vector.broadcast %144 : vector<8x1xf32> to vector<8x32xf32>
    %154 = arith.subf %138, %153 : vector<8x32xf32>
    %155 = vector.broadcast %139 : vector<1x32xf32> to vector<8x32xf32>
    %156 = arith.mulf %155, %154 : vector<8x32xf32>
    %cst_63 = arith.constant 9.99999997E-7 : f32
    %157 = vector.broadcast %cst_63 : f32 to vector<8x1xf32>
    %158 = arith.addf %152, %157 : vector<8x1xf32>
    %159 = tpu.reciprocal %158 : vector<8x1xf32> -> vector<8x1xf32>
    %160 = vector.broadcast %159 : vector<8x1xf32> to vector<8x32xf32>
    %161 = arith.mulf %156, %160 : vector<8x32xf32>
    %162 = vector.broadcast %140 : vector<1x32xf32> to vector<8x32xf32>
    %163 = arith.addf %161, %162 : vector<8x32xf32>
    %c0_64 = arith.constant 0 : index
    %c0_65 = arith.constant 0 : index
    %164 = vector.load %arg12[%c0_64, %c0_65] : memref<32x64xf32, #tpu.memory_space<vmem>>, vector<32x64xf32>
    %cst_66 = arith.constant dense<0.000000e+00> : vector<8x64xf32>
    %165 = tpu.matmul %163, %164, %cst_66 {dimension_numbers = #tpu.dot_dimension_numbers<[1], [0], [0], [1], [0, 0, 1, 1], [], []>} : vector<8x32xf32>, vector<32x64xf32>, vector<8x64xf32> -> vector<8x64xf32>
    %c0_67 = arith.constant 0 : index
    %c0_68 = arith.constant 0 : index
    %166 = vector.load %arg13[%c0_67, %c0_68] : memref<1x64xf32, #tpu.memory_space<vmem>>, vector<1x64xf32>
    %167 = vector.broadcast %166 : vector<1x64xf32> to vector<8x64xf32>
    %168 = arith.addf %165, %167 : vector<8x64xf32>
    %cst_69 = arith.constant 0.000000e+00 : f32
    %169 = vector.broadcast %cst_69 : f32 to vector<8x64xf32>
    %170 = arith.maximumf %168, %169 : vector<8x64xf32>
    %c0_70 = arith.constant 0 : index
    %c0_71 = arith.constant 0 : index
    %171 = vector.load %arg14[%c0_70, %c0_71] : memref<64x32xf32, #tpu.memory_space<vmem>>, vector<64x32xf32>
    %cst_72 = arith.constant dense<0.000000e+00> : vector<8x32xf32>
    %172 = tpu.matmul %170, %171, %cst_72 {dimension_numbers = #tpu.dot_dimension_numbers<[1], [0], [0], [1], [0, 0, 1, 1], [], []>} : vector<8x64xf32>, vector<64x32xf32>, vector<8x32xf32> -> vector<8x32xf32>
    %c0_73 = arith.constant 0 : index
    %c0_74 = arith.constant 0 : index
    %173 = vector.load %arg15[%c0_73, %c0_74] : memref<1x32xf32, #tpu.memory_space<vmem>>, vector<1x32xf32>
    %174 = vector.broadcast %173 : vector<1x32xf32> to vector<8x32xf32>
    %175 = arith.addf %172, %174 : vector<8x32xf32>
    %176 = arith.addf %138, %175 : vector<8x32xf32>
    %c0_75 = arith.constant 0 : index
    %c0_76 = arith.constant 0 : index
    %177 = vector.load %arg16[%c0_75, %c0_76] : memref<1x32xf32, #tpu.memory_space<vmem>>, vector<1x32xf32>
    %c0_77 = arith.constant 0 : index
    %c0_78 = arith.constant 0 : index
    %178 = vector.load %arg17[%c0_77, %c0_78] : memref<1x32xf32, #tpu.memory_space<vmem>>, vector<1x32xf32>
    %cst_79 = arith.constant dense<0.000000e+00> : vector<8xf32>
    %179 = vector.multi_reduction <add>, %1, %cst_79 [1] : vector<8x32xf32> to vector<8xf32>
    %180 = vector.shape_cast %179 : vector<8xf32> to vector<8x1xf32>
    %cst_80 = arith.constant 3.200000e+01 : f32
    %181 = vector.broadcast %cst_80 : f32 to vector<8x1xf32>
    %182 = arith.divf %180, %181 : vector<8x1xf32>
    %183 = vector.broadcast %182 : vector<8x1xf32> to vector<8x32xf32>
    %184 = arith.subf %1, %183 : vector<8x32xf32>
    %185 = arith.mulf %184, %184 : vector<8x32xf32>
    %cst_81 = arith.constant dense<0.000000e+00> : vector<8xf32>
    %186 = vector.multi_reduction <add>, %185, %cst_81 [1] : vector<8x32xf32> to vector<8xf32>
    %187 = vector.shape_cast %186 : vector<8xf32> to vector<8x1xf32>
    %cst_82 = arith.constant 0.0322580636 : f32
    %188 = vector.broadcast %cst_82 : f32 to vector<8x1xf32>
    %189 = arith.mulf %187, %188 : vector<8x1xf32>
    %190 = math.sqrt %189 : vector<8x1xf32>
    %191 = vector.broadcast %182 : vector<8x1xf32> to vector<8x32xf32>
    %192 = arith.subf %1, %191 : vector<8x32xf32>
    %193 = vector.broadcast %177 : vector<1x32xf32> to vector<8x32xf32>
    %194 = arith.mulf %193, %192 : vector<8x32xf32>
    %cst_83 = arith.constant 9.99999997E-7 : f32
    %195 = vector.broadcast %cst_83 : f32 to vector<8x1xf32>
    %196 = arith.addf %190, %195 : vector<8x1xf32>
    %197 = tpu.reciprocal %196 : vector<8x1xf32> -> vector<8x1xf32>
    %198 = vector.broadcast %197 : vector<8x1xf32> to vector<8x32xf32>
    %199 = arith.mulf %194, %198 : vector<8x32xf32>
    %200 = vector.broadcast %178 : vector<1x32xf32> to vector<8x32xf32>
    %201 = arith.addf %199, %200 : vector<8x32xf32>
    %c0_84 = arith.constant 0 : index
    %c0_85 = arith.constant 0 : index
    %202 = vector.load %arg18[%c0_84, %c0_85] : memref<32x96xf32, #tpu.memory_space<vmem>>, vector<32x96xf32>
    %cst_86 = arith.constant dense<0.000000e+00> : vector<8x96xf32>
    %203 = tpu.matmul %201, %202, %cst_86 {dimension_numbers = #tpu.dot_dimension_numbers<[1], [0], [0], [1], [0, 0, 1, 1], [], []>} : vector<8x32xf32>, vector<32x96xf32>, vector<8x96xf32> -> vector<8x96xf32>
    %c0_87 = arith.constant 0 : index
    %c0_88 = arith.constant 0 : index
    %204 = vector.load %arg19[%c0_87, %c0_88] : memref<1x96xf32, #tpu.memory_space<vmem>>, vector<1x96xf32>
    %205 = vector.broadcast %204 : vector<1x96xf32> to vector<8x96xf32>
    %206 = arith.addf %203, %205 : vector<8x96xf32>
    %207 = vector.extract_strided_slice %206 {offsets = [0, 0], sizes = [8, 8], strides = [1, 1]} : vector<8x96xf32> to vector<8x8xf32>
    %208 = vector.shape_cast %207 : vector<8x8xf32> to vector<1x8x8xf32>
    %209 = vector.extract_strided_slice %206 {offsets = [0, 32], sizes = [8, 8], strides = [1, 1]} : vector<8x96xf32> to vector<8x8xf32>
    %210 = vector.shape_cast %209 : vector<8x8xf32> to vector<1x8x8xf32>
    %211 = vector.extract_strided_slice %206 {offsets = [0, 64], sizes = [8, 8], strides = [1, 1]} : vector<8x96xf32> to vector<8x8xf32>
    %212 = vector.shape_cast %211 : vector<8x8xf32> to vector<1x8x8xf32>
    "tpu.trace_start"() <{level = 10 : i32, message = "bqd,bkd->bqk"}> : () -> ()
    %cst_89 = arith.constant dense<0.000000e+00> : vector<1x8x8xf32>
    %213 = tpu.matmul %208, %210, %cst_89 {dimension_numbers = #tpu.dot_dimension_numbers<[2], [2], [1], [1], [0, 0, 0, 1, 1, 1], [0], [0]>} : vector<1x8x8xf32>, vector<1x8x8xf32>, vector<1x8x8xf32> -> vector<1x8x8xf32>
    "tpu.trace_stop"() : () -> ()
    %214 = vector.broadcast %13 : vector<1x1x8xf32> to vector<1x8x8xf32>
    %215 = arith.addf %213, %214 : vector<1x8x8xf32>
    %cst_90 = arith.constant dense<0xFF800000> : vector<1x8xf32>
    %216 = vector.multi_reduction <maximumf>, %215, %cst_90 [2] : vector<1x8x8xf32> to vector<1x8xf32>
    %217 = vector.shape_cast %216 : vector<1x8xf32> to vector<1x8x1xf32>
    %218 = vector.broadcast %217 : vector<1x8x1xf32> to vector<1x8x8xf32>
    %219 = arith.subf %215, %218 : vector<1x8x8xf32>
    %220 = math.exp %219 : vector<1x8x8xf32>
    %cst_91 = arith.constant dense<0.000000e+00> : vector<1x8xf32>
    %221 = vector.multi_reduction <add>, %220, %cst_91 [2] : vector<1x8x8xf32> to vector<1x8xf32>
    %222 = vector.shape_cast %221 : vector<1x8xf32> to vector<1x8x1xf32>
    %223 = tpu.reciprocal %222 {approx = true} : vector<1x8x1xf32> -> vector<1x8x1xf32>
    %224 = vector.broadcast %223 : vector<1x8x1xf32> to vector<1x8x8xf32>
    %225 = arith.mulf %220, %224 : vector<1x8x8xf32>
    "tpu.trace_start"() <{level = 10 : i32, message = "bqk,bkd->bqd"}> : () -> ()
    %cst_92 = arith.constant dense<0.000000e+00> : vector<1x8x8xf32>
    %226 = tpu.matmul %225, %212, %cst_92 {dimension_numbers = #tpu.dot_dimension_numbers<[2], [1], [1], [2], [0, 0, 0, 1, 1, 2], [0], [0]>} : vector<1x8x8xf32>, vector<1x8x8xf32>, vector<1x8x8xf32> -> vector<1x8x8xf32>
    "tpu.trace_stop"() : () -> ()
    %227 = vector.shape_cast %226 : vector<1x8x8xf32> to vector<8x8xf32>
    %c0_93 = arith.constant 0 : index
    %c0_94 = arith.constant 0 : index
    %228 = vector.load %arg29[%c0_93, %c0_94] : memref<8x32xf32, #tpu.memory_space<vmem>>, vector<8x8xf32>
    tpu.vector_store %arg29[%c0_93, %c0_94], %227 {strides = array<i32>} : memref<8x32xf32, #tpu.memory_space<vmem>>, vector<8x8xf32>,
    %229 = vector.extract_strided_slice %206 {offsets = [0, 8], sizes = [8, 8], strides = [1, 1]} : vector<8x96xf32> to vector<8x8xf32>
    %230 = vector.shape_cast %229 : vector<8x8xf32> to vector<1x8x8xf32>
    %231 = vector.extract_strided_slice %206 {offsets = [0, 40], sizes = [8, 8], strides = [1, 1]} : vector<8x96xf32> to vector<8x8xf32>
    %232 = vector.shape_cast %231 : vector<8x8xf32> to vector<1x8x8xf32>
    %233 = vector.extract_strided_slice %206 {offsets = [0, 72], sizes = [8, 8], strides = [1, 1]} : vector<8x96xf32> to vector<8x8xf32>
    %234 = vector.shape_cast %233 : vector<8x8xf32> to vector<1x8x8xf32>
    "tpu.trace_start"() <{level = 10 : i32, message = "bqd,bkd->bqk"}> : () -> ()
    %cst_95 = arith.constant dense<0.000000e+00> : vector<1x8x8xf32>
    %235 = tpu.matmul %230, %232, %cst_95 {dimension_numbers = #tpu.dot_dimension_numbers<[2], [2], [1], [1], [0, 0, 0, 1, 1, 1], [0], [0]>} : vector<1x8x8xf32>, vector<1x8x8xf32>, vector<1x8x8xf32> -> vector<1x8x8xf32>
    "tpu.trace_stop"() : () -> ()
    %236 = vector.broadcast %13 : vector<1x1x8xf32> to vector<1x8x8xf32>
    %237 = arith.addf %235, %236 : vector<1x8x8xf32>
    %cst_96 = arith.constant dense<0xFF800000> : vector<1x8xf32>
    %238 = vector.multi_reduction <maximumf>, %237, %cst_96 [2] : vector<1x8x8xf32> to vector<1x8xf32>
    %239 = vector.shape_cast %238 : vector<1x8xf32> to vector<1x8x1xf32>
    %240 = vector.broadcast %239 : vector<1x8x1xf32> to vector<1x8x8xf32>
    %241 = arith.subf %237, %240 : vector<1x8x8xf32>
    %242 = math.exp %241 : vector<1x8x8xf32>
    %cst_97 = arith.constant dense<0.000000e+00> : vector<1x8xf32>
    %243 = vector.multi_reduction <add>, %242, %cst_97 [2] : vector<1x8x8xf32> to vector<1x8xf32>
    %244 = vector.shape_cast %243 : vector<1x8xf32> to vector<1x8x1xf32>
    %245 = tpu.reciprocal %244 {approx = true} : vector<1x8x1xf32> -> vector<1x8x1xf32>
    %246 = vector.broadcast %245 : vector<1x8x1xf32> to vector<1x8x8xf32>
    %247 = arith.mulf %242, %246 : vector<1x8x8xf32>
    "tpu.trace_start"() <{level = 10 : i32, message = "bqk,bkd->bqd"}> : () -> ()
    %cst_98 = arith.constant dense<0.000000e+00> : vector<1x8x8xf32>
    %248 = tpu.matmul %247, %234, %cst_98 {dimension_numbers = #tpu.dot_dimension_numbers<[2], [1], [1], [2], [0, 0, 0, 1, 1, 2], [0], [0]>} : vector<1x8x8xf32>, vector<1x8x8xf32>, vector<1x8x8xf32> -> vector<1x8x8xf32>
    "tpu.trace_stop"() : () -> ()
    %249 = vector.shape_cast %248 : vector<1x8x8xf32> to vector<8x8xf32>
    %c0_99 = arith.constant 0 : index
    %c8_100 = arith.constant 8 : index
    %250 = vector.load %arg29[%c0_99, %c8_100] : memref<8x32xf32, #tpu.memory_space<vmem>>, vector<8x8xf32>
    tpu.vector_store %arg29[%c0_99, %c8_100], %249 {strides = array<i32>} : memref<8x32xf32, #tpu.memory_space<vmem>>, vector<8x8xf32>,
    %251 = vector.extract_strided_slice %206 {offsets = [0, 16], sizes = [8, 8], strides = [1, 1]} : vector<8x96xf32> to vector<8x8xf32>
    %252 = vector.shape_cast %251 : vector<8x8xf32> to vector<1x8x8xf32>
    %253 = vector.extract_strided_slice %206 {offsets = [0, 48], sizes = [8, 8], strides = [1, 1]} : vector<8x96xf32> to vector<8x8xf32>
    %254 = vector.shape_cast %253 : vector<8x8xf32> to vector<1x8x8xf32>
    %255 = vector.extract_strided_slice %206 {offsets = [0, 80], sizes = [8, 8], strides = [1, 1]} : vector<8x96xf32> to vector<8x8xf32>
    %256 = vector.shape_cast %255 : vector<8x8xf32> to vector<1x8x8xf32>
    "tpu.trace_start"() <{level = 10 : i32, message = "bqd,bkd->bqk"}> : () -> ()
    %cst_101 = arith.constant dense<0.000000e+00> : vector<1x8x8xf32>
    %257 = tpu.matmul %252, %254, %cst_101 {dimension_numbers = #tpu.dot_dimension_numbers<[2], [2], [1], [1], [0, 0, 0, 1, 1, 1], [0], [0]>} : vector<1x8x8xf32>, vector<1x8x8xf32>, vector<1x8x8xf32> -> vector<1x8x8xf32>
    "tpu.trace_stop"() : () -> ()
    %258 = vector.broadcast %13 : vector<1x1x8xf32> to vector<1x8x8xf32>
    %259 = arith.addf %257, %258 : vector<1x8x8xf32>
    %cst_102 = arith.constant dense<0xFF800000> : vector<1x8xf32>
    %260 = vector.multi_reduction <maximumf>, %259, %cst_102 [2] : vector<1x8x8xf32> to vector<1x8xf32>
    %261 = vector.shape_cast %260 : vector<1x8xf32> to vector<1x8x1xf32>
    %262 = vector.broadcast %261 : vector<1x8x1xf32> to vector<1x8x8xf32>
    %263 = arith.subf %259, %262 : vector<1x8x8xf32>
    %264 = math.exp %263 : vector<1x8x8xf32>
    %cst_103 = arith.constant dense<0.000000e+00> : vector<1x8xf32>
    %265 = vector.multi_reduction <add>, %264, %cst_103 [2] : vector<1x8x8xf32> to vector<1x8xf32>
    %266 = vector.shape_cast %265 : vector<1x8xf32> to vector<1x8x1xf32>
    %267 = tpu.reciprocal %266 {approx = true} : vector<1x8x1xf32> -> vector<1x8x1xf32>
    %268 = vector.broadcast %267 : vector<1x8x1xf32> to vector<1x8x8xf32>
    %269 = arith.mulf %264, %268 : vector<1x8x8xf32>
    "tpu.trace_start"() <{level = 10 : i32, message = "bqk,bkd->bqd"}> : () -> ()
    %cst_104 = arith.constant dense<0.000000e+00> : vector<1x8x8xf32>
    %270 = tpu.matmul %269, %256, %cst_104 {dimension_numbers = #tpu.dot_dimension_numbers<[2], [1], [1], [2], [0, 0, 0, 1, 1, 2], [0], [0]>} : vector<1x8x8xf32>, vector<1x8x8xf32>, vector<1x8x8xf32> -> vector<1x8x8xf32>
    "tpu.trace_stop"() : () -> ()
    %271 = vector.shape_cast %270 : vector<1x8x8xf32> to vector<8x8xf32>
    %c0_105 = arith.constant 0 : index
    %c16_106 = arith.constant 16 : index
    %272 = vector.load %arg29[%c0_105, %c16_106] : memref<8x32xf32, #tpu.memory_space<vmem>>, vector<8x8xf32>
    tpu.vector_store %arg29[%c0_105, %c16_106], %271 {strides = array<i32>} : memref<8x32xf32, #tpu.memory_space<vmem>>, vector<8x8xf32>,
    %273 = vector.extract_strided_slice %206 {offsets = [0, 24], sizes = [8, 8], strides = [1, 1]} : vector<8x96xf32> to vector<8x8xf32>
    %274 = vector.shape_cast %273 : vector<8x8xf32> to vector<1x8x8xf32>
    %275 = vector.extract_strided_slice %206 {offsets = [0, 56], sizes = [8, 8], strides = [1, 1]} : vector<8x96xf32> to vector<8x8xf32>
    %276 = vector.shape_cast %275 : vector<8x8xf32> to vector<1x8x8xf32>
    %277 = vector.extract_strided_slice %206 {offsets = [0, 88], sizes = [8, 8], strides = [1, 1]} : vector<8x96xf32> to vector<8x8xf32>
    %278 = vector.shape_cast %277 : vector<8x8xf32> to vector<1x8x8xf32>
    "tpu.trace_start"() <{level = 10 : i32, message = "bqd,bkd->bqk"}> : () -> ()
    %cst_107 = arith.constant dense<0.000000e+00> : vector<1x8x8xf32>
    %279 = tpu.matmul %274, %276, %cst_107 {dimension_numbers = #tpu.dot_dimension_numbers<[2], [2], [1], [1], [0, 0, 0, 1, 1, 1], [0], [0]>} : vector<1x8x8xf32>, vector<1x8x8xf32>, vector<1x8x8xf32> -> vector<1x8x8xf32>
    "tpu.trace_stop"() : () -> ()
    %280 = vector.broadcast %13 : vector<1x1x8xf32> to vector<1x8x8xf32>
    %281 = arith.addf %279, %280 : vector<1x8x8xf32>
    %cst_108 = arith.constant dense<0xFF800000> : vector<1x8xf32>
    %282 = vector.multi_reduction <maximumf>, %281, %cst_108 [2] : vector<1x8x8xf32> to vector<1x8xf32>
    %283 = vector.shape_cast %282 : vector<1x8xf32> to vector<1x8x1xf32>
    %284 = vector.broadcast %283 : vector<1x8x1xf32> to vector<1x8x8xf32>
    %285 = arith.subf %281, %284 : vector<1x8x8xf32>
    %286 = math.exp %285 : vector<1x8x8xf32>
    %cst_109 = arith.constant dense<0.000000e+00> : vector<1x8xf32>
    %287 = vector.multi_reduction <add>, %286, %cst_109 [2] : vector<1x8x8xf32> to vector<1x8xf32>
    %288 = vector.shape_cast %287 : vector<1x8xf32> to vector<1x8x1xf32>
    %289 = tpu.reciprocal %288 {approx = true} : vector<1x8x1xf32> -> vector<1x8x1xf32>
    %290 = vector.broadcast %289 : vector<1x8x1xf32> to vector<1x8x8xf32>
    %291 = arith.mulf %286, %290 : vector<1x8x8xf32>
    "tpu.trace_start"() <{level = 10 : i32, message = "bqk,bkd->bqd"}> : () -> ()
    %cst_110 = arith.constant dense<0.000000e+00> : vector<1x8x8xf32>
    %292 = tpu.matmul %291, %278, %cst_110 {dimension_numbers = #tpu.dot_dimension_numbers<[2], [1], [1], [2], [0, 0, 0, 1, 1, 2], [0], [0]>} : vector<1x8x8xf32>, vector<1x8x8xf32>, vector<1x8x8xf32> -> vector<1x8x8xf32>
    "tpu.trace_stop"() : () -> ()
    %293 = vector.shape_cast %292 : vector<1x8x8xf32> to vector<8x8xf32>
    %c0_111 = arith.constant 0 : index
    %c24_112 = arith.constant 24 : index
    %294 = vector.load %arg29[%c0_111, %c24_112] : memref<8x32xf32, #tpu.memory_space<vmem>>, vector<8x8xf32>
    tpu.vector_store %arg29[%c0_111, %c24_112], %293 {strides = array<i32>} : memref<8x32xf32, #tpu.memory_space<vmem>>, vector<8x8xf32>,
    %c0_113 = arith.constant 0 : index
    %c0_114 = arith.constant 0 : index
    %295 = vector.load %arg29[%c0_113, %c0_114] : memref<8x32xf32, #tpu.memory_space<vmem>>, vector<8x32xf32>
    %c0_115 = arith.constant 0 : index
    %c0_116 = arith.constant 0 : index
    %296 = vector.load %arg20[%c0_115, %c0_116] : memref<32x32xf32, #tpu.memory_space<vmem>>, vector<32x32xf32>
    %cst_117 = arith.constant dense<0.000000e+00> : vector<8x32xf32>
    %297 = tpu.matmul %295, %296, %cst_117 {dimension_numbers = #tpu.dot_dimension_numbers<[1], [0], [0], [1], [0, 0, 1, 1], [], []>} : vector<8x32xf32>, vector<32x32xf32>, vector<8x32xf32> -> vector<8x32xf32>
    %298 = arith.addf %1, %297 : vector<8x32xf32>
    %c0_118 = arith.constant 0 : index
    %c0_119 = arith.constant 0 : index
    %299 = vector.load %arg21[%c0_118, %c0_119] : memref<1x32xf32, #tpu.memory_space<vmem>>, vector<1x32xf32>
    %300 = vector.broadcast %299 : vector<1x32xf32> to vector<8x32xf32>
    %301 = arith.addf %298, %300 : vector<8x32xf32>
    %c0_120 = arith.constant 0 : index
    %c0_121 = arith.constant 0 : index
    %302 = vector.load %arg22[%c0_120, %c0_121] : memref<1x32xf32, #tpu.memory_space<vmem>>, vector<1x32xf32>
    %c0_122 = arith.constant 0 : index
    %c0_123 = arith.constant 0 : index
    %303 = vector.load %arg23[%c0_122, %c0_123] : memref<1x32xf32, #tpu.memory_space<vmem>>, vector<1x32xf32>
    %cst_124 = arith.constant dense<0.000000e+00> : vector<8xf32>
    %304 = vector.multi_reduction <add>, %301, %cst_124 [1] : vector<8x32xf32> to vector<8xf32>
    %305 = vector.shape_cast %304 : vector<8xf32> to vector<8x1xf32>
    %cst_125 = arith.constant 3.200000e+01 : f32
    %306 = vector.broadcast %cst_125 : f32 to vector<8x1xf32>
    %307 = arith.divf %305, %306 : vector<8x1xf32>
    %308 = vector.broadcast %307 : vector<8x1xf32> to vector<8x32xf32>
    %309 = arith.subf %301, %308 : vector<8x32xf32>
    %310 = arith.mulf %309, %309 : vector<8x32xf32>
    %cst_126 = arith.constant dense<0.000000e+00> : vector<8xf32>
    %311 = vector.multi_reduction <add>, %310, %cst_126 [1] : vector<8x32xf32> to vector<8xf32>
    %312 = vector.shape_cast %311 : vector<8xf32> to vector<8x1xf32>
    %cst_127 = arith.constant 0.0322580636 : f32
    %313 = vector.broadcast %cst_127 : f32 to vector<8x1xf32>
    %314 = arith.mulf %312, %313 : vector<8x1xf32>
    %315 = math.sqrt %314 : vector<8x1xf32>
    %316 = vector.broadcast %307 : vector<8x1xf32> to vector<8x32xf32>
    %317 = arith.subf %301, %316 : vector<8x32xf32>
    %318 = vector.broadcast %302 : vector<1x32xf32> to vector<8x32xf32>
    %319 = arith.mulf %318, %317 : vector<8x32xf32>
    %cst_128 = arith.constant 9.99999997E-7 : f32
    %320 = vector.broadcast %cst_128 : f32 to vector<8x1xf32>
    %321 = arith.addf %315, %320 : vector<8x1xf32>
    %322 = tpu.reciprocal %321 : vector<8x1xf32> -> vector<8x1xf32>
    %323 = vector.broadcast %322 : vector<8x1xf32> to vector<8x32xf32>
    %324 = arith.mulf %319, %323 : vector<8x32xf32>
    %325 = vector.broadcast %303 : vector<1x32xf32> to vector<8x32xf32>
    %326 = arith.addf %324, %325 : vector<8x32xf32>
    %c0_129 = arith.constant 0 : index
    %c0_130 = arith.constant 0 : index
    %327 = vector.load %arg24[%c0_129, %c0_130] : memref<32x64xf32, #tpu.memory_space<vmem>>, vector<32x64xf32>
    %cst_131 = arith.constant dense<0.000000e+00> : vector<8x64xf32>
    %328 = tpu.matmul %326, %327, %cst_131 {dimension_numbers = #tpu.dot_dimension_numbers<[1], [0], [0], [1], [0, 0, 1, 1], [], []>} : vector<8x32xf32>, vector<32x64xf32>, vector<8x64xf32> -> vector<8x64xf32>
    %c0_132 = arith.constant 0 : index
    %c0_133 = arith.constant 0 : index
    %329 = vector.load %arg25[%c0_132, %c0_133] : memref<1x64xf32, #tpu.memory_space<vmem>>, vector<1x64xf32>
    %330 = vector.broadcast %329 : vector<1x64xf32> to vector<8x64xf32>
    %331 = arith.addf %328, %330 : vector<8x64xf32>
    %cst_134 = arith.constant 0.000000e+00 : f32
    %332 = vector.broadcast %cst_134 : f32 to vector<8x64xf32>
    %333 = arith.maximumf %331, %332 : vector<8x64xf32>
    %c0_135 = arith.constant 0 : index
    %c0_136 = arith.constant 0 : index
    %334 = vector.load %arg26[%c0_135, %c0_136] : memref<64x32xf32, #tpu.memory_space<vmem>>, vector<64x32xf32>
    %cst_137 = arith.constant dense<0.000000e+00> : vector<8x32xf32>
    %335 = tpu.matmul %333, %334, %cst_137 {dimension_numbers = #tpu.dot_dimension_numbers<[1], [0], [0], [1], [0, 0, 1, 1], [], []>} : vector<8x64xf32>, vector<64x32xf32>, vector<8x32xf32> -> vector<8x32xf32>
    %c0_138 = arith.constant 0 : index
    %c0_139 = arith.constant 0 : index
    %336 = vector.load %arg27[%c0_138, %c0_139] : memref<1x32xf32, #tpu.memory_space<vmem>>, vector<1x32xf32>
    %337 = vector.broadcast %336 : vector<1x32xf32> to vector<8x32xf32>
    %338 = arith.addf %335, %337 : vector<8x32xf32>
    %339 = arith.addf %301, %338 : vector<8x32xf32>
    %340 = arith.addf %176, %339 : vector<8x32xf32>
    %341 = vector.shape_cast %340 : vector<8x32xf32> to vector<1x8x32xf32>
    %c0_140 = arith.constant 0 : index
    %c0_141 = arith.constant 0 : index
    %c0_142 = arith.constant 0 : index
    %342 = vector.load %arg28[%c0_140, %c0_141, %c0_142] : memref<1x8x32xf32, #tpu.memory_space<vmem>>, vector<1x8x32xf32>
    tpu.vector_store %arg28[%c0_140, %c0_141, %c0_142], %341 {strides = array<i32>} : memref<1x8x32xf32, #tpu.memory_space<vmem>>, vector<1x8x32xf32>,
    return
  }
  func.func @transform_0(%arg0: i32) -> (i32, i32, i32) {
    %c0_i32 = arith.constant 0 : i32
    %c0_i32_0 = arith.constant 0 : i32
    %c0_i32_1 = arith.constant 0 : i32
    return %arg0, %c0_i32, %c0_i32_0 : i32, i32, i32
  }
  func.func @transform_1(%arg0: i32) -> (i32, i32, i32) {
    %c0_i32 = arith.constant 0 : i32
    %c0_i32_0 = arith.constant 0 : i32
    %c0_i32_1 = arith.constant 0 : i32
    return %arg0, %c0_i32, %c0_i32_0 : i32, i32, i32
  }
  func.func @transform_2(%arg0: i32) -> (i32, i32, i32) {
    %c0_i32 = arith.constant 0 : i32
    %c0_i32_0 = arith.constant 0 : i32
    %c0_i32_1 = arith.constant 0 : i32
    return %arg0, %c0_i32, %c0_i32_0 : i32, i32, i32
  }
  func.func @transform_3(%arg0: i32) -> (i32, i32) {
    %c0_i32 = arith.constant 0 : i32
    %c0_i32_0 = arith.constant 0 : i32
    %c0_i32_1 = arith.constant 0 : i32
    return %c0_i32, %c0_i32_0 : i32, i32
  }
  func.func @transform_4(%arg0: i32) -> (i32, i32) {
    %c0_i32 = arith.constant 0 : i32
    %c0_i32_0 = arith.constant 0 : i32
    %c0_i32_1 = arith.constant 0 : i32
    return %c0_i32, %c0_i32_0 : i32, i32
  }
  func.func @transform_5(%arg0: i32) -> (i32, i32) {
    %c0_i32 = arith.constant 0 : i32
    %c0_i32_0 = arith.constant 0 : i32
    %c0_i32_1 = arith.constant 0 : i32
    return %c0_i32, %c0_i32_0 : i32, i32
  }
  func.func @transform_6(%arg0: i32) -> (i32, i32) {
    %c0_i32 = arith.constant 0 : i32
    %c0_i32_0 = arith.constant 0 : i32
    %c0_i32_1 = arith.constant 0 : i32
    return %c0_i32, %c0_i32_0 : i32, i32
  }
  func.func @transform_7(%arg0: i32) -> (i32, i32) {
    %c0_i32 = arith.constant 0 : i32
    %c0_i32_0 = arith.constant 0 : i32
    %c0_i32_1 = arith.constant 0 : i32
    return %c0_i32, %c0_i32_0 : i32, i32
  }
  func.func @transform_8(%arg0: i32) -> (i32, i32) {
    %c0_i32 = arith.constant 0 : i32
    %c0_i32_0 = arith.constant 0 : i32
    %c0_i32_1 = arith.constant 0 : i32
    return %c0_i32, %c0_i32_0 : i32, i32
  }
  func.func @transform_9(%arg0: i32) -> (i32, i32) {
    %c0_i32 = arith.constant 0 : i32
    %c0_i32_0 = arith.constant 0 : i32
    %c0_i32_1 = arith.constant 0 : i32
    return %c0_i32, %c0_i32_0 : i32, i32
  }
  func.func @transform_10(%arg0: i32) -> (i32, i32) {
    %c0_i32 = arith.constant 0 : i32
    %c0_i32_0 = arith.constant 0 : i32
    %c0_i32_1 = arith.constant 0 : i32
    return %c0_i32, %c0_i32_0 : i32, i32
  }
  func.func @transform_11(%arg0: i32) -> (i32, i32) {
    %c0_i32 = arith.constant 0 : i32
    %c0_i32_0 = arith.constant 0 : i32
    %c0_i32_1 = arith.constant 0 : i32
    return %c0_i32, %c0_i32_0 : i32, i32
  }
  func.func @transform_12(%arg0: i32) -> (i32, i32) {
    %c0_i32 = arith.constant 0 : i32
    %c0_i32_0 = arith.constant 0 : i32
    %c0_i32_1 = arith.constant 0 : i32
    return %c0_i32, %c0_i32_0 : i32, i32
  }
  func.func @transform_13(%arg0: i32) -> (i32, i32) {
    %c0_i32 = arith.constant 0 : i32
    %c0_i32_0 = arith.constant 0 : i32
    %c0_i32_1 = arith.constant 0 : i32
    return %c0_i32, %c0_i32_0 : i32, i32
  }
  func.func @transform_14(%arg0: i32) -> (i32, i32) {
    %c0_i32 = arith.constant 0 : i32
    %c0_i32_0 = arith.constant 0 : i32
    %c0_i32_1 = arith.constant 0 : i32
    return %c0_i32, %c0_i32_0 : i32, i32
  }
  func.func @transform_15(%arg0: i32) -> (i32, i32) {
    %c0_i32 = arith.constant 0 : i32
    %c0_i32_0 = arith.constant 0 : i32
    %c0_i32_1 = arith.constant 0 : i32
    return %c0_i32, %c0_i32_0 : i32, i32
  }
  func.func @transform_16(%arg0: i32) -> (i32, i32) {
    %c0_i32 = arith.constant 0 : i32
    %c0_i32_0 = arith.constant 0 : i32
    %c0_i32_1 = arith.constant 0 : i32
    return %c0_i32, %c0_i32_0 : i32, i32
  }
  func.func @transform_17(%arg0: i32) -> (i32, i32) {
    %c0_i32 = arith.constant 0 : i32
    %c0_i32_0 = arith.constant 0 : i32
    %c0_i32_1 = arith.constant 0 : i32
    return %c0_i32, %c0_i32_0 : i32, i32
  }
  func.func @transform_18(%arg0: i32) -> (i32, i32) {
    %c0_i32 = arith.constant 0 : i32
    %c0_i32_0 = arith.constant 0 : i32
    %c0_i32_1 = arith.constant 0 : i32
    return %c0_i32, %c0_i32_0 : i32, i32
  }
  func.func @transform_19(%arg0: i32) -> (i32, i32) {
    %c0_i32 = arith.constant 0 : i32
    %c0_i32_0 = arith.constant 0 : i32
    %c0_i32_1 = arith.constant 0 : i32
    return %c0_i32, %c0_i32_0 : i32, i32
  }
  func.func @transform_20(%arg0: i32) -> (i32, i32) {
    %c0_i32 = arith.constant 0 : i32
    %c0_i32_0 = arith.constant 0 : i32
    %c0_i32_1 = arith.constant 0 : i32
    return %c0_i32, %c0_i32_0 : i32, i32
  }
  func.func @transform_21(%arg0: i32) -> (i32, i32) {
    %c0_i32 = arith.constant 0 : i32
    %c0_i32_0 = arith.constant 0 : i32
    %c0_i32_1 = arith.constant 0 : i32
    return %c0_i32, %c0_i32_0 : i32, i32
  }
  func.func @transform_22(%arg0: i32) -> (i32, i32) {
    %c0_i32 = arith.constant 0 : i32
    %c0_i32_0 = arith.constant 0 : i32
    %c0_i32_1 = arith.constant 0 : i32
    return %c0_i32, %c0_i32_0 : i32, i32
  }
  func.func @transform_23(%arg0: i32) -> (i32, i32) {
    %c0_i32 = arith.constant 0 : i32
    %c0_i32_0 = arith.constant 0 : i32
    %c0_i32_1 = arith.constant 0 : i32
    return %c0_i32, %c0_i32_0 : i32, i32
  }
  func.func @transform_24(%arg0: i32) -> (i32, i32) {
    %c0_i32 = arith.constant 0 : i32
    %c0_i32_0 = arith.constant 0 : i32
    %c0_i32_1 = arith.constant 0 : i32
    return %c0_i32, %c0_i32_0 : i32, i32
  }
  func.func @transform_25(%arg0: i32) -> (i32, i32) {
    %c0_i32 = arith.constant 0 : i32
    %c0_i32_0 = arith.constant 0 : i32
    %c0_i32_1 = arith.constant 0 : i32
    return %c0_i32, %c0_i32_0 : i32, i32
  }
  func.func @transform_26(%arg0: i32) -> (i32, i32) {
    %c0_i32 = arith.constant 0 : i32
    %c0_i32_0 = arith.constant 0 : i32
    %c0_i32_1 = arith.constant 0 : i32
    return %c0_i32, %c0_i32_0 : i32, i32
  }
  func.func @transform_27(%arg0: i32) -> (i32, i32, i32) {
    %c0_i32 = arith.constant 0 : i32
    %c0_i32_0 = arith.constant 0 : i32
    %c0_i32_1 = arith.constant 0 : i32
    return %arg0, %c0_i32, %c0_i32_0 : i32, i32, i32
  }
}

</mosaic_0001>

<llo_original>
// kernel: tpu_custom_call.1
$region0: #{tpu_custom_call.1}
  #allocation0 [shape = 'u32[]', space=smem, size = 0x4, offset = 0x4, fixed_abs, tag = 'smem constant byte address 0x4 - core index']
  #allocation1 [shape = 'u32[144,128]{1,0:T(1,128)}', space=vmem, size = 0x12000, scoped, tag = 'internal scratch']
  %s0 = inlined_call_operand.hbm [shape: f32[8,128], index: 0, kind: input, shape index: {}]
  %s1 = inlined_call_operand.hbm [shape: f32[16,128], index: 1, kind: input, shape index: {}]
  %s2 = inlined_call_operand.hbm [shape: f32[16,128], index: 2, kind: output, shape index: {}]
  %s3 = sld [smem:[#allocation0]]
  $region49: #{tpu_custom_call.1} parent=0
    _
  %s5 = ssub.s32 1, %s3
  %s6 = scalar_select 0, %s5, %s3
  $region1: #{tpu_custom_call.1} parent=0
    #allocation2 [shape = 'u8[4096]{0}', space=vmem, size = 0x1000, scoped, tag = 'input window, operand 0, single buffered']
    #allocation3 [shape = 's32[2]{0}', space=sflag, size = 0x8, scoped, tag = 'scoped memory for tpu_custom_call.1']
    #allocation4 [shape = 's32[2]{0}', space=sflag, size = 0x8, scoped, tag = 'scoped memory for tpu_custom_call.1']
    #allocation5 [shape = 'u8[8192]{0}', space=vmem, size = 0x2000, scoped, tag = 'input window, operand 1']
    #allocation6 [shape = 's32[2]{0}', space=sflag, size = 0x8, scoped, tag = 'scoped memory for tpu_custom_call.1']
    #allocation7 [shape = 'u8[8192]{0}', space=vmem, size = 0x2000, scoped, tag = 'output window, operand 0']
    %7 = vsyncpa [#allocation3], 0
    %8 = vsyncpa [#allocation6], 0
    %s9 = scalar_lea.sflag [#allocation6], 1
    %10 = vsyncpa %s9, 0
    %11 = vsyncpa [#allocation4], 0
    %s12 = scalar_lea.sflag [#allocation4], 1
    %13 = vsyncpa %s12, 0
    loop: start=0, step=1, limit=4
    $region2: #{tpu_custom_call.1} parent=1 // loop_pre_header
      _
    $region3: #{tpu_custom_call.1} parent=1 // loop_header
      %s15 = sphi 0, %s19
      %p16 = scmp.ge.s32.totalorder %s15, 4
      %s23 = sphi 0, %s23
      %s25 = sphi 0, %s23
      %s26 = sphi 0, %s25
      %s40 = sphi 0, %s26
      %s46 = sphi 0, %s48
      %s49 = sphi 0, %s46
      %s50 = sphi 0, %s49
      %s66 = sphi 0, %s50
      %s72 = sphi 0, %s74
      %s75 = sphi 0, %s72
      %s76 = sphi 0, %s75
      %s92 = sphi 0, %s76
    $region4: #{tpu_custom_call.1} parent=1 // loop_header_branch
      %18 = sbr.rel (%p16) target = $region8
    $region5: #{tpu_custom_call.1} parent=1 // loop_body
      %s20 = ssub.s32 %s15, 1
      %s21 = ssub.s32 %s15, 2
      %s22 = sadd.s32 %s15, 1
      %s24 = sadd.s32 %s23, 1
      %p27 = scmp.eq.s32.totalorder %s15, 1
      %p28 = scmp.ne.s32.totalorder %s23, %s25
      %p29 = scmp.eq.s32.totalorder %s15, 0
      %p30 = por %p28, %p29
      %p31 = scmp.ne.s32.totalorder %s23, %s25
      %p32 = scmp.eq.s32.totalorder %s20, 1
      %p33 = por %p31, %p32
      %p34 = scmp.ne.s32.totalorder %s25, %s26
      %p35 = scmp.eq.s32.totalorder %s20, 0
      %p36 = por %p34, %p35
      %p37 = scmp.ne.s32.totalorder %s25, %s26
      %p38 = scmp.eq.s32.totalorder %s21, 1
      %p39 = por %p37, %p38
      %p41 = scmp.ne.s32.totalorder %s26, %s40
      %p42 = scmp.eq.s32.totalorder %s21, 0
      %p43 = por %p41, %p42
      %s44 = ssub.s32 %s15, %s22
      %p45 = scmp.eq.s32.totalorder %s44, 0
      %s47 = sadd.s32 %s46, 1
      %s48 = scalar_select %p45, %s46, %s47
      %p51 = pneg %p45
      %p52 = scmp.eq.s32.totalorder %s15, 1
      %p53 = por %p51, %p52
      %p54 = scmp.ne.s32.totalorder %s46, %s49
      %p55 = scmp.eq.s32.totalorder %s15, 0
      %p56 = por %p54, %p55
      %p57 = scmp.ne.s32.totalorder %s46, %s49
      %p58 = scmp.eq.s32.totalorder %s20, 1
      %p59 = por %p57, %p58
      %p60 = scmp.ne.s32.totalorder %s49, %s50
      %p61 = scmp.eq.s32.totalorder %s20, 0
      %p62 = por %p60, %p61
      %p63 = scmp.ne.s32.totalorder %s49, %s50
      %p64 = scmp.eq.s32.totalorder %s21, 1
      %p65 = por %p63, %p64
      %p67 = scmp.ne.s32.totalorder %s50, %s66
      %p68 = scmp.eq.s32.totalorder %s21, 0
      %p69 = por %p67, %p68
      %s70 = ssub.s32 %s15, %s22
      %p71 = scmp.eq.s32.totalorder %s70, 0
      %s73 = sadd.s32 %s72, 1
      %s74 = scalar_select %p71, %s72, %s73
      %p77 = pneg %p71
      %p78 = scmp.eq.s32.totalorder %s15, 1
      %p79 = por %p77, %p78
      %p80 = scmp.ne.s32.totalorder %s72, %s75
      %p81 = scmp.eq.s32.totalorder %s15, 0
      %p82 = por %p80, %p81
      %p83 = scmp.ne.s32.totalorder %s72, %s75
      %p84 = scmp.eq.s32.totalorder %s20, 1
      %p85 = por %p83, %p84
      %p86 = scmp.ne.s32.totalorder %s75, %s76
      %p87 = scmp.eq.s32.totalorder %s20, 0
      %p88 = por %p86, %p87
      %p89 = scmp.ne.s32.totalorder %s75, %s76
      %p90 = scmp.eq.s32.totalorder %s21, 1
      %p91 = por %p89, %p90
      %p93 = scmp.ne.s32.totalorder %s76, %s92
      %p94 = scmp.eq.s32.totalorder %s21, 0
      %p95 = por %p93, %p94
      %p96 = scmp.le.s32.totalorder 1, %s15
      %p97 = scmp.lt.s32.totalorder %s15, 3
      %p98 = pnand %p96, %p97
      %p99 = pneg %p98
      // Predicated region
      $region9: #{tpu_custom_call.1} parent=5 // pred_check
        _
      $region10: #{tpu_custom_call.1} parent=5 // pred_check_branch
        %101 = sbr.rel (%p98) target = $region12
      $region11: #{tpu_custom_call.1} parent=5 // pred_region
        %s102 = ssub.s32 %s15, 1
        // Predicated region
        $region13: #{tpu_custom_call.1} parent=11 // pred_check
          %p103 = pneg %p36
        $region14: #{tpu_custom_call.1} parent=11 // pred_check_branch
          %105 = sbr.rel (%p103) target = $region16
        $region15: #{tpu_custom_call.1} parent=11 // pred_region
          %s107 = ssub.s32 128, 128
          %108 = vsyncadd [#allocation3], %s107
          %s110 = sshll.u32 [#allocation2], 4
          %s111 = int_to_ptr.vmem [resolvable:$true] %s110
          %113 = dma.hbm_to_vmem [thread:$0]  %s0, 128, %s111, [#allocation3]
        $region16: #{tpu_custom_call.1} parent=11 // pred_fallthru
          _
      $region12: #{tpu_custom_call.1} parent=5 // pred_fallthru
        _
      %p114 = scmp.lt.s32.totalorder %s15, 2
      // Predicated region
      $region17: #{tpu_custom_call.1} parent=5 // pred_check
        %p115 = pneg %p114
      $region18: #{tpu_custom_call.1} parent=5 // pred_check_branch
        %117 = sbr.rel (%p115) target = $region20
      $region19: #{tpu_custom_call.1} parent=5 // pred_region
        // Predicated region
        $region21: #{tpu_custom_call.1} parent=19 // pred_check
          %p118 = pneg %p56
        $region22: #{tpu_custom_call.1} parent=19 // pred_check_branch
          %120 = sbr.rel (%p118) target = $region24
        $region23: #{tpu_custom_call.1} parent=19 // pred_region
          %s121 = sand.u32 %s46, 1
          %s122 = scalar_lea.sflag [#allocation6], %s121
          %s123 = sand.u32 %s46, 1
          %s124 = smul.addr %s123, 8
          %s125 = scalar_lea.vmem [#allocation5], %s124
          %s127 = ssub.s32 128, 128
          %128 = vsyncadd %s122, %s127
          %s129 = smul.addr %s15, 128
          %s130 = scalar_lea.hbm %s1, %s129
          %s132 = sshll.u32 %s125, 4
          %s133 = int_to_ptr.vmem [resolvable:$true] %s132
          %135 = dma.hbm_to_vmem [thread:$0]  %s130, 128, %s133, %s122
        $region24: #{tpu_custom_call.1} parent=19 // pred_fallthru
          _
      $region20: #{tpu_custom_call.1} parent=5 // pred_fallthru
        _
      %p136 = scmp.le.s32.totalorder 1, %s15
      %p137 = scmp.lt.s32.totalorder %s15, 3
      %p138 = pnand %p136, %p137
      %p139 = pneg %p138
      // Predicated region
      $region25: #{tpu_custom_call.1} parent=5 // pred_check
        _
      $region26: #{tpu_custom_call.1} parent=5 // pred_check_branch
        %141 = sbr.rel (%p138) target = $region28
      $region27: #{tpu_custom_call.1} parent=5 // pred_region
        %s142 = ssub.s32 %s15, 1
        // Predicated region
        $region29: #{tpu_custom_call.1} parent=27 // pred_check
          %p143 = pneg %p36
        $region30: #{tpu_custom_call.1} parent=27 // pred_check_branch
          %145 = sbr.rel (%p143) target = $region32
        $region31: #{tpu_custom_call.1} parent=27 // pred_region
          %146 = dma.done [#allocation3], 128
        $region32: #{tpu_custom_call.1} parent=27 // pred_fallthru
          _
        %s147 = sand.u32 %s49, 1
        %s148 = scalar_lea.sflag [#allocation6], %s147
        %s149 = sand.u32 %s49, 1
        %s150 = smul.addr %s149, 8
        %s151 = scalar_lea.vmem [#allocation5], %s150
        // Predicated region
        $region33: #{tpu_custom_call.1} parent=27 // pred_check
          %p152 = pneg %p62
        $region34: #{tpu_custom_call.1} parent=27 // pred_check_branch
          %154 = sbr.rel (%p152) target = $region36
        $region35: #{tpu_custom_call.1} parent=27 // pred_region
          %155 = dma.done %s148, 128
        $region36: #{tpu_custom_call.1} parent=27 // pred_fallthru
          _
        %p156 = pneg %p36
        %p157 = pneg %p33
        %s158 = sand.u32 %s49, 1
        %s159 = scalar_lea.sflag [#allocation6], %s158
        %s160 = sand.u32 %s49, 1
        %s161 = smul.addr %s160, 8
        %s162 = scalar_lea.vmem [#allocation5], %s161
        %p163 = pneg %p62
        %p164 = pneg %p59
        %p165 = pneg %p88
        %p166 = pneg %p85
        %s167 = sand.u32 %s75, 1
        %s168 = scalar_lea.sflag [#allocation4], %s167
        %s169 = sand.u32 %s75, 1
        %s170 = smul.addr %s169, 8
        %s171 = scalar_lea.vmem [#allocation7], %s170
        %v172 = vld [vmem:[%s151] sm:$0xff]
        %v173 = vld [vmem:[#allocation2] sm:$0xff]
        %v174 = vadd.f32 %v172, %v173
        %175 = vst [vmem:[%s171] sm:$0xff] %v174
        %s176 = sand.u32 %s75, 1
        %s177 = scalar_lea.sflag [#allocation4], %s176
        %s178 = sand.u32 %s75, 1
        %s179 = smul.addr %s178, 8
        %s180 = scalar_lea.vmem [#allocation7], %s179
        // Predicated region
        $region37: #{tpu_custom_call.1} parent=27 // pred_check
          %p181 = pneg %p85
        $region38: #{tpu_custom_call.1} parent=27 // pred_check_branch
          %183 = sbr.rel (%p181) target = $region40
        $region39: #{tpu_custom_call.1} parent=27 // pred_region
          %s185 = ssub.s32 128, 128
          %186 = vsyncadd %s177, %s185
          %s187 = smul.addr %s20, 128
          %s188 = scalar_lea.hbm %s2, %s187
          %s190 = sshll.u32 %s180, 4
          %s191 = int_to_ptr.vmem [resolvable:$true] %s190
          %193 = dma.vmem_to_hbm [thread:$0]  %s191, 128, %s188, %s177
        $region40: #{tpu_custom_call.1} parent=27 // pred_fallthru
          _
      $region28: #{tpu_custom_call.1} parent=5 // pred_fallthru
        _
      %p194 = scmp.le.s32.totalorder 2, %s15
      // Predicated region
      $region41: #{tpu_custom_call.1} parent=5 // pred_check
        %p195 = pneg %p194
      $region42: #{tpu_custom_call.1} parent=5 // pred_check_branch
        %197 = sbr.rel (%p195) target = $region44
      $region43: #{tpu_custom_call.1} parent=5 // pred_region
        %s198 = ssub.s32 %s15, 2
        // Predicated region
        $region45: #{tpu_custom_call.1} parent=43 // pred_check
          %p199 = pneg %p91
        $region46: #{tpu_custom_call.1} parent=43 // pred_check_branch
          %201 = sbr.rel (%p199) target = $region48
        $region47: #{tpu_custom_call.1} parent=43 // pred_region
          %s202 = sand.u32 %s76, 1
          %s203 = scalar_lea.sflag [#allocation4], %s202
          %s204 = sand.u32 %s76, 1
          %s205 = smul.addr %s204, 8
          %s206 = scalar_lea.vmem [#allocation7], %s205
          %207 = dma.done %s203, 128
        $region48: #{tpu_custom_call.1} parent=43 // pred_fallthru
          _
      $region44: #{tpu_custom_call.1} parent=5 // pred_fallthru
        _
    $region6: #{tpu_custom_call.1} parent=1 // loop_footer
      %s19 = sadd.s32 1, %s15
    $region7: #{tpu_custom_call.1} parent=1 // loop_footer_branch
      %14 = sbr.rel target = $region3
    $region8: #{tpu_custom_call.1} parent=1 // loop_exit
      _
    %208 = vsyncpa [#allocation3], 1
    %s209 = scalar_lea.sflag [#allocation3], 1
    %210 = vsyncpa %s209, 1
    %211 = vsyncpa [#allocation6], 1
    %s212 = scalar_lea.sflag [#allocation6], 1
    %213 = vsyncpa %s212, 1
    %214 = vsyncpa [#allocation4], 1
    %s215 = scalar_lea.sflag [#allocation4], 1
    %216 = vsyncpa %s215, 1

// kernel: tpu_custom_call.1
$region0: #{tpu_custom_call.1}
  #allocation0 [shape = 'u32[]', space=smem, size = 0x4, offset = 0x4, fixed_abs, tag = 'smem constant byte address 0x4 - core index']
  #allocation1 [shape = 'u32[144,128]{1,0:T(1,128)}', space=vmem, size = 0x12000, scoped, tag = 'internal scratch']
  #allocation2 [shape = 'f32[8,32]{1,0:T(8,128)}', space=vmem, size = 0x1000, scoped, tag = 'scratch operand']
  %s0 = inlined_call_operand.hbm [shape: f32[2,8,32], index: 0, kind: input, shape index: {}]
  %s1 = inlined_call_operand.hbm [shape: f32[2,1,8], index: 1, kind: input, shape index: {}]
  %s2 = inlined_call_operand.hbm [shape: f32[2,1,8], index: 2, kind: input, shape index: {}]
  %s3 = inlined_call_operand.hbm [shape: f32[1,32], index: 3, kind: input, shape index: {}]
  %s4 = inlined_call_operand.hbm [shape: f32[1,32], index: 4, kind: input, shape index: {}]
  %s5 = inlined_call_operand.vmem [shape: f32[32,96], index: 5, kind: input, shape index: {}]
  %s6 = inlined_call_operand.hbm [shape: f32[1,96], index: 6, kind: input, shape index: {}]
  %s7 = inlined_call_operand.vmem [shape: f32[32,32], index: 7, kind: input, shape index: {}]
  %s8 = inlined_call_operand.hbm [shape: f32[1,32], index: 8, kind: input, shape index: {}]
  %s9 = inlined_call_operand.hbm [shape: f32[1,32], index: 9, kind: input, shape index: {}]
  %s10 = inlined_call_operand.hbm [shape: f32[1,32], index: 10, kind: input, shape index: {}]
  %s11 = inlined_call_operand.vmem [shape: f32[32,64], index: 11, kind: input, shape index: {}]
  %s12 = inlined_call_operand.hbm [shape: f32[1,64], index: 12, kind: input, shape index: {}]
  %s13 = inlined_call_operand.vmem [shape: f32[64,32], index: 13, kind: input, shape index: {}]
  %s14 = inlined_call_operand.hbm [shape: f32[1,32], index: 14, kind: input, shape index: {}]
  %s15 = inlined_call_operand.hbm [shape: f32[1,32], index: 15, kind: input, shape index: {}]
  %s16 = inlined_call_operand.hbm [shape: f32[1,32], index: 16, kind: input, shape index: {}]
  %s17 = inlined_call_operand.vmem [shape: f32[32,96], index: 17, kind: input, shape index: {}]
  %s18 = inlined_call_operand.hbm [shape: f32[1,96], index: 18, kind: input, shape index: {}]
  %s19 = inlined_call_operand.vmem [shape: f32[32,32], index: 19, kind: input, shape index: {}]
  %s20 = inlined_call_operand.vmem [shape: f32[1,32], index: 20, kind: input, shape index: {}]
  %s21 = inlined_call_operand.vmem [shape: f32[1,32], index: 21, kind: input, shape index: {}]
  %s22 = inlined_call_operand.vmem [shape: f32[1,32], index: 22, kind: input, shape index: {}]
  %s23 = inlined_call_operand.vmem [shape: f32[32,64], index: 23, kind: input, shape index: {}]
  %s24 = inlined_call_operand.vmem [shape: f32[1,64], index: 24, kind: input, shape index: {}]
  %s25 = inlined_call_operand.vmem [shape: f32[64,32], index: 25, kind: input, shape index: {}]
  %s26 = inlined_call_operand.vmem [shape: f32[1,32], index: 26, kind: input, shape index: {}]
  %s27 = inlined_call_operand.hbm [shape: f32[2,8,32], index: 27, kind: output, shape index: {}]
  %s28 = sld [smem:[#allocation0]]
  $region197: #{tpu_custom_call.1} parent=0
    _
  %s30 = ssub.s32 1, %s28
  %s31 = scalar_select 0, %s30, %s28
  $region1: #{tpu_custom_call.1} parent=0
    #allocation3 [shape = 'u8[8192]{0}', space=vmem, size = 0x2000, scoped, tag = 'input window, operand 0']
    #allocation4 [shape = 's32[2]{0}', space=sflag, size = 0x8, scoped, tag = 'scoped memory for tpu_custom_call.1']
    #allocation5 [shape = 's32[2]{0}', space=sflag, size = 0x8, scoped, tag = 'scoped memory for tpu_custom_call.1']
    #allocation6 [shape = 'u8[1024]{0}', space=vmem, size = 0x400, scoped, tag = 'input window, operand 1']
    #allocation7 [shape = 's32[2]{0}', space=sflag, size = 0x8, scoped, tag = 'scoped memory for tpu_custom_call.1']
    #allocation8 [shape = 'u8[1024]{0}', space=vmem, size = 0x400, scoped, tag = 'input window, operand 2']
    #allocation9 [shape = 'u8[512]{0}', space=vmem, size = 0x400, scoped, tag = 'input window, operand 3, single buffered']
    #allocation10 [shape = 's32[1]{0}', space=sflag, size = 0x4, scoped, tag = 'scoped memory for tpu_custom_call.1']
    #allocation11 [shape = 'u8[512]{0}', space=vmem, size = 0x400, scoped, tag = 'input window, operand 4, single buffered']
    #allocation12 [shape = 'u8[512]{0}', space=vmem, size = 0x400, scoped, tag = 'input window, operand 6, single buffered']
    #allocation13 [shape = 's32[1]{0}', space=sflag, size = 0x4, scoped, tag = 'scoped memory for tpu_custom_call.1']
    #allocation14 [shape = 'u8[512]{0}', space=vmem, size = 0x400, scoped, tag = 'input window, operand 8, single buffered']
    #allocation15 [shape = 'u8[512]{0}', space=vmem, size = 0x400, scoped, tag = 'input window, operand 9, single buffered']
    #allocation16 [shape = 's32[1]{0}', space=sflag, size = 0x4, scoped, tag = 'scoped memory for tpu_custom_call.1']
    #allocation17 [shape = 'u8[512]{0}', space=vmem, size = 0x400, scoped, tag = 'input window, operand 10, single buffered']
    #allocation18 [shape = 'u8[512]{0}', space=vmem, size = 0x400, scoped, tag = 'input window, operand 12, single buffered']
    #allocation19 [shape = 's32[1]{0}', space=sflag, size = 0x4, scoped, tag = 'scoped memory for tpu_custom_call.1']
    #allocation20 [shape = 'u8[512]{0}', space=vmem, size = 0x400, scoped, tag = 'input window, operand 14, single buffered']
    #allocation21 [shape = 'u8[512]{0}', space=vmem, size = 0x400, scoped, tag = 'input window, operand 15, single buffered']
    #allocation22 [shape = 's32[1]{0}', space=sflag, size = 0x4, scoped, tag = 'scoped memory for tpu_custom_call.1']
    #allocation23 [shape = 'u8[512]{0}', space=vmem, size = 0x400, scoped, tag = 'input window, operand 16, single buffered']
    #allocation24 [shape = 'u8[512]{0}', space=vmem, size = 0x400, scoped, tag = 'input window, operand 18, single buffered']
    #allocation25 [shape = 's32[1]{0}', space=sflag, size = 0x4, scoped, tag = 'scoped memory for tpu_custom_call.1']
    #allocation26 [shape = 'u8[8192]{0}', space=vmem, size = 0x2000, scoped, tag = 'output window, operand 0']
    %32 = vsyncpa [#allocation4], 0
    %s33 = scalar_lea.sflag [#allocation4], 1
    %34 = vsyncpa %s33, 0
    %35 = vsyncpa [#allocation7], 0
    %s36 = scalar_lea.sflag [#allocation7], 1
    %37 = vsyncpa %s36, 0
    %38 = vsyncpa [#allocation10], 0
    %39 = vsyncpa [#allocation13], 0
    %40 = vsyncpa [#allocation16], 0
    %41 = vsyncpa [#allocation19], 0
    %42 = vsyncpa [#allocation22], 0
    %43 = vsyncpa [#allocation25], 0
    %44 = vsyncpa [#allocation5], 0
    %s45 = scalar_lea.sflag [#allocation5], 1
    %46 = vsyncpa %s45, 0
    loop: start=0, step=1, limit=4
    $region2: #{tpu_custom_call.1} parent=1 // loop_pre_header
      _
    $region3: #{tpu_custom_call.1} parent=1 // loop_header
      %s48 = sphi 0, %s52
      %p49 = scmp.ge.s32.totalorder %s48, 4
      %s58 = sphi 0, %s60
      %s61 = sphi 0, %s58
      %s62 = sphi 0, %s61
      %s78 = sphi 0, %s62
      %s84 = sphi 0, %s86
      %s87 = sphi 0, %s84
      %s88 = sphi 0, %s87
      %s104 = sphi 0, %s88
      %s110 = sphi 0, %s112
      %s113 = sphi 0, %s110
      %s114 = sphi 0, %s113
      %s130 = sphi 0, %s114
      %s134 = sphi 0, %s134
      %s136 = sphi 0, %s134
      %s137 = sphi 0, %s136
      %s151 = sphi 0, %s137
      %s155 = sphi 0, %s155
      %s157 = sphi 0, %s155
      %s158 = sphi 0, %s157
      %s172 = sphi 0, %s158
      %s176 = sphi 0, %s176
      %s178 = sphi 0, %s176
      %s179 = sphi 0, %s178
      %s193 = sphi 0, %s179
      %s197 = sphi 0, %s197
      %s199 = sphi 0, %s197
      %s200 = sphi 0, %s199
      %s214 = sphi 0, %s200
      %s218 = sphi 0, %s218
      %s220 = sphi 0, %s218
      %s221 = sphi 0, %s220
      %s235 = sphi 0, %s221
      %s239 = sphi 0, %s239
      %s241 = sphi 0, %s239
      %s242 = sphi 0, %s241
      %s256 = sphi 0, %s242
      %s260 = sphi 0, %s260
      %s262 = sphi 0, %s260
      %s263 = sphi 0, %s262
      %s277 = sphi 0, %s263
      %s281 = sphi 0, %s281
      %s283 = sphi 0, %s281
      %s284 = sphi 0, %s283
      %s298 = sphi 0, %s284
      %s302 = sphi 0, %s302
      %s304 = sphi 0, %s302
      %s305 = sphi 0, %s304
      %s319 = sphi 0, %s305
      %s323 = sphi 0, %s323
      %s325 = sphi 0, %s323
      %s326 = sphi 0, %s325
      %s340 = sphi 0, %s326
      %s344 = sphi 0, %s344
      %s346 = sphi 0, %s344
      %s347 = sphi 0, %s346
      %s361 = sphi 0, %s347
      %s365 = sphi 0, %s365
      %s367 = sphi 0, %s365
      %s368 = sphi 0, %s367
      %s382 = sphi 0, %s368
      %s386 = sphi 0, %s386
      %s388 = sphi 0, %s386
      %s389 = sphi 0, %s388
      %s403 = sphi 0, %s389
      %s407 = sphi 0, %s407
      %s409 = sphi 0, %s407
      %s410 = sphi 0, %s409
      %s424 = sphi 0, %s410
      %s428 = sphi 0, %s428
      %s430 = sphi 0, %s428
      %s431 = sphi 0, %s430
      %s445 = sphi 0, %s431
      %s449 = sphi 0, %s449
      %s451 = sphi 0, %s449
      %s452 = sphi 0, %s451
      %s466 = sphi 0, %s452
      %s470 = sphi 0, %s470
      %s472 = sphi 0, %s470
      %s473 = sphi 0, %s472
      %s487 = sphi 0, %s473
      %s491 = sphi 0, %s491
      %s493 = sphi 0, %s491
      %s494 = sphi 0, %s493
      %s508 = sphi 0, %s494
      %s512 = sphi 0, %s512
      %s514 = sphi 0, %s512
      %s515 = sphi 0, %s514
      %s529 = sphi 0, %s515
      %s533 = sphi 0, %s533
      %s535 = sphi 0, %s533
      %s536 = sphi 0, %s535
      %s550 = sphi 0, %s536
      %s554 = sphi 0, %s554
      %s556 = sphi 0, %s554
      %s557 = sphi 0, %s556
      %s571 = sphi 0, %s557
      %s575 = sphi 0, %s575
      %s577 = sphi 0, %s575
      %s578 = sphi 0, %s577
      %s592 = sphi 0, %s578
      %s596 = sphi 0, %s596
      %s598 = sphi 0, %s596
      %s599 = sphi 0, %s598
      %s613 = sphi 0, %s599
      %s617 = sphi 0, %s617
      %s619 = sphi 0, %s617
      %s620 = sphi 0, %s619
      %s634 = sphi 0, %s620
      %s640 = sphi 0, %s642
      %s643 = sphi 0, %s640
      %s644 = sphi 0, %s643
      %s660 = sphi 0, %s644
    $region4: #{tpu_custom_call.1} parent=1 // loop_header_branch
      %51 = sbr.rel (%p49) target = $region8
    $region5: #{tpu_custom_call.1} parent=1 // loop_body
      %s53 = ssub.s32 %s48, 1
      %s54 = ssub.s32 %s48, 2
      %s55 = sadd.s32 %s48, 1
      %s56 = ssub.s32 %s48, %s55
      %p57 = scmp.eq.s32.totalorder %s56, 0
      %s59 = sadd.s32 %s58, 1
      %s60 = scalar_select %p57, %s58, %s59
      %p63 = pneg %p57
      %p64 = scmp.eq.s32.totalorder %s48, 1
      %p65 = por %p63, %p64
      %p66 = scmp.ne.s32.totalorder %s58, %s61
      %p67 = scmp.eq.s32.totalorder %s48, 0
      %p68 = por %p66, %p67
      %p69 = scmp.ne.s32.totalorder %s58, %s61
      %p70 = scmp.eq.s32.totalorder %s53, 1
      %p71 = por %p69, %p70
      %p72 = scmp.ne.s32.totalorder %s61, %s62
      %p73 = scmp.eq.s32.totalorder %s53, 0
      %p74 = por %p72, %p73
      %p75 = scmp.ne.s32.totalorder %s61, %s62
      %p76 = scmp.eq.s32.totalorder %s54, 1
      %p77 = por %p75, %p76
      %p79 = scmp.ne.s32.totalorder %s62, %s78
      %p80 = scmp.eq.s32.totalorder %s54, 0
      %p81 = por %p79, %p80
      %s82 = ssub.s32 %s48, %s55
      %p83 = scmp.eq.s32.totalorder %s82, 0
      %s85 = sadd.s32 %s84, 1
      %s86 = scalar_select %p83, %s84, %s85
      %p89 = pneg %p83
      %p90 = scmp.eq.s32.totalorder %s48, 1
      %p91 = por %p89, %p90
      %p92 = scmp.ne.s32.totalorder %s84, %s87
      %p93 = scmp.eq.s32.totalorder %s48, 0
      %p94 = por %p92, %p93
      %p95 = scmp.ne.s32.totalorder %s84, %s87
      %p96 = scmp.eq.s32.totalorder %s53, 1
      %p97 = por %p95, %p96
      %p98 = scmp.ne.s32.totalorder %s87, %s88
      %p99 = scmp.eq.s32.totalorder %s53, 0
      %p100 = por %p98, %p99
      %p101 = scmp.ne.s32.totalorder %s87, %s88
      %p102 = scmp.eq.s32.totalorder %s54, 1
      %p103 = por %p101, %p102
      %p105 = scmp.ne.s32.totalorder %s88, %s104
      %p106 = scmp.eq.s32.totalorder %s54, 0
      %p107 = por %p105, %p106
      %s108 = ssub.s32 %s48, %s55
      %p109 = scmp.eq.s32.totalorder %s108, 0
      %s111 = sadd.s32 %s110, 1
      %s112 = scalar_select %p109, %s110, %s111
      %p115 = pneg %p109
      %p116 = scmp.eq.s32.totalorder %s48, 1
      %p117 = por %p115, %p116
      %p118 = scmp.ne.s32.totalorder %s110, %s113
      %p119 = scmp.eq.s32.totalorder %s48, 0
      %p120 = por %p118, %p119
      %p121 = scmp.ne.s32.totalorder %s110, %s113
      %p122 = scmp.eq.s32.totalorder %s53, 1
      %p123 = por %p121, %p122
      %p124 = scmp.ne.s32.totalorder %s113, %s114
      %p125 = scmp.eq.s32.totalorder %s53, 0
      %p126 = por %p124, %p125
      %p127 = scmp.ne.s32.totalorder %s113, %s114
      %p128 = scmp.eq.s32.totalorder %s54, 1
      %p129 = por %p127, %p128
      %p131 = scmp.ne.s32.totalorder %s114, %s130
      %p132 = scmp.eq.s32.totalorder %s54, 0
      %p133 = por %p131, %p132
      %s135 = sadd.s32 %s134, 1
      %p138 = scmp.eq.s32.totalorder %s48, 1
      %p139 = scmp.ne.s32.totalorder %s134, %s136
      %p140 = scmp.eq.s32.totalorder %s48, 0
      %p141 = por %p139, %p140
      %p142 = scmp.ne.s32.totalorder %s134, %s136
      %p143 = scmp.eq.s32.totalorder %s53, 1
      %p144 = por %p142, %p143
      %p145 = scmp.ne.s32.totalorder %s136, %s137
      %p146 = scmp.eq.s32.totalorder %s53, 0
      %p147 = por %p145, %p146
      %p148 = scmp.ne.s32.totalorder %s136, %s137
      %p149 = scmp.eq.s32.totalorder %s54, 1
      %p150 = por %p148, %p149
      %p152 = scmp.ne.s32.totalorder %s137, %s151
      %p153 = scmp.eq.s32.totalorder %s54, 0
      %p154 = por %p152, %p153
      %s156 = sadd.s32 %s155, 1
      %p159 = scmp.eq.s32.totalorder %s48, 1
      %p160 = scmp.ne.s32.totalorder %s155, %s157
      %p161 = scmp.eq.s32.totalorder %s48, 0
      %p162 = por %p160, %p161
      %p163 = scmp.ne.s32.totalorder %s155, %s157
      %p164 = scmp.eq.s32.totalorder %s53, 1
      %p165 = por %p163, %p164
      %p166 = scmp.ne.s32.totalorder %s157, %s158
      %p167 = scmp.eq.s32.totalorder %s53, 0
      %p168 = por %p166, %p167
      %p169 = scmp.ne.s32.totalorder %s157, %s158
      %p170 = scmp.eq.s32.totalorder %s54, 1
      %p171 = por %p169, %p170
      %p173 = scmp.ne.s32.totalorder %s158, %s172
      %p174 = scmp.eq.s32.totalorder %s54, 0
      %p175 = por %p173, %p174
      %s177 = sadd.s32 %s176, 1
      %p180 = scmp.eq.s32.totalorder %s48, 1
      %p181 = scmp.ne.s32.totalorder %s176, %s178
      %p182 = scmp.eq.s32.totalorder %s48, 0
      %p183 = por %p181, %p182
      %p184 = scmp.ne.s32.totalorder %s176, %s178
      %p185 = scmp.eq.s32.totalorder %s53, 1
      %p186 = por %p184, %p185
      %p187 = scmp.ne.s32.totalorder %s178, %s179
      %p188 = scmp.eq.s32.totalorder %s53, 0
      %p189 = por %p187, %p188
      %p190 = scmp.ne.s32.totalorder %s178, %s179
      %p191 = scmp.eq.s32.totalorder %s54, 1
      %p192 = por %p190, %p191
      %p194 = scmp.ne.s32.totalorder %s179, %s193
      %p195 = scmp.eq.s32.totalorder %s54, 0
      %p196 = por %p194, %p195
      %s198 = sadd.s32 %s197, 1
      %p201 = scmp.eq.s32.totalorder %s48, 1
      %p202 = scmp.ne.s32.totalorder %s197, %s199
      %p203 = scmp.eq.s32.totalorder %s48, 0
      %p204 = por %p202, %p203
      %p205 = scmp.ne.s32.totalorder %s197, %s199
      %p206 = scmp.eq.s32.totalorder %s53, 1
      %p207 = por %p205, %p206
      %p208 = scmp.ne.s32.totalorder %s199, %s200
      %p209 = scmp.eq.s32.totalorder %s53, 0
      %p210 = por %p208, %p209
      %p211 = scmp.ne.s32.totalorder %s199, %s200
      %p212 = scmp.eq.s32.totalorder %s54, 1
      %p213 = por %p211, %p212
      %p215 = scmp.ne.s32.totalorder %s200, %s214
      %p216 = scmp.eq.s32.totalorder %s54, 0
      %p217 = por %p215, %p216
      %s219 = sadd.s32 %s218, 1
      %p222 = scmp.eq.s32.totalorder %s48, 1
      %p223 = scmp.ne.s32.totalorder %s218, %s220
      %p224 = scmp.eq.s32.totalorder %s48, 0
      %p225 = por %p223, %p224
      %p226 = scmp.ne.s32.totalorder %s218, %s220
      %p227 = scmp.eq.s32.totalorder %s53, 1
      %p228 = por %p226, %p227
      %p229 = scmp.ne.s32.totalorder %s220, %s221
      %p230 = scmp.eq.s32.totalorder %s53, 0
      %p231 = por %p229, %p230
      %p232 = scmp.ne.s32.totalorder %s220, %s221
      %p233 = scmp.eq.s32.totalorder %s54, 1
      %p234 = por %p232, %p233
      %p236 = scmp.ne.s32.totalorder %s221, %s235
      %p237 = scmp.eq.s32.totalorder %s54, 0
      %p238 = por %p236, %p237
      %s240 = sadd.s32 %s239, 1
      %p243 = scmp.eq.s32.totalorder %s48, 1
      %p244 = scmp.ne.s32.totalorder %s239, %s241
      %p245 = scmp.eq.s32.totalorder %s48, 0
      %p246 = por %p244, %p245
      %p247 = scmp.ne.s32.totalorder %s239, %s241
      %p248 = scmp.eq.s32.totalorder %s53, 1
      %p249 = por %p247, %p248
      %p250 = scmp.ne.s32.totalorder %s241, %s242
      %p251 = scmp.eq.s32.totalorder %s53, 0
      %p252 = por %p250, %p251
      %p253 = scmp.ne.s32.totalorder %s241, %s242
      %p254 = scmp.eq.s32.totalorder %s54, 1
      %p255 = por %p253, %p254
      %p257 = scmp.ne.s32.totalorder %s242, %s256
      %p258 = scmp.eq.s32.totalorder %s54, 0
      %p259 = por %p257, %p258
      %s261 = sadd.s32 %s260, 1
      %p264 = scmp.eq.s32.totalorder %s48, 1
      %p265 = scmp.ne.s32.totalorder %s260, %s262
      %p266 = scmp.eq.s32.totalorder %s48, 0
      %p267 = por %p265, %p266
      %p268 = scmp.ne.s32.totalorder %s260, %s262
      %p269 = scmp.eq.s32.totalorder %s53, 1
      %p270 = por %p268, %p269
      %p271 = scmp.ne.s32.totalorder %s262, %s263
      %p272 = scmp.eq.s32.totalorder %s53, 0
      %p273 = por %p271, %p272
      %p274 = scmp.ne.s32.totalorder %s262, %s263
      %p275 = scmp.eq.s32.totalorder %s54, 1
      %p276 = por %p274, %p275
      %p278 = scmp.ne.s32.totalorder %s263, %s277
      %p279 = scmp.eq.s32.totalorder %s54, 0
      %p280 = por %p278, %p279
      %s282 = sadd.s32 %s281, 1
      %p285 = scmp.eq.s32.totalorder %s48, 1
      %p286 = scmp.ne.s32.totalorder %s281, %s283
      %p287 = scmp.eq.s32.totalorder %s48, 0
      %p288 = por %p286, %p287
      %p289 = scmp.ne.s32.totalorder %s281, %s283
      %p290 = scmp.eq.s32.totalorder %s53, 1
      %p291 = por %p289, %p290
      %p292 = scmp.ne.s32.totalorder %s283, %s284
      %p293 = scmp.eq.s32.totalorder %s53, 0
      %p294 = por %p292, %p293
      %p295 = scmp.ne.s32.totalorder %s283, %s284
      %p296 = scmp.eq.s32.totalorder %s54, 1
      %p297 = por %p295, %p296
      %p299 = scmp.ne.s32.totalorder %s284, %s298
      %p300 = scmp.eq.s32.totalorder %s54, 0
      %p301 = por %p299, %p300
      %s303 = sadd.s32 %s302, 1
      %p306 = scmp.eq.s32.totalorder %s48, 1
      %p307 = scmp.ne.s32.totalorder %s302, %s304
      %p308 = scmp.eq.s32.totalorder %s48, 0
      %p309 = por %p307, %p308
      %p310 = scmp.ne.s32.totalorder %s302, %s304
      %p311 = scmp.eq.s32.totalorder %s53, 1
      %p312 = por %p310, %p311
      %p313 = scmp.ne.s32.totalorder %s304, %s305
      %p314 = scmp.eq.s32.totalorder %s53, 0
      %p315 = por %p313, %p314
      %p316 = scmp.ne.s32.totalorder %s304, %s305
      %p317 = scmp.eq.s32.totalorder %s54, 1
      %p318 = por %p316, %p317
      %p320 = scmp.ne.s32.totalorder %s305, %s319
      %p321 = scmp.eq.s32.totalorder %s54, 0
      %p322 = por %p320, %p321
      %s324 = sadd.s32 %s323, 1
      %p327 = scmp.eq.s32.totalorder %s48, 1
      %p328 = scmp.ne.s32.totalorder %s323, %s325
      %p329 = scmp.eq.s32.totalorder %s48, 0
      %p330 = por %p328, %p329
      %p331 = scmp.ne.s32.totalorder %s323, %s325
      %p332 = scmp.eq.s32.totalorder %s53, 1
      %p333 = por %p331, %p332
      %p334 = scmp.ne.s32.totalorder %s325, %s326
      %p335 = scmp.eq.s32.totalorder %s53, 0
      %p336 = por %p334, %p335
      %p337 = scmp.ne.s32.totalorder %s325, %s326
      %p338 = scmp.eq.s32.totalorder %s54, 1
      %p339 = por %p337, %p338
      %p341 = scmp.ne.s32.totalorder %s326, %s340
      %p342 = scmp.eq.s32.totalorder %s54, 0
      %p343 = por %p341, %p342
      %s345 = sadd.s32 %s344, 1
      %p348 = scmp.eq.s32.totalorder %s48, 1
      %p349 = scmp.ne.s32.totalorder %s344, %s346
      %p350 = scmp.eq.s32.totalorder %s48, 0
      %p351 = por %p349, %p350
      %p352 = scmp.ne.s32.totalorder %s344, %s346
      %p353 = scmp.eq.s32.totalorder %s53, 1
      %p354 = por %p352, %p353
      %p355 = scmp.ne.s32.totalorder %s346, %s347
      %p356 = scmp.eq.s32.totalorder %s53, 0
      %p357 = por %p355, %p356
      %p358 = scmp.ne.s32.totalorder %s346, %s347
      %p359 = scmp.eq.s32.totalorder %s54, 1
      %p360 = por %p358, %p359
      %p362 = scmp.ne.s32.totalorder %s347, %s361
      %p363 = scmp.eq.s32.totalorder %s54, 0
      %p364 = por %p362, %p363
      %s366 = sadd.s32 %s365, 1
      %p369 = scmp.eq.s32.totalorder %s48, 1
      %p370 = scmp.ne.s32.totalorder %s365, %s367
      %p371 = scmp.eq.s32.totalorder %s48, 0
      %p372 = por %p370, %p371
      %p373 = scmp.ne.s32.totalorder %s365, %s367
      %p374 = scmp.eq.s32.totalorder %s53, 1
      %p375 = por %p373, %p374
      %p376 = scmp.ne.s32.totalorder %s367, %s368
      %p377 = scmp.eq.s32.totalorder %s53, 0
      %p378 = por %p376, %p377
      %p379 = scmp.ne.s32.totalorder %s367, %s368
      %p380 = scmp.eq.s32.totalorder %s54, 1
      %p381 = por %p379, %p380
      %p383 = scmp.ne.s32.totalorder %s368, %s382
      %p384 = scmp.eq.s32.totalorder %s54, 0
      %p385 = por %p383, %p384
      %s387 = sadd.s32 %s386, 1
      %p390 = scmp.eq.s32.totalorder %s48, 1
      %p391 = scmp.ne.s32.totalorder %s386, %s388
      %p392 = scmp.eq.s32.totalorder %s48, 0
      %p393 = por %p391, %p392
      %p394 = scmp.ne.s32.totalorder %s386, %s388
      %p395 = scmp.eq.s32.totalorder %s53, 1
      %p396 = por %p394, %p395
      %p397 = scmp.ne.s32.totalorder %s388, %s389
      %p398 = scmp.eq.s32.totalorder %s53, 0
      %p399 = por %p397, %p398
      %p400 = scmp.ne.s32.totalorder %s388, %s389
      %p401 = scmp.eq.s32.totalorder %s54, 1
      %p402 = por %p400, %p401
      %p404 = scmp.ne.s32.totalorder %s389, %s403
      %p405 = scmp.eq.s32.totalorder %s54, 0
      %p406 = por %p404, %p405
      %s408 = sadd.s32 %s407, 1
      %p411 = scmp.eq.s32.totalorder %s48, 1
      %p412 = scmp.ne.s32.totalorder %s407, %s409
      %p413 = scmp.eq.s32.totalorder %s48, 0
      %p414 = por %p412, %p413
      %p415 = scmp.ne.s32.totalorder %s407, %s409
      %p416 = scmp.eq.s32.totalorder %s53, 1
      %p417 = por %p415, %p416
      %p418 = scmp.ne.s32.totalorder %s409, %s410
      %p419 = scmp.eq.s32.totalorder %s53, 0
      %p420 = por %p418, %p419
      %p421 = scmp.ne.s32.totalorder %s409, %s410
      %p422 = scmp.eq.s32.totalorder %s54, 1
      %p423 = por %p421, %p422
      %p425 = scmp.ne.s32.totalorder %s410, %s424
      %p426 = scmp.eq.s32.totalorder %s54, 0
      %p427 = por %p425, %p426
      %s429 = sadd.s32 %s428, 1
      %p432 = scmp.eq.s32.totalorder %s48, 1
      %p433 = scmp.ne.s32.totalorder %s428, %s430
      %p434 = scmp.eq.s32.totalorder %s48, 0
      %p435 = por %p433, %p434
      %p436 = scmp.ne.s32.totalorder %s428, %s430
      %p437 = scmp.eq.s32.totalorder %s53, 1
      %p438 = por %p436, %p437
      %p439 = scmp.ne.s32.totalorder %s430, %s431
      %p440 = scmp.eq.s32.totalorder %s53, 0
      %p441 = por %p439, %p440
      %p442 = scmp.ne.s32.totalorder %s430, %s431
      %p443 = scmp.eq.s32.totalorder %s54, 1
      %p444 = por %p442, %p443
      %p446 = scmp.ne.s32.totalorder %s431, %s445
      %p447 = scmp.eq.s32.totalorder %s54, 0
      %p448 = por %p446, %p447
      %s450 = sadd.s32 %s449, 1
      %p453 = scmp.eq.s32.totalorder %s48, 1
      %p454 = scmp.ne.s32.totalorder %s449, %s451
      %p455 = scmp.eq.s32.totalorder %s48, 0
      %p456 = por %p454, %p455
      %p457 = scmp.ne.s32.totalorder %s449, %s451
      %p458 = scmp.eq.s32.totalorder %s53, 1
      %p459 = por %p457, %p458
      %p460 = scmp.ne.s32.totalorder %s451, %s452
      %p461 = scmp.eq.s32.totalorder %s53, 0
      %p462 = por %p460, %p461
      %p463 = scmp.ne.s32.totalorder %s451, %s452
      %p464 = scmp.eq.s32.totalorder %s54, 1
      %p465 = por %p463, %p464
      %p467 = scmp.ne.s32.totalorder %s452, %s466
      %p468 = scmp.eq.s32.totalorder %s54, 0
      %p469 = por %p467, %p468
      %s471 = sadd.s32 %s470, 1
      %p474 = scmp.eq.s32.totalorder %s48, 1
      %p475 = scmp.ne.s32.totalorder %s470, %s472
      %p476 = scmp.eq.s32.totalorder %s48, 0
      %p477 = por %p475, %p476
      %p478 = scmp.ne.s32.totalorder %s470, %s472
      %p479 = scmp.eq.s32.totalorder %s53, 1
      %p480 = por %p478, %p479
      %p481 = scmp.ne.s32.totalorder %s472, %s473
      %p482 = scmp.eq.s32.totalorder %s53, 0
      %p483 = por %p481, %p482
      %p484 = scmp.ne.s32.totalorder %s472, %s473
      %p485 = scmp.eq.s32.totalorder %s54, 1
      %p486 = por %p484, %p485
      %p488 = scmp.ne.s32.totalorder %s473, %s487
      %p489 = scmp.eq.s32.totalorder %s54, 0
      %p490 = por %p488, %p489
      %s492 = sadd.s32 %s491, 1
      %p495 = scmp.eq.s32.totalorder %s48, 1
      %p496 = scmp.ne.s32.totalorder %s491, %s493
      %p497 = scmp.eq.s32.totalorder %s48, 0
      %p498 = por %p496, %p497
      %p499 = scmp.ne.s32.totalorder %s491, %s493
      %p500 = scmp.eq.s32.totalorder %s53, 1
      %p501 = por %p499, %p500
      %p502 = scmp.ne.s32.totalorder %s493, %s494
      %p503 = scmp.eq.s32.totalorder %s53, 0
      %p504 = por %p502, %p503
      %p505 = scmp.ne.s32.totalorder %s493, %s494
      %p506 = scmp.eq.s32.totalorder %s54, 1
      %p507 = por %p505, %p506
      %p509 = scmp.ne.s32.totalorder %s494, %s508
      %p510 = scmp.eq.s32.totalorder %s54, 0
      %p511 = por %p509, %p510
      %s513 = sadd.s32 %s512, 1
      %p516 = scmp.eq.s32.totalorder %s48, 1
      %p517 = scmp.ne.s32.totalorder %s512, %s514
      %p518 = scmp.eq.s32.totalorder %s48, 0
      %p519 = por %p517, %p518
      %p520 = scmp.ne.s32.totalorder %s512, %s514
      %p521 = scmp.eq.s32.totalorder %s53, 1
      %p522 = por %p520, %p521
      %p523 = scmp.ne.s32.totalorder %s514, %s515
      %p524 = scmp.eq.s32.totalorder %s53, 0
      %p525 = por %p523, %p524
      %p526 = scmp.ne.s32.totalorder %s514, %s515
      %p527 = scmp.eq.s32.totalorder %s54, 1
      %p528 = por %p526, %p527
      %p530 = scmp.ne.s32.totalorder %s515, %s529
      %p531 = scmp.eq.s32.totalorder %s54, 0
      %p532 = por %p530, %p531
      %s534 = sadd.s32 %s533, 1
      %p537 = scmp.eq.s32.totalorder %s48, 1
      %p538 = scmp.ne.s32.totalorder %s533, %s535
      %p539 = scmp.eq.s32.totalorder %s48, 0
      %p540 = por %p538, %p539
      %p541 = scmp.ne.s32.totalorder %s533, %s535
      %p542 = scmp.eq.s32.totalorder %s53, 1
      %p543 = por %p541, %p542
      %p544 = scmp.ne.s32.totalorder %s535, %s536
      %p545 = scmp.eq.s32.totalorder %s53, 0
      %p546 = por %p544, %p545
      %p547 = scmp.ne.s32.totalorder %s535, %s536
      %p548 = scmp.eq.s32.totalorder %s54, 1
      %p549 = por %p547, %p548
      %p551 = scmp.ne.s32.totalorder %s536, %s550
      %p552 = scmp.eq.s32.totalorder %s54, 0
      %p553 = por %p551, %p552
      %s555 = sadd.s32 %s554, 1
      %p558 = scmp.eq.s32.totalorder %s48, 1
      %p559 = scmp.ne.s32.totalorder %s554, %s556
      %p560 = scmp.eq.s32.totalorder %s48, 0
      %p561 = por %p559, %p560
      %p562 = scmp.ne.s32.totalorder %s554, %s556
      %p563 = scmp.eq.s32.totalorder %s53, 1
      %p564 = por %p562, %p563
      %p565 = scmp.ne.s32.totalorder %s556, %s557
      %p566 = scmp.eq.s32.totalorder %s53, 0
      %p567 = por %p565, %p566
      %p568 = scmp.ne.s32.totalorder %s556, %s557
      %p569 = scmp.eq.s32.totalorder %s54, 1
      %p570 = por %p568, %p569
      %p572 = scmp.ne.s32.totalorder %s557, %s571
      %p573 = scmp.eq.s32.totalorder %s54, 0
      %p574 = por %p572, %p573
      %s576 = sadd.s32 %s575, 1
      %p579 = scmp.eq.s32.totalorder %s48, 1
      %p580 = scmp.ne.s32.totalorder %s575, %s577
      %p581 = scmp.eq.s32.totalorder %s48, 0
      %p582 = por %p580, %p581
      %p583 = scmp.ne.s32.totalorder %s575, %s577
      %p584 = scmp.eq.s32.totalorder %s53, 1
      %p585 = por %p583, %p584
      %p586 = scmp.ne.s32.totalorder %s577, %s578
      %p587 = scmp.eq.s32.totalorder %s53, 0
      %p588 = por %p586, %p587
      %p589 = scmp.ne.s32.totalorder %s577, %s578
      %p590 = scmp.eq.s32.totalorder %s54, 1
      %p591 = por %p589, %p590
      %p593 = scmp.ne.s32.totalorder %s578, %s592
      %p594 = scmp.eq.s32.totalorder %s54, 0
      %p595 = por %p593, %p594
      %s597 = sadd.s32 %s596, 1
      %p600 = scmp.eq.s32.totalorder %s48, 1
      %p601 = scmp.ne.s32.totalorder %s596, %s598
      %p602 = scmp.eq.s32.totalorder %s48, 0
      %p603 = por %p601, %p602
      %p604 = scmp.ne.s32.totalorder %s596, %s598
      %p605 = scmp.eq.s32.totalorder %s53, 1
      %p606 = por %p604, %p605
      %p607 = scmp.ne.s32.totalorder %s598, %s599
      %p608 = scmp.eq.s32.totalorder %s53, 0
      %p609 = por %p607, %p608
      %p610 = scmp.ne.s32.totalorder %s598, %s599
      %p611 = scmp.eq.s32.totalorder %s54, 1
      %p612 = por %p610, %p611
      %p614 = scmp.ne.s32.totalorder %s599, %s613
      %p615 = scmp.eq.s32.totalorder %s54, 0
      %p616 = por %p614, %p615
      %s618 = sadd.s32 %s617, 1
      %p621 = scmp.eq.s32.totalorder %s48, 1
      %p622 = scmp.ne.s32.totalorder %s617, %s619
      %p623 = scmp.eq.s32.totalorder %s48, 0
      %p624 = por %p622, %p623
      %p625 = scmp.ne.s32.totalorder %s617, %s619
      %p626 = scmp.eq.s32.totalorder %s53, 1
      %p627 = por %p625, %p626
      %p628 = scmp.ne.s32.totalorder %s619, %s620
      %p629 = scmp.eq.s32.totalorder %s53, 0
      %p630 = por %p628, %p629
      %p631 = scmp.ne.s32.totalorder %s619, %s620
      %p632 = scmp.eq.s32.totalorder %s54, 1
      %p633 = por %p631, %p632
      %p635 = scmp.ne.s32.totalorder %s620, %s634
      %p636 = scmp.eq.s32.totalorder %s54, 0
      %p637 = por %p635, %p636
      %s638 = ssub.s32 %s48, %s55
      %p639 = scmp.eq.s32.totalorder %s638, 0
      %s641 = sadd.s32 %s640, 1
      %s642 = scalar_select %p639, %s640, %s641
      %p645 = pneg %p639
      %p646 = scmp.eq.s32.totalorder %s48, 1
      %p647 = por %p645, %p646
      %p648 = scmp.ne.s32.totalorder %s640, %s643
      %p649 = scmp.eq.s32.totalorder %s48, 0
      %p650 = por %p648, %p649
      %p651 = scmp.ne.s32.totalorder %s640, %s643
      %p652 = scmp.eq.s32.totalorder %s53, 1
      %p653 = por %p651, %p652
      %p654 = scmp.ne.s32.totalorder %s643, %s644
      %p655 = scmp.eq.s32.totalorder %s53, 0
      %p656 = por %p654, %p655
      %p657 = scmp.ne.s32.totalorder %s643, %s644
      %p658 = scmp.eq.s32.totalorder %s54, 1
      %p659 = por %p657, %p658
      %p661 = scmp.ne.s32.totalorder %s644, %s660
      %p662 = scmp.eq.s32.totalorder %s54, 0
      %p663 = por %p661, %p662
      %p664 = scmp.le.s32.totalorder 1, %s48
      %p665 = scmp.lt.s32.totalorder %s48, 3
      %p666 = pnand %p664, %p665
      %p667 = pneg %p666
      // Predicated region
      $region9: #{tpu_custom_call.1} parent=5 // pred_check
        _
      $region10: #{tpu_custom_call.1} parent=5 // pred_check_branch
        %669 = sbr.rel (%p666) target = $region12
      $region11: #{tpu_custom_call.1} parent=5 // pred_region
        %s670 = ssub.s32 %s48, 1
        // Predicated region
        $region13: #{tpu_custom_call.1} parent=11 // pred_check
          %p671 = pneg %p147
        $region14: #{tpu_custom_call.1} parent=11 // pred_check_branch
          %673 = sbr.rel (%p671) target = $region16
        $region15: #{tpu_custom_call.1} parent=11 // pred_region
          %s675 = ssub.s32 16, 16
          %676 = vsyncadd [#allocation10], %s675
          %s678 = sshll.u32 [#allocation9], 4
          %s679 = int_to_ptr.vmem [resolvable:$true] %s678
          %681 = dma.hbm_to_vmem [thread:$0]  %s3, 16, %s679, [#allocation10]
        $region16: #{tpu_custom_call.1} parent=11 // pred_fallthru
          _
        // Predicated region
        $region17: #{tpu_custom_call.1} parent=11 // pred_check
          %p682 = pneg %p168
        $region18: #{tpu_custom_call.1} parent=11 // pred_check_branch
          %684 = sbr.rel (%p682) target = $region20
        $region19: #{tpu_custom_call.1} parent=11 // pred_region
          %s686 = ssub.s32 16, 16
          %687 = vsyncadd [#allocation10], %s686
          %s689 = sshll.u32 [#allocation11], 4
          %s690 = int_to_ptr.vmem [resolvable:$true] %s689
          %692 = dma.hbm_to_vmem [thread:$0]  %s4, 16, %s690, [#allocation10]
        $region20: #{tpu_custom_call.1} parent=11 // pred_fallthru
          _
        // Predicated region
        $region21: #{tpu_custom_call.1} parent=11 // pred_check
          %p693 = pneg %p189
        $region22: #{tpu_custom_call.1} parent=11 // pred_check_branch
          %695 = sbr.rel (%p693) target = $region24
        $region23: #{tpu_custom_call.1} parent=11 // pred_region
          _
        $region24: #{tpu_custom_call.1} parent=11 // pred_fallthru
          _
        // Predicated region
        $region25: #{tpu_custom_call.1} parent=11 // pred_check
          %p696 = pneg %p210
        $region26: #{tpu_custom_call.1} parent=11 // pred_check_branch
          %698 = sbr.rel (%p696) target = $region28
        $region27: #{tpu_custom_call.1} parent=11 // pred_region
          %s700 = ssub.s32 16, 16
          %701 = vsyncadd [#allocation13], %s700
          %s703 = sshll.u32 [#allocation12], 4
          %s704 = int_to_ptr.vmem [resolvable:$true] %s703
          %706 = dma.hbm_to_vmem [thread:$0]  %s6, 16, %s704, [#allocation13]
        $region28: #{tpu_custom_call.1} parent=11 // pred_fallthru
          _
        // Predicated region
        $region29: #{tpu_custom_call.1} parent=11 // pred_check
          %p707 = pneg %p231
        $region30: #{tpu_custom_call.1} parent=11 // pred_check_branch
          %709 = sbr.rel (%p707) target = $region32
        $region31: #{tpu_custom_call.1} parent=11 // pred_region
          _
        $region32: #{tpu_custom_call.1} parent=11 // pred_fallthru
          _
        // Predicated region
        $region33: #{tpu_custom_call.1} parent=11 // pred_check
          %p710 = pneg %p252
        $region34: #{tpu_custom_call.1} parent=11 // pred_check_branch
          %712 = sbr.rel (%p710) target = $region36
        $region35: #{tpu_custom_call.1} parent=11 // pred_region
          %s714 = ssub.s32 16, 16
          %715 = vsyncadd [#allocation13], %s714
          %s717 = sshll.u32 [#allocation14], 4
          %s718 = int_to_ptr.vmem [resolvable:$true] %s717
          %720 = dma.hbm_to_vmem [thread:$0]  %s8, 16, %s718, [#allocation13]
        $region36: #{tpu_custom_call.1} parent=11 // pred_fallthru
          _
        // Predicated region
        $region37: #{tpu_custom_call.1} parent=11 // pred_check
          %p721 = pneg %p273
        $region38: #{tpu_custom_call.1} parent=11 // pred_check_branch
          %723 = sbr.rel (%p721) target = $region40
        $region39: #{tpu_custom_call.1} parent=11 // pred_region
          %s725 = ssub.s32 16, 16
          %726 = vsyncadd [#allocation16], %s725
          %s728 = sshll.u32 [#allocation15], 4
          %s729 = int_to_ptr.vmem [resolvable:$true] %s728
          %731 = dma.hbm_to_vmem [thread:$0]  %s9, 16, %s729, [#allocation16]
        $region40: #{tpu_custom_call.1} parent=11 // pred_fallthru
          _
        // Predicated region
        $region41: #{tpu_custom_call.1} parent=11 // pred_check
          %p732 = pneg %p294
        $region42: #{tpu_custom_call.1} parent=11 // pred_check_branch
          %734 = sbr.rel (%p732) target = $region44
        $region43: #{tpu_custom_call.1} parent=11 // pred_region
          %s736 = ssub.s32 16, 16
          %737 = vsyncadd [#allocation16], %s736
          %s739 = sshll.u32 [#allocation17], 4
          %s740 = int_to_ptr.vmem [resolvable:$true] %s739
          %742 = dma.hbm_to_vmem [thread:$0]  %s10, 16, %s740, [#allocation16]
        $region44: #{tpu_custom_call.1} parent=11 // pred_fallthru
          _
        // Predicated region
        $region45: #{tpu_custom_call.1} parent=11 // pred_check
          %p743 = pneg %p315
        $region46: #{tpu_custom_call.1} parent=11 // pred_check_branch
          %745 = sbr.rel (%p743) target = $region48
        $region47: #{tpu_custom_call.1} parent=11 // pred_region
          _
        $region48: #{tpu_custom_call.1} parent=11 // pred_fallthru
          _
        // Predicated region
        $region49: #{tpu_custom_call.1} parent=11 // pred_check
          %p746 = pneg %p336
        $region50: #{tpu_custom_call.1} parent=11 // pred_check_branch
          %748 = sbr.rel (%p746) target = $region52
        $region51: #{tpu_custom_call.1} parent=11 // pred_region
          %s750 = ssub.s32 16, 16
          %751 = vsyncadd [#allocation19], %s750
          %s753 = sshll.u32 [#allocation18], 4
          %s754 = int_to_ptr.vmem [resolvable:$true] %s753
          %756 = dma.hbm_to_vmem [thread:$0]  %s12, 16, %s754, [#allocation19]
        $region52: #{tpu_custom_call.1} parent=11 // pred_fallthru
          _
        // Predicated region
        $region53: #{tpu_custom_call.1} parent=11 // pred_check
          %p757 = pneg %p357
        $region54: #{tpu_custom_call.1} parent=11 // pred_check_branch
          %759 = sbr.rel (%p757) target = $region56
        $region55: #{tpu_custom_call.1} parent=11 // pred_region
          _
        $region56: #{tpu_custom_call.1} parent=11 // pred_fallthru
          _
        // Predicated region
        $region57: #{tpu_custom_call.1} parent=11 // pred_check
          %p760 = pneg %p378
        $region58: #{tpu_custom_call.1} parent=11 // pred_check_branch
          %762 = sbr.rel (%p760) target = $region60
        $region59: #{tpu_custom_call.1} parent=11 // pred_region
          %s764 = ssub.s32 16, 16
          %765 = vsyncadd [#allocation19], %s764
          %s767 = sshll.u32 [#allocation20], 4
          %s768 = int_to_ptr.vmem [resolvable:$true] %s767
          %770 = dma.hbm_to_vmem [thread:$0]  %s14, 16, %s768, [#allocation19]
        $region60: #{tpu_custom_call.1} parent=11 // pred_fallthru
          _
        // Predicated region
        $region61: #{tpu_custom_call.1} parent=11 // pred_check
          %p771 = pneg %p399
        $region62: #{tpu_custom_call.1} parent=11 // pred_check_branch
          %773 = sbr.rel (%p771) target = $region64
        $region63: #{tpu_custom_call.1} parent=11 // pred_region
          %s775 = ssub.s32 16, 16
          %776 = vsyncadd [#allocation22], %s775
          %s778 = sshll.u32 [#allocation21], 4
          %s779 = int_to_ptr.vmem [resolvable:$true] %s778
          %781 = dma.hbm_to_vmem [thread:$0]  %s15, 16, %s779, [#allocation22]
        $region64: #{tpu_custom_call.1} parent=11 // pred_fallthru
          _
        // Predicated region
        $region65: #{tpu_custom_call.1} parent=11 // pred_check
          %p782 = pneg %p420
        $region66: #{tpu_custom_call.1} parent=11 // pred_check_branch
          %784 = sbr.rel (%p782) target = $region68
        $region67: #{tpu_custom_call.1} parent=11 // pred_region
          %s786 = ssub.s32 16, 16
          %787 = vsyncadd [#allocation22], %s786
          %s789 = sshll.u32 [#allocation23], 4
          %s790 = int_to_ptr.vmem [resolvable:$true] %s789
          %792 = dma.hbm_to_vmem [thread:$0]  %s16, 16, %s790, [#allocation22]
        $region68: #{tpu_custom_call.1} parent=11 // pred_fallthru
          _
        // Predicated region
        $region69: #{tpu_custom_call.1} parent=11 // pred_check
          %p793 = pneg %p441
        $region70: #{tpu_custom_call.1} parent=11 // pred_check_branch
          %795 = sbr.rel (%p793) target = $region72
        $region71: #{tpu_custom_call.1} parent=11 // pred_region
          _
        $region72: #{tpu_custom_call.1} parent=11 // pred_fallthru
          _
        // Predicated region
        $region73: #{tpu_custom_call.1} parent=11 // pred_check
          %p796 = pneg %p462
        $region74: #{tpu_custom_call.1} parent=11 // pred_check_branch
          %798 = sbr.rel (%p796) target = $region76
        $region75: #{tpu_custom_call.1} parent=11 // pred_region
          %s800 = ssub.s32 16, 16
          %801 = vsyncadd [#allocation25], %s800
          %s803 = sshll.u32 [#allocation24], 4
          %s804 = int_to_ptr.vmem [resolvable:$true] %s803
          %806 = dma.hbm_to_vmem [thread:$0]  %s18, 16, %s804, [#allocation25]
        $region76: #{tpu_custom_call.1} parent=11 // pred_fallthru
          _
        // Predicated region
        $region77: #{tpu_custom_call.1} parent=11 // pred_check
          %p807 = pneg %p483
        $region78: #{tpu_custom_call.1} parent=11 // pred_check_branch
          %809 = sbr.rel (%p807) target = $region80
        $region79: #{tpu_custom_call.1} parent=11 // pred_region
          _
        $region80: #{tpu_custom_call.1} parent=11 // pred_fallthru
          _
        // Predicated region
        $region81: #{tpu_custom_call.1} parent=11 // pred_check
          %p810 = pneg %p504
        $region82: #{tpu_custom_call.1} parent=11 // pred_check_branch
          %812 = sbr.rel (%p810) target = $region84
        $region83: #{tpu_custom_call.1} parent=11 // pred_region
          _
        $region84: #{tpu_custom_call.1} parent=11 // pred_fallthru
          _
        // Predicated region
        $region85: #{tpu_custom_call.1} parent=11 // pred_check
          %p813 = pneg %p525
        $region86: #{tpu_custom_call.1} parent=11 // pred_check_branch
          %815 = sbr.rel (%p813) target = $region88
        $region87: #{tpu_custom_call.1} parent=11 // pred_region
          _
        $region88: #{tpu_custom_call.1} parent=11 // pred_fallthru
          _
        // Predicated region
        $region89: #{tpu_custom_call.1} parent=11 // pred_check
          %p816 = pneg %p546
        $region90: #{tpu_custom_call.1} parent=11 // pred_check_branch
          %818 = sbr.rel (%p816) target = $region92
        $region91: #{tpu_custom_call.1} parent=11 // pred_region
          _
        $region92: #{tpu_custom_call.1} parent=11 // pred_fallthru
          _
        // Predicated region
        $region93: #{tpu_custom_call.1} parent=11 // pred_check
          %p819 = pneg %p567
        $region94: #{tpu_custom_call.1} parent=11 // pred_check_branch
          %821 = sbr.rel (%p819) target = $region96
        $region95: #{tpu_custom_call.1} parent=11 // pred_region
          _
        $region96: #{tpu_custom_call.1} parent=11 // pred_fallthru
          _
        // Predicated region
        $region97: #{tpu_custom_call.1} parent=11 // pred_check
          %p822 = pneg %p588
        $region98: #{tpu_custom_call.1} parent=11 // pred_check_branch
          %824 = sbr.rel (%p822) target = $region100
        $region99: #{tpu_custom_call.1} parent=11 // pred_region
          _
        $region100: #{tpu_custom_call.1} parent=11 // pred_fallthru
          _
        // Predicated region
        $region101: #{tpu_custom_call.1} parent=11 // pred_check
          %p825 = pneg %p609
        $region102: #{tpu_custom_call.1} parent=11 // pred_check_branch
          %827 = sbr.rel (%p825) target = $region104
        $region103: #{tpu_custom_call.1} parent=11 // pred_region
          _
        $region104: #{tpu_custom_call.1} parent=11 // pred_fallthru
          _
        // Predicated region
        $region105: #{tpu_custom_call.1} parent=11 // pred_check
          %p828 = pneg %p630
        $region106: #{tpu_custom_call.1} parent=11 // pred_check_branch
          %830 = sbr.rel (%p828) target = $region108
        $region107: #{tpu_custom_call.1} parent=11 // pred_region
          _
        $region108: #{tpu_custom_call.1} parent=11 // pred_fallthru
          _
      $region12: #{tpu_custom_call.1} parent=5 // pred_fallthru
        _
      %p831 = scmp.lt.s32.totalorder %s48, 2
      // Predicated region
      $region109: #{tpu_custom_call.1} parent=5 // pred_check
        %p832 = pneg %p831
      $region110: #{tpu_custom_call.1} parent=5 // pred_check_branch
        %834 = sbr.rel (%p832) target = $region112
      $region111: #{tpu_custom_call.1} parent=5 // pred_region
        // Predicated region
        $region113: #{tpu_custom_call.1} parent=111 // pred_check
          %p835 = pneg %p68
        $region114: #{tpu_custom_call.1} parent=111 // pred_check_branch
          %837 = sbr.rel (%p835) target = $region116
        $region115: #{tpu_custom_call.1} parent=111 // pred_region
          %s838 = sand.u32 %s58, 1
          %s839 = scalar_lea.sflag [#allocation4], %s838
          %s840 = sand.u32 %s58, 1
          %s841 = smul.addr %s840, 8
          %s842 = scalar_lea.vmem [#allocation3], %s841
          %s844 = ssub.s32 128, 128
          %845 = vsyncadd %s839, %s844
          %s846 = smul.addr %s48, 128
          %s847 = scalar_lea.hbm %s0, %s846
          %s849 = sshll.u32 %s842, 4
          %s850 = int_to_ptr.vmem [resolvable:$true] %s849
          %852 = dma.hbm_to_vmem [thread:$0]  %s847, 128, %s850, %s839
        $region116: #{tpu_custom_call.1} parent=111 // pred_fallthru
          _
        // Predicated region
        $region117: #{tpu_custom_call.1} parent=111 // pred_check
          %p853 = pneg %p94
        $region118: #{tpu_custom_call.1} parent=111 // pred_check_branch
          %855 = sbr.rel (%p853) target = $region120
        $region119: #{tpu_custom_call.1} parent=111 // pred_region
          %s856 = sand.u32 %s48, 1
          %s857 = scalar_lea.sflag [#allocation7], %s856
          %s858 = sand.u32 %s84, 1
          %s859 = scalar_lea.vmem [#allocation6], %s858
          %s861 = ssub.s32 16, 16
          %862 = vsyncadd %s857, %s861
          %s863 = smul.addr %s48, 16
          %s864 = scalar_lea.hbm %s1, %s863
          %s866 = sshll.u32 %s859, 4
          %s867 = int_to_ptr.vmem [resolvable:$true] %s866
          %869 = dma.hbm_to_vmem [thread:$0]  %s864, 16, %s867, %s857
        $region120: #{tpu_custom_call.1} parent=111 // pred_fallthru
          _
        // Predicated region
        $region121: #{tpu_custom_call.1} parent=111 // pred_check
          %p870 = pneg %p120
        $region122: #{tpu_custom_call.1} parent=111 // pred_check_branch
          %872 = sbr.rel (%p870) target = $region124
        $region123: #{tpu_custom_call.1} parent=111 // pred_region
          %s873 = sand.u32 %s48, 1
          %s874 = scalar_lea.sflag [#allocation7], %s873
          %s875 = sand.u32 %s110, 1
          %s876 = scalar_lea.vmem [#allocation8], %s875
          %s878 = ssub.s32 16, 16
          %879 = vsyncadd %s874, %s878
          %s880 = smul.addr %s48, 16
          %s881 = scalar_lea.hbm %s2, %s880
          %s883 = sshll.u32 %s876, 4
          %s884 = int_to_ptr.vmem [resolvable:$true] %s883
          %886 = dma.hbm_to_vmem [thread:$0]  %s881, 16, %s884, %s874
        $region124: #{tpu_custom_call.1} parent=111 // pred_fallthru
          _
      $region112: #{tpu_custom_call.1} parent=5 // pred_fallthru
        _
      %p887 = scmp.le.s32.totalorder 1, %s48
      %p888 = scmp.lt.s32.totalorder %s48, 3
      %p889 = pnand %p887, %p888
      %p890 = pneg %p889
      // Predicated region
      $region125: #{tpu_custom_call.1} parent=5 // pred_check
        _
      $region126: #{tpu_custom_call.1} parent=5 // pred_check_branch
        %892 = sbr.rel (%p889) target = $region128
      $region127: #{tpu_custom_call.1} parent=5 // pred_region
        %s893 = ssub.s32 %s48, 1
        %s894 = sand.u32 %s61, 1
        %s895 = scalar_lea.sflag [#allocation4], %s894
        %s896 = sand.u32 %s61, 1
        %s897 = smul.addr %s896, 8
        %s898 = scalar_lea.vmem [#allocation3], %s897
        // Predicated region
        $region129: #{tpu_custom_call.1} parent=127 // pred_check
          %p899 = pneg %p74
        $region130: #{tpu_custom_call.1} parent=127 // pred_check_branch
          %901 = sbr.rel (%p899) target = $region132
        $region131: #{tpu_custom_call.1} parent=127 // pred_region
          %902 = dma.done %s895, 128
        $region132: #{tpu_custom_call.1} parent=127 // pred_fallthru
          _
        %s903 = sand.u32 %s53, 1
        %s904 = scalar_lea.sflag [#allocation7], %s903
        %s905 = sand.u32 %s87, 1
        %s906 = scalar_lea.vmem [#allocation6], %s905
        // Predicated region
        $region133: #{tpu_custom_call.1} parent=127 // pred_check
          %p907 = pneg %p100
        $region134: #{tpu_custom_call.1} parent=127 // pred_check_branch
          %909 = sbr.rel (%p907) target = $region136
        $region135: #{tpu_custom_call.1} parent=127 // pred_region
          %910 = dma.done %s904, 16
        $region136: #{tpu_custom_call.1} parent=127 // pred_fallthru
          _
        %s911 = sand.u32 %s53, 1
        %s912 = scalar_lea.sflag [#allocation7], %s911
        %s913 = sand.u32 %s113, 1
        %s914 = scalar_lea.vmem [#allocation8], %s913
        // Predicated region
        $region137: #{tpu_custom_call.1} parent=127 // pred_check
          %p915 = pneg %p126
        $region138: #{tpu_custom_call.1} parent=127 // pred_check_branch
          %917 = sbr.rel (%p915) target = $region140
        $region139: #{tpu_custom_call.1} parent=127 // pred_region
          %918 = dma.done %s912, 16
        $region140: #{tpu_custom_call.1} parent=127 // pred_fallthru
          _
        // Predicated region
        $region141: #{tpu_custom_call.1} parent=127 // pred_check
          %p919 = pneg %p147
        $region142: #{tpu_custom_call.1} parent=127 // pred_check_branch
          %921 = sbr.rel (%p919) target = $region144
        $region143: #{tpu_custom_call.1} parent=127 // pred_region
          %922 = dma.done [#allocation10], 16
        $region144: #{tpu_custom_call.1} parent=127 // pred_fallthru
          _
        // Predicated region
        $region145: #{tpu_custom_call.1} parent=127 // pred_check
          %p923 = pneg %p168
        $region146: #{tpu_custom_call.1} parent=127 // pred_check_branch
          %925 = sbr.rel (%p923) target = $region148
        $region147: #{tpu_custom_call.1} parent=127 // pred_region
          %926 = dma.done [#allocation10], 16
        $region148: #{tpu_custom_call.1} parent=127 // pred_fallthru
          _
        // Predicated region
        $region149: #{tpu_custom_call.1} parent=127 // pred_check
          %p927 = pneg %p210
        $region150: #{tpu_custom_call.1} parent=127 // pred_check_branch
          %929 = sbr.rel (%p927) target = $region152
        $region151: #{tpu_custom_call.1} parent=127 // pred_region
          %930 = dma.done [#allocation13], 16
        $region152: #{tpu_custom_call.1} parent=127 // pred_fallthru
          _
        // Predicated region
        $region153: #{tpu_custom_call.1} parent=127 // pred_check
          %p931 = pneg %p252
        $region154: #{tpu_custom_call.1} parent=127 // pred_check_branch
          %933 = sbr.rel (%p931) target = $region156
        $region155: #{tpu_custom_call.1} parent=127 // pred_region
          %934 = dma.done [#allocation13], 16
        $region156: #{tpu_custom_call.1} parent=127 // pred_fallthru
          _
        // Predicated region
        $region157: #{tpu_custom_call.1} parent=127 // pred_check
          %p935 = pneg %p273
        $region158: #{tpu_custom_call.1} parent=127 // pred_check_branch
          %937 = sbr.rel (%p935) target = $region160
        $region159: #{tpu_custom_call.1} parent=127 // pred_region
          %938 = dma.done [#allocation16], 16
        $region160: #{tpu_custom_call.1} parent=127 // pred_fallthru
          _
        // Predicated region
        $region161: #{tpu_custom_call.1} parent=127 // pred_check
          %p939 = pneg %p294
        $region162: #{tpu_custom_call.1} parent=127 // pred_check_branch
          %941 = sbr.rel (%p939) target = $region164
        $region163: #{tpu_custom_call.1} parent=127 // pred_region
          %942 = dma.done [#allocation16], 16
        $region164: #{tpu_custom_call.1} parent=127 // pred_fallthru
          _
        // Predicated region
        $region165: #{tpu_custom_call.1} parent=127 // pred_check
          %p943 = pneg %p336
        $region166: #{tpu_custom_call.1} parent=127 // pred_check_branch
          %945 = sbr.rel (%p943) target = $region168
        $region167: #{tpu_custom_call.1} parent=127 // pred_region
          %946 = dma.done [#allocation19], 16
        $region168: #{tpu_custom_call.1} parent=127 // pred_fallthru
          _
        // Predicated region
        $region169: #{tpu_custom_call.1} parent=127 // pred_check
          %p947 = pneg %p378
        $region170: #{tpu_custom_call.1} parent=127 // pred_check_branch
          %949 = sbr.rel (%p947) target = $region172
        $region171: #{tpu_custom_call.1} parent=127 // pred_region
          %950 = dma.done [#allocation19], 16
        $region172: #{tpu_custom_call.1} parent=127 // pred_fallthru
          _
        // Predicated region
        $region173: #{tpu_custom_call.1} parent=127 // pred_check
          %p951 = pneg %p399
        $region174: #{tpu_custom_call.1} parent=127 // pred_check_branch
          %953 = sbr.rel (%p951) target = $region176
        $region175: #{tpu_custom_call.1} parent=127 // pred_region
          %954 = dma.done [#allocation22], 16
        $region176: #{tpu_custom_call.1} parent=127 // pred_fallthru
          _
        // Predicated region
        $region177: #{tpu_custom_call.1} parent=127 // pred_check
          %p955 = pneg %p420
        $region178: #{tpu_custom_call.1} parent=127 // pred_check_branch
          %957 = sbr.rel (%p955) target = $region180
        $region179: #{tpu_custom_call.1} parent=127 // pred_region
          %958 = dma.done [#allocation22], 16
        $region180: #{tpu_custom_call.1} parent=127 // pred_fallthru
          _
        // Predicated region
        $region181: #{tpu_custom_call.1} parent=127 // pred_check
          %p959 = pneg %p462
        $region182: #{tpu_custom_call.1} parent=127 // pred_check_branch
          %961 = sbr.rel (%p959) target = $region184
        $region183: #{tpu_custom_call.1} parent=127 // pred_region
          %962 = dma.done [#allocation25], 16
        $region184: #{tpu_custom_call.1} parent=127 // pred_fallthru
          _
        %s963 = sand.u32 %s61, 1
        %s964 = scalar_lea.sflag [#allocation4], %s963
        %s965 = sand.u32 %s61, 1
        %s966 = smul.addr %s965, 8
        %s967 = scalar_lea.vmem [#allocation3], %s966
        %p968 = pneg %p74
        %p969 = pneg %p71
        %s970 = sand.u32 %s53, 1
        %s971 = scalar_lea.sflag [#allocation7], %s970
        %s972 = sand.u32 %s87, 1
        %s973 = scalar_lea.vmem [#allocation6], %s972
        %p974 = pneg %p100
        %p975 = pneg %p97
        %s976 = sand.u32 %s53, 1
        %s977 = scalar_lea.sflag [#allocation7], %s976
        %s978 = sand.u32 %s113, 1
        %s979 = scalar_lea.vmem [#allocation8], %s978
        %p980 = pneg %p126
        %p981 = pneg %p123
        %p982 = pneg %p147
        %p983 = pneg %p144
        %p984 = pneg %p168
        %p985 = pneg %p165
        %p986 = pneg %p189
        %p987 = pneg %p186
        %p988 = pneg %p210
        %p989 = pneg %p207
        %p990 = pneg %p231
        %p991 = pneg %p228
        %p992 = pneg %p252
        %p993 = pneg %p249
        %p994 = pneg %p273
        %p995 = pneg %p270
        %p996 = pneg %p294
        %p997 = pneg %p291
        %p998 = pneg %p315
        %p999 = pneg %p312
        %p1000 = pneg %p336
        %p1001 = pneg %p333
        %p1002 = pneg %p357
        %p1003 = pneg %p354
        %p1004 = pneg %p378
        %p1005 = pneg %p375
        %p1006 = pneg %p399
        %p1007 = pneg %p396
        %p1008 = pneg %p420
        %p1009 = pneg %p417
        %p1010 = pneg %p441
        %p1011 = pneg %p438
        %p1012 = pneg %p462
        %p1013 = pneg %p459
        %p1014 = pneg %p483
        %p1015 = pneg %p480
        %p1016 = pneg %p504
        %p1017 = pneg %p501
        %p1018 = pneg %p525
        %p1019 = pneg %p522
        %p1020 = pneg %p546
        %p1021 = pneg %p543
        %p1022 = pneg %p567
        %p1023 = pneg %p564
        %p1024 = pneg %p588
        %p1025 = pneg %p585
        %p1026 = pneg %p609
        %p1027 = pneg %p606
        %p1028 = pneg %p630
        %p1029 = pneg %p627
        %p1030 = pneg %p656
        %p1031 = pneg %p653
        %s1032 = sand.u32 %s643, 1
        %s1033 = scalar_lea.sflag [#allocation5], %s1032
        %s1034 = sand.u32 %s643, 1
        %s1035 = smul.addr %s1034, 8
        %s1036 = scalar_lea.vmem [#allocation26], %s1035
        %v1037 = vld [vmem:[%s898] sm:$0xff]
        %v1038 = vld [vmem:[%s906] sm:$0x1]
        %vm1039 = vcmp.eq.f32.partialorder %v1038, 0.0
        %v1040 = vsel %vm1039, -1e+09, 0.0
        %v1041 = vld [vmem:[%s914] sm:$0x1]
        %vm1042 = vcmp.eq.f32.partialorder %v1041, 0.0
        %v1043 = vsel %vm1042, -1e+09, 0.0
        %v1044 = vld [vmem:[#allocation9] sm:$0x1]
        %v1045 = vld [vmem:[#allocation11] sm:$0x1]
        %vm1046 = vcmask 261120
        %v1047 = vsel %vm1046, %v1037, 0.0
        %1048 = vadd.xlane.f32.xlu0 %v1047
        %v1049 = vpop.xlane.xlu0 %1048
        %v1050 = vrcp.pop 32.0
        %v1051 = vmul.f32 %v1049, %v1050
        %v1052 = vsub.f32 %v1037, %v1051
        %v1053 = vmul.f32 %v1052, %v1052
        %v1054 = vsel %vm1046, %v1053, 0.0
        %1055 = vadd.xlane.f32.xlu0 %v1054
        %v1056 = vpop.xlane.xlu0 %1055
        %v1057 = vmul.f32 %v1056, 0.032258064
        %v1058 = vrsqrt.pop %v1057
        %v1059 = vmul.f32 %v1057, %v1058
        %vm1060 = vcmp.eq.f32.partialorder %v1057, inf
        %v1061 = vsel %vm1060, %v1057, %v1059
        %vm1062 = vcmp.eq.f32.partialorder %v1057, 0.0
        %v1063 = vand.u32 %v1057, 2147483648
        %v1064 = vsel %vm1062, %v1063, %v1061
        %v1066 = vlaneseq
        %v1067 = vshrl.u32 %v1066, 7
        %v1068 = vsub.s32 0, %v1067
        %v1069 = vrot.slane %v1044, %v1068
        %v1071 = vmul.f32 %v1069, %v1052
        %v1072 = vadd.f32 %v1064, 1e-06
        %v1073 = vrcp.pop %v1072
        %v1074 = vmul.f32 %v1071, %v1073
        %v1076 = vlaneseq
        %v1077 = vshrl.u32 %v1076, 7
        %v1078 = vsub.s32 0, %v1077
        %v1079 = vrot.slane %v1045, %v1078
        %v1081 = vadd.f32 %v1074, %v1079
        %v1082 = vld [vmem:[%s5] sm:$0xff]
        %v1083 = vld [vmem:[%s5 + $0x8] sm:$0xff]
        %v1084 = vld [vmem:[%s5 + $0x10] sm:$0xff]
        %v1085 = vld [vmem:[%s5 + $0x18] sm:$0xff]
        %v1086 = vld [vmem:[#allocation12] sm:$0x1]
        %v1088 = vlaneseq
        %v1089 = vshrl.u32 %v1088, 7
        %v1090 = vsub.s32 0, %v1089
        %v1091 = vrot.slane %v1086, %v1090
        %v1094 = vsel %vm1046, %v1081, 0
        %1096 = vmatprep.subr.mxu0 0.0
        %1097 = vmatpush1.msra.mxu0 0.0
        %1098 = vmatprep.subr.mxu0 0.0
        %1099 = vmatpush1.msra.mxu0 0.0
        %1100 = vmatprep.subr.mxu0 0.0
        %1101 = vmatpush1.msra.mxu0 0.0
        %1102 = vmatprep.subr.mxu0 0.0
        %1103 = vmatpush1.msra.mxu0 0.0
        %1104 = vmatprep.subr.mxu0 0.0
        %1105 = vmatpush1.msra.mxu0 0.0
        %1106 = vmatprep.subr.mxu0 0.0
        %1107 = vmatpush1.msra.mxu0 0.0
        %1108 = vmatprep.subr.mxu0 0.0
        %1109 = vmatpush1.msra.mxu0 0.0
        %1110 = vmatprep.subr.mxu0 0.0
        %1111 = vmatpush1.msra.mxu0 0.0
        %1112 = vmatprep.subr.mxu0 0.0
        %1113 = vmatpush1.msra.mxu0 0.0
        %1114 = vmatprep.subr.mxu0 0.0
        %1115 = vmatpush1.msra.mxu0 0.0
        %1116 = vmatprep.subr.mxu0 0.0
        %1117 = vmatpush1.msra.mxu0 0.0
        %1118 = vmatprep.subr.mxu0 0.0
        %1119 = vmatpush1.msra.mxu0 0.0
        %1120 = vmatprep.subr.mxu0 0.0
        %1121 = vmatpush1.msra.mxu0 %v1085
        %1122 = vmatprep.subr.mxu0 0.0
        %1123 = vmatpush1.msra.mxu0 %v1084
        %1124 = vmatprep.subr.mxu0 0.0
        %1125 = vmatpush1.msra.mxu0 %v1083
        %1126 = vmatprep.subr.mxu0 0.0
        %1127 = vmatpush1.msra.mxu0 %v1082
        %1128 = vmatprep.subr.mxu0 0.0
        %1129 = vmatpush2.msra.mxu0 0.0
        %1130 = vmatprep.subr.mxu0 0.0
        %1131 = vmatpush2.msra.mxu0 0.0
        %1132 = vmatprep.subr.mxu0 0.0
        %1133 = vmatpush2.msra.mxu0 0.0
        %1134 = vmatprep.subr.mxu0 0.0
        %1135 = vmatpush2.msra.mxu0 0.0
        %1136 = vmatprep.subr.mxu0 0.0
        %1137 = vmatpush2.msra.mxu0 0.0
        %1138 = vmatprep.subr.mxu0 0.0
        %1139 = vmatpush2.msra.mxu0 0.0
        %1140 = vmatprep.subr.mxu0 0.0
        %1141 = vmatpush2.msra.mxu0 0.0
        %1142 = vmatprep.subr.mxu0 0.0
        %1143 = vmatpush2.msra.mxu0 0.0
        %1144 = vmatprep.subr.mxu0 0.0
        %1145 = vmatpush2.msra.mxu0 0.0
        %1146 = vmatprep.subr.mxu0 0.0
        %1147 = vmatpush2.msra.mxu0 0.0
        %1148 = vmatprep.subr.mxu0 0.0
        %1149 = vmatpush2.msra.mxu0 0.0
        %1150 = vmatprep.subr.mxu0 0.0
        %1151 = vmatpush2.msra.mxu0 0.0
        %1152 = vmatprep.subr.mxu0 0.0
        %1153 = vmatpush2.msra.mxu0 0.0
        %1154 = vmatprep.subr.mxu0 0.0
        %1155 = vmatpush2.msra.mxu0 0.0
        %1156 = vmatprep.subr.mxu0 0.0
        %1157 = vmatpush2.msra.mxu0 0.0
        %1158 = vmatprep.subr.mxu0 0.0
        %1159 = vmatpush2.msra.mxu0 0.0
        %1160 = vmatprep.mubr.f32.mxu0 0.0
        %1161 = vmatmul.mubr.f32.gmra.mxu0 %v1094
        %v1162 = vpop.f32.mrf.mxu0
        %v1163 = vadd.f32 %v1091, %v1162
        %v1164 = vpop.f32.mrf.mxu0
        %1165 = vdwg.mxu0
        %v1167 = vlaneseq
        %v1168 = vshrl.u32 %v1167, 7
        %v1169 = vsub.s32 0, %v1168
        %v1170 = vrot.slane %v1040, %v1169
        %1173 = vrot.lane.b32.xlu0 %v1163, 96
        %v1174 = vpop.permute.xlu0 %1173
        %vm1175 = vcmask 64512
        %v1176 = vsel %vm1175, %v1163, 0
        %v1178 = vsel %vm1175, %v1174, 0
        %1180 = vmatprep.subr.mxu0 0.0
        %1181 = vmatpush1.xpose.msra.mxu0 0.0
        %1182 = vmatprep.subr.mxu0 0.0
        %1183 = vmatpush1.xpose.msra.mxu0 0.0
        %1184 = vmatprep.subr.mxu0 0.0
        %1185 = vmatpush1.xpose.msra.mxu0 0.0
        %1186 = vmatprep.subr.mxu0 0.0
        %1187 = vmatpush1.xpose.msra.mxu0 0.0
        %1188 = vmatprep.subr.mxu0 0.0
        %1189 = vmatpush1.xpose.msra.mxu0 0.0
        %1190 = vmatprep.subr.mxu0 0.0
        %1191 = vmatpush1.xpose.msra.mxu0 0.0
        %1192 = vmatprep.subr.mxu0 0.0
        %1193 = vmatpush1.xpose.msra.mxu0 0.0
        %1194 = vmatprep.subr.mxu0 0.0
        %1195 = vmatpush1.xpose.msra.mxu0 0.0
        %1196 = vmatprep.subr.mxu0 0.0
        %1197 = vmatpush1.xpose.msra.mxu0 0.0
        %1198 = vmatprep.subr.mxu0 0.0
        %1199 = vmatpush1.xpose.msra.mxu0 0.0
        %1200 = vmatprep.subr.mxu0 0.0
        %1201 = vmatpush1.xpose.msra.mxu0 0.0
        %1202 = vmatprep.subr.mxu0 0.0
        %1203 = vmatpush1.xpose.msra.mxu0 0.0
        %1204 = vmatprep.subr.mxu0 0.0
        %1205 = vmatpush1.xpose.msra.mxu0 0.0
        %1206 = vmatprep.subr.mxu0 0.0
        %1207 = vmatpush1.xpose.msra.mxu0 0.0
        %1208 = vmatprep.subr.mxu0 0.0
        %1209 = vmatpush1.xpose.msra.mxu0 0.0
        %1210 = vmatprep.subr.mxu0 0.0
        %1211 = vmatpush1.xpose.msra.mxu0 %v1178
        %1212 = vmatprep.subr.mxu0 0.0
        %1213 = vmatpush2.xpose.msra.mxu0 0.0
        %1214 = vmatprep.subr.mxu0 0.0
        %1215 = vmatpush2.xpose.msra.mxu0 0.0
        %1216 = vmatprep.subr.mxu0 0.0
        %1217 = vmatpush2.xpose.msra.mxu0 0.0
        %1218 = vmatprep.subr.mxu0 0.0
        %1219 = vmatpush2.xpose.msra.mxu0 0.0
        %1220 = vmatprep.subr.mxu0 0.0
        %1221 = vmatpush2.xpose.msra.mxu0 0.0
        %1222 = vmatprep.subr.mxu0 0.0
        %1223 = vmatpush2.xpose.msra.mxu0 0.0
        %1224 = vmatprep.subr.mxu0 0.0
        %1225 = vmatpush2.xpose.msra.mxu0 0.0
        %1226 = vmatprep.subr.mxu0 0.0
        %1227 = vmatpush2.xpose.msra.mxu0 0.0
        %1228 = vmatprep.subr.mxu0 0.0
        %1229 = vmatpush2.xpose.msra.mxu0 0.0
        %1230 = vmatprep.subr.mxu0 0.0
        %1231 = vmatpush2.xpose.msra.mxu0 0.0
        %1232 = vmatprep.subr.mxu0 0.0
        %1233 = vmatpush2.xpose.msra.mxu0 0.0
        %1234 = vmatprep.subr.mxu0 0.0
        %1235 = vmatpush2.xpose.msra.mxu0 0.0
        %1236 = vmatprep.subr.mxu0 0.0
        %1237 = vmatpush2.xpose.msra.mxu0 0.0
        %1238 = vmatprep.subr.mxu0 0.0
        %1239 = vmatpush2.xpose.msra.mxu0 0.0
        %1240 = vmatprep.subr.mxu0 0.0
        %1241 = vmatpush2.xpose.msra.mxu0 0.0
        %1242 = vmatprep.subr.mxu0 0.0
        %1243 = vmatpush2.xpose.msra.mxu0 0.0
        %1244 = vmatprep.mubr.f32.mxu0 0.0
        %1245 = vmatmul.mubr.f32.gmra.mxu0 %v1176
        %v1246 = vpop.f32.mrf.mxu0
        %v1247 = vadd.f32 %v1170, %v1246
        %v1248 = vpop.f32.mrf.mxu0
        %1249 = vdwg.mxu0
        %v1250 = vsel %vm1175, %v1247, -inf
        %1251 = vmax.xlane.f32.xlu0 %v1250
        %v1252 = vpop.xlane.xlu0 %1251
        %v1253 = vsub.f32 %v1247, %v1252
        %v1254 = vmul.f32 %v1253, 1.442695
        %v1255 = vpow.pop %v1254
        %v1256 = vsel %vm1175, %v1255, 0.0
        %1257 = vadd.xlane.f32.xlu0 %v1256
        %v1258 = vpop.xlane.xlu0 %1257
        %v1259 = vrcp.pop %v1258
        %v1260 = vmul.f32 %v1255, %v1259
        %1261 = vrot.lane.b32.xlu0 %v1163, 64
        %v1262 = vpop.permute.xlu0 %1261
        %v1265 = vsel %vm1175, %v1260, 0
        %1267 = vmatprep.subr.mxu0 0.0
        %1268 = vmatpush1.msra.mxu0 0.0
        %1269 = vmatprep.subr.mxu0 0.0
        %1270 = vmatpush1.msra.mxu0 0.0
        %1271 = vmatprep.subr.mxu0 0.0
        %1272 = vmatpush1.msra.mxu0 0.0
        %1273 = vmatprep.subr.mxu0 0.0
        %1274 = vmatpush1.msra.mxu0 0.0
        %1275 = vmatprep.subr.mxu0 0.0
        %1276 = vmatpush1.msra.mxu0 0.0
        %1277 = vmatprep.subr.mxu0 0.0
        %1278 = vmatpush1.msra.mxu0 0.0
        %1279 = vmatprep.subr.mxu0 0.0
        %1280 = vmatpush1.msra.mxu0 0.0
        %1281 = vmatprep.subr.mxu0 0.0
        %1282 = vmatpush1.msra.mxu0 0.0
        %1283 = vmatprep.subr.mxu0 0.0
        %1284 = vmatpush1.msra.mxu0 0.0
        %1285 = vmatprep.subr.mxu0 0.0
        %1286 = vmatpush1.msra.mxu0 0.0
        %1287 = vmatprep.subr.mxu0 0.0
        %1288 = vmatpush1.msra.mxu0 0.0
        %1289 = vmatprep.subr.mxu0 0.0
        %1290 = vmatpush1.msra.mxu0 0.0
        %1291 = vmatprep.subr.mxu0 0.0
        %1292 = vmatpush1.msra.mxu0 0.0
        %1293 = vmatprep.subr.mxu0 0.0
        %1294 = vmatpush1.msra.mxu0 0.0
        %1295 = vmatprep.subr.mxu0 0.0
        %1296 = vmatpush1.msra.mxu0 0.0
        %1297 = vmatprep.subr.mxu0 0.0
        %1298 = vmatpush1.msra.mxu0 %v1262
        %1299 = vmatprep.subr.mxu0 0.0
        %1300 = vmatpush2.msra.mxu0 0.0
        %1301 = vmatprep.subr.mxu0 0.0
        %1302 = vmatpush2.msra.mxu0 0.0
        %1303 = vmatprep.subr.mxu0 0.0
        %1304 = vmatpush2.msra.mxu0 0.0
        %1305 = vmatprep.subr.mxu0 0.0
        %1306 = vmatpush2.msra.mxu0 0.0
        %1307 = vmatprep.subr.mxu0 0.0
        %1308 = vmatpush2.msra.mxu0 0.0
        %1309 = vmatprep.subr.mxu0 0.0
        %1310 = vmatpush2.msra.mxu0 0.0
        %1311 = vmatprep.subr.mxu0 0.0
        %1312 = vmatpush2.msra.mxu0 0.0
        %1313 = vmatprep.subr.mxu0 0.0
        %1314 = vmatpush2.msra.mxu0 0.0
        %1315 = vmatprep.subr.mxu0 0.0
        %1316 = vmatpush2.msra.mxu0 0.0
        %1317 = vmatprep.subr.mxu0 0.0
        %1318 = vmatpush2.msra.mxu0 0.0
        %1319 = vmatprep.subr.mxu0 0.0
        %1320 = vmatpush2.msra.mxu0 0.0
        %1321 = vmatprep.subr.mxu0 0.0
        %1322 = vmatpush2.msra.mxu0 0.0
        %1323 = vmatprep.subr.mxu0 0.0
        %1324 = vmatpush2.msra.mxu0 0.0
        %1325 = vmatprep.subr.mxu0 0.0
        %1326 = vmatpush2.msra.mxu0 0.0
        %1327 = vmatprep.subr.mxu0 0.0
        %1328 = vmatpush2.msra.mxu0 0.0
        %1329 = vmatprep.subr.mxu0 0.0
        %1330 = vmatpush2.msra.mxu0 0.0
        %1331 = vmatprep.mubr.f32.mxu0 0.0
        %1332 = vmatmul.mubr.f32.gmra.mxu0 %v1265
        %v1333 = vpop.f32.mrf.mxu0
        %v1334 = vadd.f32 0.0, %v1333
        %v1335 = vpop.f32.mrf.mxu0
        %1336 = vdwg.mxu0
        %1337 = vst.msk [vmem:[#allocation2] sm:$0xff] %vm1175, %v1334
        %1338 = vrot.lane.b32.xlu0 %v1163, 120
        %v1339 = vpop.permute.xlu0 %1338
        %1340 = vrot.lane.b32.xlu0 %v1163, 88
        %v1341 = vpop.permute.xlu0 %1340
        %v1342 = vsel %vm1175, %v1339, 0
        %v1344 = vsel %vm1175, %v1341, 0
        %1346 = vmatprep.subr.mxu0 0.0
        %1347 = vmatpush1.xpose.msra.mxu0 0.0
        %1348 = vmatprep.subr.mxu0 0.0
        %1349 = vmatpush1.xpose.msra.mxu0 0.0
        %1350 = vmatprep.subr.mxu0 0.0
        %1351 = vmatpush1.xpose.msra.mxu0 0.0
        %1352 = vmatprep.subr.mxu0 0.0
        %1353 = vmatpush1.xpose.msra.mxu0 0.0
        %1354 = vmatprep.subr.mxu0 0.0
        %1355 = vmatpush1.xpose.msra.mxu0 0.0
        %1356 = vmatprep.subr.mxu0 0.0
        %1357 = vmatpush1.xpose.msra.mxu0 0.0
        %1358 = vmatprep.subr.mxu0 0.0
        %1359 = vmatpush1.xpose.msra.mxu0 0.0
        %1360 = vmatprep.subr.mxu0 0.0
        %1361 = vmatpush1.xpose.msra.mxu0 0.0
        %1362 = vmatprep.subr.mxu0 0.0
        %1363 = vmatpush1.xpose.msra.mxu0 0.0
        %1364 = vmatprep.subr.mxu0 0.0
        %1365 = vmatpush1.xpose.msra.mxu0 0.0
        %1366 = vmatprep.subr.mxu0 0.0
        %1367 = vmatpush1.xpose.msra.mxu0 0.0
        %1368 = vmatprep.subr.mxu0 0.0
        %1369 = vmatpush1.xpose.msra.mxu0 0.0
        %1370 = vmatprep.subr.mxu0 0.0
        %1371 = vmatpush1.xpose.msra.mxu0 0.0
        %1372 = vmatprep.subr.mxu0 0.0
        %1373 = vmatpush1.xpose.msra.mxu0 0.0
        %1374 = vmatprep.subr.mxu0 0.0
        %1375 = vmatpush1.xpose.msra.mxu0 0.0
        %1376 = vmatprep.subr.mxu0 0.0
        %1377 = vmatpush1.xpose.msra.mxu0 %v1344
        %1378 = vmatprep.subr.mxu0 0.0
        %1379 = vmatpush2.xpose.msra.mxu0 0.0
        %1380 = vmatprep.subr.mxu0 0.0
        %1381 = vmatpush2.xpose.msra.mxu0 0.0
        %1382 = vmatprep.subr.mxu0 0.0
        %1383 = vmatpush2.xpose.msra.mxu0 0.0
        %1384 = vmatprep.subr.mxu0 0.0
        %1385 = vmatpush2.xpose.msra.mxu0 0.0
        %1386 = vmatprep.subr.mxu0 0.0
        %1387 = vmatpush2.xpose.msra.mxu0 0.0
        %1388 = vmatprep.subr.mxu0 0.0
        %1389 = vmatpush2.xpose.msra.mxu0 0.0
        %1390 = vmatprep.subr.mxu0 0.0
        %1391 = vmatpush2.xpose.msra.mxu0 0.0
        %1392 = vmatprep.subr.mxu0 0.0
        %1393 = vmatpush2.xpose.msra.mxu0 0.0
        %1394 = vmatprep.subr.mxu0 0.0
        %1395 = vmatpush2.xpose.msra.mxu0 0.0
        %1396 = vmatprep.subr.mxu0 0.0
        %1397 = vmatpush2.xpose.msra.mxu0 0.0
        %1398 = vmatprep.subr.mxu0 0.0
        %1399 = vmatpush2.xpose.msra.mxu0 0.0
        %1400 = vmatprep.subr.mxu0 0.0
        %1401 = vmatpush2.xpose.msra.mxu0 0.0
        %1402 = vmatprep.subr.mxu0 0.0
        %1403 = vmatpush2.xpose.msra.mxu0 0.0
        %1404 = vmatprep.subr.mxu0 0.0
        %1405 = vmatpush2.xpose.msra.mxu0 0.0
        %1406 = vmatprep.subr.mxu0 0.0
        %1407 = vmatpush2.xpose.msra.mxu0 0.0
        %1408 = vmatprep.subr.mxu0 0.0
        %1409 = vmatpush2.xpose.msra.mxu0 0.0
        %1410 = vmatprep.mubr.f32.mxu0 0.0
        %1411 = vmatmul.mubr.f32.gmra.mxu0 %v1342
        %v1412 = vpop.f32.mrf.mxu0
        %v1413 = vadd.f32 %v1170, %v1412
        %v1414 = vpop.f32.mrf.mxu0
        %1415 = vdwg.mxu0
        %v1416 = vsel %vm1175, %v1413, -inf
        %1417 = vmax.xlane.f32.xlu0 %v1416
        %v1418 = vpop.xlane.xlu0 %1417
        %v1419 = vsub.f32 %v1413, %v1418
        %v1420 = vmul.f32 %v1419, 1.442695
        %v1421 = vpow.pop %v1420
        %v1422 = vsel %vm1175, %v1421, 0.0
        %1423 = vadd.xlane.f32.xlu0 %v1422
        %v1424 = vpop.xlane.xlu0 %1423
        %v1425 = vrcp.pop %v1424
        %v1426 = vmul.f32 %v1421, %v1425
        %1427 = vrot.lane.b32.xlu0 %v1163, 56
        %v1428 = vpop.permute.xlu0 %1427
        %v1431 = vsel %vm1175, %v1426, 0
        %1433 = vmatprep.subr.mxu0 0.0
        %1434 = vmatpush1.msra.mxu0 0.0
        %1435 = vmatprep.subr.mxu0 0.0
        %1436 = vmatpush1.msra.mxu0 0.0
        %1437 = vmatprep.subr.mxu0 0.0
        %1438 = vmatpush1.msra.mxu0 0.0
        %1439 = vmatprep.subr.mxu0 0.0
        %1440 = vmatpush1.msra.mxu0 0.0
        %1441 = vmatprep.subr.mxu0 0.0
        %1442 = vmatpush1.msra.mxu0 0.0
        %1443 = vmatprep.subr.mxu0 0.0
        %1444 = vmatpush1.msra.mxu0 0.0
        %1445 = vmatprep.subr.mxu0 0.0
        %1446 = vmatpush1.msra.mxu0 0.0
        %1447 = vmatprep.subr.mxu0 0.0
        %1448 = vmatpush1.msra.mxu0 0.0
        %1449 = vmatprep.subr.mxu0 0.0
        %1450 = vmatpush1.msra.mxu0 0.0
        %1451 = vmatprep.subr.mxu0 0.0
        %1452 = vmatpush1.msra.mxu0 0.0
        %1453 = vmatprep.subr.mxu0 0.0
        %1454 = vmatpush1.msra.mxu0 0.0
        %1455 = vmatprep.subr.mxu0 0.0
        %1456 = vmatpush1.msra.mxu0 0.0
        %1457 = vmatprep.subr.mxu0 0.0
        %1458 = vmatpush1.msra.mxu0 0.0
        %1459 = vmatprep.subr.mxu0 0.0
        %1460 = vmatpush1.msra.mxu0 0.0
        %1461 = vmatprep.subr.mxu0 0.0
        %1462 = vmatpush1.msra.mxu0 0.0
        %1463 = vmatprep.subr.mxu0 0.0
        %1464 = vmatpush1.msra.mxu0 %v1428
        %1465 = vmatprep.subr.mxu0 0.0
        %1466 = vmatpush2.msra.mxu0 0.0
        %1467 = vmatprep.subr.mxu0 0.0
        %1468 = vmatpush2.msra.mxu0 0.0
        %1469 = vmatprep.subr.mxu0 0.0
        %1470 = vmatpush2.msra.mxu0 0.0
        %1471 = vmatprep.subr.mxu0 0.0
        %1472 = vmatpush2.msra.mxu0 0.0
        %1473 = vmatprep.subr.mxu0 0.0
        %1474 = vmatpush2.msra.mxu0 0.0
        %1475 = vmatprep.subr.mxu0 0.0
        %1476 = vmatpush2.msra.mxu0 0.0
        %1477 = vmatprep.subr.mxu0 0.0
        %1478 = vmatpush2.msra.mxu0 0.0
        %1479 = vmatprep.subr.mxu0 0.0
        %1480 = vmatpush2.msra.mxu0 0.0
        %1481 = vmatprep.subr.mxu0 0.0
        %1482 = vmatpush2.msra.mxu0 0.0
        %1483 = vmatprep.subr.mxu0 0.0
        %1484 = vmatpush2.msra.mxu0 0.0
        %1485 = vmatprep.subr.mxu0 0.0
        %1486 = vmatpush2.msra.mxu0 0.0
        %1487 = vmatprep.subr.mxu0 0.0
        %1488 = vmatpush2.msra.mxu0 0.0
        %1489 = vmatprep.subr.mxu0 0.0
        %1490 = vmatpush2.msra.mxu0 0.0
        %1491 = vmatprep.subr.mxu0 0.0
        %1492 = vmatpush2.msra.mxu0 0.0
        %1493 = vmatprep.subr.mxu0 0.0
        %1494 = vmatpush2.msra.mxu0 0.0
        %1495 = vmatprep.subr.mxu0 0.0
        %1496 = vmatpush2.msra.mxu0 0.0
        %1497 = vmatprep.mubr.f32.mxu0 0.0
        %1498 = vmatmul.mubr.f32.gmra.mxu0 %v1431
        %v1499 = vpop.f32.mrf.mxu0
        %v1500 = vadd.f32 0.0, %v1499
        %v1501 = vpop.f32.mrf.mxu0
        %1502 = vdwg.mxu0
        %1504 = vrot.lane.b32.xlu0 %v1500, 8
        %v1505 = vpop.permute.xlu0 %1504
        %vm1507 = vcmask 130112
        %1508 = vst.msk [vmem:[#allocation2] sm:$0xff] %vm1507, %v1505
        %1509 = vrot.lane.b32.xlu0 %v1163, 112
        %v1510 = vpop.permute.xlu0 %1509
        %1511 = vrot.lane.b32.xlu0 %v1163, 80
        %v1512 = vpop.permute.xlu0 %1511
        %v1513 = vsel %vm1175, %v1510, 0
        %v1515 = vsel %vm1175, %v1512, 0
        %1517 = vmatprep.subr.mxu0 0.0
        %1518 = vmatpush1.xpose.msra.mxu0 0.0
        %1519 = vmatprep.subr.mxu0 0.0
        %1520 = vmatpush1.xpose.msra.mxu0 0.0
        %1521 = vmatprep.subr.mxu0 0.0
        %1522 = vmatpush1.xpose.msra.mxu0 0.0
        %1523 = vmatprep.subr.mxu0 0.0
        %1524 = vmatpush1.xpose.msra.mxu0 0.0
        %1525 = vmatprep.subr.mxu0 0.0
        %1526 = vmatpush1.xpose.msra.mxu0 0.0
        %1527 = vmatprep.subr.mxu0 0.0
        %1528 = vmatpush1.xpose.msra.mxu0 0.0
        %1529 = vmatprep.subr.mxu0 0.0
        %1530 = vmatpush1.xpose.msra.mxu0 0.0
        %1531 = vmatprep.subr.mxu0 0.0
        %1532 = vmatpush1.xpose.msra.mxu0 0.0
        %1533 = vmatprep.subr.mxu0 0.0
        %1534 = vmatpush1.xpose.msra.mxu0 0.0
        %1535 = vmatprep.subr.mxu0 0.0
        %1536 = vmatpush1.xpose.msra.mxu0 0.0
        %1537 = vmatprep.subr.mxu0 0.0
        %1538 = vmatpush1.xpose.msra.mxu0 0.0
        %1539 = vmatprep.subr.mxu0 0.0
        %1540 = vmatpush1.xpose.msra.mxu0 0.0
        %1541 = vmatprep.subr.mxu0 0.0
        %1542 = vmatpush1.xpose.msra.mxu0 0.0
        %1543 = vmatprep.subr.mxu0 0.0
        %1544 = vmatpush1.xpose.msra.mxu0 0.0
        %1545 = vmatprep.subr.mxu0 0.0
        %1546 = vmatpush1.xpose.msra.mxu0 0.0
        %1547 = vmatprep.subr.mxu0 0.0
        %1548 = vmatpush1.xpose.msra.mxu0 %v1515
        %1549 = vmatprep.subr.mxu0 0.0
        %1550 = vmatpush2.xpose.msra.mxu0 0.0
        %1551 = vmatprep.subr.mxu0 0.0
        %1552 = vmatpush2.xpose.msra.mxu0 0.0
        %1553 = vmatprep.subr.mxu0 0.0
        %1554 = vmatpush2.xpose.msra.mxu0 0.0
        %1555 = vmatprep.subr.mxu0 0.0
        %1556 = vmatpush2.xpose.msra.mxu0 0.0
        %1557 = vmatprep.subr.mxu0 0.0
        %1558 = vmatpush2.xpose.msra.mxu0 0.0
        %1559 = vmatprep.subr.mxu0 0.0
        %1560 = vmatpush2.xpose.msra.mxu0 0.0
        %1561 = vmatprep.subr.mxu0 0.0
        %1562 = vmatpush2.xpose.msra.mxu0 0.0
        %1563 = vmatprep.subr.mxu0 0.0
        %1564 = vmatpush2.xpose.msra.mxu0 0.0
        %1565 = vmatprep.subr.mxu0 0.0
        %1566 = vmatpush2.xpose.msra.mxu0 0.0
        %1567 = vmatprep.subr.mxu0 0.0
        %1568 = vmatpush2.xpose.msra.mxu0 0.0
        %1569 = vmatprep.subr.mxu0 0.0
        %1570 = vmatpush2.xpose.msra.mxu0 0.0
        %1571 = vmatprep.subr.mxu0 0.0
        %1572 = vmatpush2.xpose.msra.mxu0 0.0
        %1573 = vmatprep.subr.mxu0 0.0
        %1574 = vmatpush2.xpose.msra.mxu0 0.0
        %1575 = vmatprep.subr.mxu0 0.0
        %1576 = vmatpush2.xpose.msra.mxu0 0.0
        %1577 = vmatprep.subr.mxu0 0.0
        %1578 = vmatpush2.xpose.msra.mxu0 0.0
        %1579 = vmatprep.subr.mxu0 0.0
        %1580 = vmatpush2.xpose.msra.mxu0 0.0
        %1581 = vmatprep.mubr.f32.mxu0 0.0
        %1582 = vmatmul.mubr.f32.gmra.mxu0 %v1513
        %v1583 = vpop.f32.mrf.mxu0
        %v1584 = vadd.f32 %v1170, %v1583
        %v1585 = vpop.f32.mrf.mxu0
        %1586 = vdwg.mxu0
        %v1587 = vsel %vm1175, %v1584, -inf
        %1588 = vmax.xlane.f32.xlu0 %v1587
        %v1589 = vpop.xlane.xlu0 %1588
        %v1590 = vsub.f32 %v1584, %v1589
        %v1591 = vmul.f32 %v1590, 1.442695
        %v1592 = vpow.pop %v1591
        %v1593 = vsel %vm1175, %v1592, 0.0
        %1594 = vadd.xlane.f32.xlu0 %v1593
        %v1595 = vpop.xlane.xlu0 %1594
        %v1596 = vrcp.pop %v1595
        %v1597 = vmul.f32 %v1592, %v1596
        %1598 = vrot.lane.b32.xlu0 %v1163, 48
        %v1599 = vpop.permute.xlu0 %1598
        %v1602 = vsel %vm1175, %v1597, 0
        %1604 = vmatprep.subr.mxu0 0.0
        %1605 = vmatpush1.msra.mxu0 0.0
        %1606 = vmatprep.subr.mxu0 0.0
        %1607 = vmatpush1.msra.mxu0 0.0
        %1608 = vmatprep.subr.mxu0 0.0
        %1609 = vmatpush1.msra.mxu0 0.0
        %1610 = vmatprep.subr.mxu0 0.0
        %1611 = vmatpush1.msra.mxu0 0.0
        %1612 = vmatprep.subr.mxu0 0.0
        %1613 = vmatpush1.msra.mxu0 0.0
        %1614 = vmatprep.subr.mxu0 0.0
        %1615 = vmatpush1.msra.mxu0 0.0
        %1616 = vmatprep.subr.mxu0 0.0
        %1617 = vmatpush1.msra.mxu0 0.0
        %1618 = vmatprep.subr.mxu0 0.0
        %1619 = vmatpush1.msra.mxu0 0.0
        %1620 = vmatprep.subr.mxu0 0.0
        %1621 = vmatpush1.msra.mxu0 0.0
        %1622 = vmatprep.subr.mxu0 0.0
        %1623 = vmatpush1.msra.mxu0 0.0
        %1624 = vmatprep.subr.mxu0 0.0
        %1625 = vmatpush1.msra.mxu0 0.0
        %1626 = vmatprep.subr.mxu0 0.0
        %1627 = vmatpush1.msra.mxu0 0.0
        %1628 = vmatprep.subr.mxu0 0.0
        %1629 = vmatpush1.msra.mxu0 0.0
        %1630 = vmatprep.subr.mxu0 0.0
        %1631 = vmatpush1.msra.mxu0 0.0
        %1632 = vmatprep.subr.mxu0 0.0
        %1633 = vmatpush1.msra.mxu0 0.0
        %1634 = vmatprep.subr.mxu0 0.0
        %1635 = vmatpush1.msra.mxu0 %v1599
        %1636 = vmatprep.subr.mxu0 0.0
        %1637 = vmatpush2.msra.mxu0 0.0
        %1638 = vmatprep.subr.mxu0 0.0
        %1639 = vmatpush2.msra.mxu0 0.0
        %1640 = vmatprep.subr.mxu0 0.0
        %1641 = vmatpush2.msra.mxu0 0.0
        %1642 = vmatprep.subr.mxu0 0.0
        %1643 = vmatpush2.msra.mxu0 0.0
        %1644 = vmatprep.subr.mxu0 0.0
        %1645 = vmatpush2.msra.mxu0 0.0
        %1646 = vmatprep.subr.mxu0 0.0
        %1647 = vmatpush2.msra.mxu0 0.0
        %1648 = vmatprep.subr.mxu0 0.0
        %1649 = vmatpush2.msra.mxu0 0.0
        %1650 = vmatprep.subr.mxu0 0.0
        %1651 = vmatpush2.msra.mxu0 0.0
        %1652 = vmatprep.subr.mxu0 0.0
        %1653 = vmatpush2.msra.mxu0 0.0
        %1654 = vmatprep.subr.mxu0 0.0
        %1655 = vmatpush2.msra.mxu0 0.0
        %1656 = vmatprep.subr.mxu0 0.0
        %1657 = vmatpush2.msra.mxu0 0.0
        %1658 = vmatprep.subr.mxu0 0.0
        %1659 = vmatpush2.msra.mxu0 0.0
        %1660 = vmatprep.subr.mxu0 0.0
        %1661 = vmatpush2.msra.mxu0 0.0
        %1662 = vmatprep.subr.mxu0 0.0
        %1663 = vmatpush2.msra.mxu0 0.0
        %1664 = vmatprep.subr.mxu0 0.0
        %1665 = vmatpush2.msra.mxu0 0.0
        %1666 = vmatprep.subr.mxu0 0.0
        %1667 = vmatpush2.msra.mxu0 0.0
        %1668 = vmatprep.mubr.f32.mxu0 0.0
        %1669 = vmatmul.mubr.f32.gmra.mxu0 %v1602
        %v1670 = vpop.f32.mrf.mxu0
        %v1671 = vadd.f32 0.0, %v1670
        %v1672 = vpop.f32.mrf.mxu0
        %1673 = vdwg.mxu0
        %1675 = vrot.lane.b32.xlu0 %v1671, 16
        %v1676 = vpop.permute.xlu0 %1675
        %vm1678 = vcmask 195712
        %1679 = vst.msk [vmem:[#allocation2] sm:$0xff] %vm1678, %v1676
        %1680 = vrot.lane.b32.xlu0 %v1163, 104
        %v1681 = vpop.permute.xlu0 %1680
        %1682 = vrot.lane.b32.xlu0 %v1163, 72
        %v1683 = vpop.permute.xlu0 %1682
        %v1684 = vsel %vm1175, %v1681, 0
        %v1686 = vsel %vm1175, %v1683, 0
        %1688 = vmatprep.subr.mxu0 0.0
        %1689 = vmatpush1.xpose.msra.mxu0 0.0
        %1690 = vmatprep.subr.mxu0 0.0
        %1691 = vmatpush1.xpose.msra.mxu0 0.0
        %1692 = vmatprep.subr.mxu0 0.0
        %1693 = vmatpush1.xpose.msra.mxu0 0.0
        %1694 = vmatprep.subr.mxu0 0.0
        %1695 = vmatpush1.xpose.msra.mxu0 0.0
        %1696 = vmatprep.subr.mxu0 0.0
        %1697 = vmatpush1.xpose.msra.mxu0 0.0
        %1698 = vmatprep.subr.mxu0 0.0
        %1699 = vmatpush1.xpose.msra.mxu0 0.0
        %1700 = vmatprep.subr.mxu0 0.0
        %1701 = vmatpush1.xpose.msra.mxu0 0.0
        %1702 = vmatprep.subr.mxu0 0.0
        %1703 = vmatpush1.xpose.msra.mxu0 0.0
        %1704 = vmatprep.subr.mxu0 0.0
        %1705 = vmatpush1.xpose.msra.mxu0 0.0
        %1706 = vmatprep.subr.mxu0 0.0
        %1707 = vmatpush1.xpose.msra.mxu0 0.0
        %1708 = vmatprep.subr.mxu0 0.0
        %1709 = vmatpush1.xpose.msra.mxu0 0.0
        %1710 = vmatprep.subr.mxu0 0.0
        %1711 = vmatpush1.xpose.msra.mxu0 0.0
        %1712 = vmatprep.subr.mxu0 0.0
        %1713 = vmatpush1.xpose.msra.mxu0 0.0
        %1714 = vmatprep.subr.mxu0 0.0
        %1715 = vmatpush1.xpose.msra.mxu0 0.0
        %1716 = vmatprep.subr.mxu0 0.0
        %1717 = vmatpush1.xpose.msra.mxu0 0.0
        %1718 = vmatprep.subr.mxu0 0.0
        %1719 = vmatpush1.xpose.msra.mxu0 %v1686
        %1720 = vmatprep.subr.mxu0 0.0
        %1721 = vmatpush2.xpose.msra.mxu0 0.0
        %1722 = vmatprep.subr.mxu0 0.0
        %1723 = vmatpush2.xpose.msra.mxu0 0.0
        %1724 = vmatprep.subr.mxu0 0.0
        %1725 = vmatpush2.xpose.msra.mxu0 0.0
        %1726 = vmatprep.subr.mxu0 0.0
        %1727 = vmatpush2.xpose.msra.mxu0 0.0
        %1728 = vmatprep.subr.mxu0 0.0
        %1729 = vmatpush2.xpose.msra.mxu0 0.0
        %1730 = vmatprep.subr.mxu0 0.0
        %1731 = vmatpush2.xpose.msra.mxu0 0.0
        %1732 = vmatprep.subr.mxu0 0.0
        %1733 = vmatpush2.xpose.msra.mxu0 0.0
        %1734 = vmatprep.subr.mxu0 0.0
        %1735 = vmatpush2.xpose.msra.mxu0 0.0
        %1736 = vmatprep.subr.mxu0 0.0
        %1737 = vmatpush2.xpose.msra.mxu0 0.0
        %1738 = vmatprep.subr.mxu0 0.0
        %1739 = vmatpush2.xpose.msra.mxu0 0.0
        %1740 = vmatprep.subr.mxu0 0.0
        %1741 = vmatpush2.xpose.msra.mxu0 0.0
        %1742 = vmatprep.subr.mxu0 0.0
        %1743 = vmatpush2.xpose.msra.mxu0 0.0
        %1744 = vmatprep.subr.mxu0 0.0
        %1745 = vmatpush2.xpose.msra.mxu0 0.0
        %1746 = vmatprep.subr.mxu0 0.0
        %1747 = vmatpush2.xpose.msra.mxu0 0.0
        %1748 = vmatprep.subr.mxu0 0.0
        %1749 = vmatpush2.xpose.msra.mxu0 0.0
        %1750 = vmatprep.subr.mxu0 0.0
        %1751 = vmatpush2.xpose.msra.mxu0 0.0
        %1752 = vmatprep.mubr.f32.mxu0 0.0
        %1753 = vmatmul.mubr.f32.gmra.mxu0 %v1684
        %v1754 = vpop.f32.mrf.mxu0
        %v1755 = vadd.f32 %v1170, %v1754
        %v1756 = vpop.f32.mrf.mxu0
        %1757 = vdwg.mxu0
        %v1758 = vsel %vm1175, %v1755, -inf
        %1759 = vmax.xlane.f32.xlu0 %v1758
        %v1760 = vpop.xlane.xlu0 %1759
        %v1761 = vsub.f32 %v1755, %v1760
        %v1762 = vmul.f32 %v1761, 1.442695
        %v1763 = vpow.pop %v1762
        %v1764 = vsel %vm1175, %v1763, 0.0
        %1765 = vadd.xlane.f32.xlu0 %v1764
        %v1766 = vpop.xlane.xlu0 %1765
        %v1767 = vrcp.pop %v1766
        %v1768 = vmul.f32 %v1763, %v1767
        %1769 = vrot.lane.b32.xlu0 %v1163, 40
        %v1770 = vpop.permute.xlu0 %1769
        %v1773 = vsel %vm1175, %v1768, 0
        %1775 = vmatprep.subr.mxu0 0.0
        %1776 = vmatpush1.msra.mxu0 0.0
        %1777 = vmatprep.subr.mxu0 0.0
        %1778 = vmatpush1.msra.mxu0 0.0
        %1779 = vmatprep.subr.mxu0 0.0
        %1780 = vmatpush1.msra.mxu0 0.0
        %1781 = vmatprep.subr.mxu0 0.0
        %1782 = vmatpush1.msra.mxu0 0.0
        %1783 = vmatprep.subr.mxu0 0.0
        %1784 = vmatpush1.msra.mxu0 0.0
        %1785 = vmatprep.subr.mxu0 0.0
        %1786 = vmatpush1.msra.mxu0 0.0
        %1787 = vmatprep.subr.mxu0 0.0
        %1788 = vmatpush1.msra.mxu0 0.0
        %1789 = vmatprep.subr.mxu0 0.0
        %1790 = vmatpush1.msra.mxu0 0.0
        %1791 = vmatprep.subr.mxu0 0.0
        %1792 = vmatpush1.msra.mxu0 0.0
        %1793 = vmatprep.subr.mxu0 0.0
        %1794 = vmatpush1.msra.mxu0 0.0
        %1795 = vmatprep.subr.mxu0 0.0
        %1796 = vmatpush1.msra.mxu0 0.0
        %1797 = vmatprep.subr.mxu0 0.0
        %1798 = vmatpush1.msra.mxu0 0.0
        %1799 = vmatprep.subr.mxu0 0.0
        %1800 = vmatpush1.msra.mxu0 0.0
        %1801 = vmatprep.subr.mxu0 0.0
        %1802 = vmatpush1.msra.mxu0 0.0
        %1803 = vmatprep.subr.mxu0 0.0
        %1804 = vmatpush1.msra.mxu0 0.0
        %1805 = vmatprep.subr.mxu0 0.0
        %1806 = vmatpush1.msra.mxu0 %v1770
        %1807 = vmatprep.subr.mxu0 0.0
        %1808 = vmatpush2.msra.mxu0 0.0
        %1809 = vmatprep.subr.mxu0 0.0
        %1810 = vmatpush2.msra.mxu0 0.0
        %1811 = vmatprep.subr.mxu0 0.0
        %1812 = vmatpush2.msra.mxu0 0.0
        %1813 = vmatprep.subr.mxu0 0.0
        %1814 = vmatpush2.msra.mxu0 0.0
        %1815 = vmatprep.subr.mxu0 0.0
        %1816 = vmatpush2.msra.mxu0 0.0
        %1817 = vmatprep.subr.mxu0 0.0
        %1818 = vmatpush2.msra.mxu0 0.0
        %1819 = vmatprep.subr.mxu0 0.0
        %1820 = vmatpush2.msra.mxu0 0.0
        %1821 = vmatprep.subr.mxu0 0.0
        %1822 = vmatpush2.msra.mxu0 0.0
        %1823 = vmatprep.subr.mxu0 0.0
        %1824 = vmatpush2.msra.mxu0 0.0
        %1825 = vmatprep.subr.mxu0 0.0
        %1826 = vmatpush2.msra.mxu0 0.0
        %1827 = vmatprep.subr.mxu0 0.0
        %1828 = vmatpush2.msra.mxu0 0.0
        %1829 = vmatprep.subr.mxu0 0.0
        %1830 = vmatpush2.msra.mxu0 0.0
        %1831 = vmatprep.subr.mxu0 0.0
        %1832 = vmatpush2.msra.mxu0 0.0
        %1833 = vmatprep.subr.mxu0 0.0
        %1834 = vmatpush2.msra.mxu0 0.0
        %1835 = vmatprep.subr.mxu0 0.0
        %1836 = vmatpush2.msra.mxu0 0.0
        %1837 = vmatprep.subr.mxu0 0.0
        %1838 = vmatpush2.msra.mxu0 0.0
        %1839 = vmatprep.mubr.f32.mxu0 0.0
        %1840 = vmatmul.mubr.f32.gmra.mxu0 %v1773
        %v1841 = vpop.f32.mrf.mxu0
        %v1842 = vadd.f32 0.0, %v1841
        %v1843 = vpop.f32.mrf.mxu0
        %1844 = vdwg.mxu0
        %1846 = vrot.lane.b32.xlu0 %v1842, 24
        %v1847 = vpop.permute.xlu0 %1846
        %vm1849 = vcmask 261312
        %1850 = vst.msk [vmem:[#allocation2] sm:$0xff] %vm1849, %v1847
        %v1851 = vld [vmem:[#allocation2] sm:$0xff]
        %v1852 = vld [vmem:[%s7] sm:$0xff]
        %v1853 = vld [vmem:[%s7 + $0x8] sm:$0xff]
        %v1854 = vld [vmem:[%s7 + $0x10] sm:$0xff]
        %v1855 = vld [vmem:[%s7 + $0x18] sm:$0xff]
        %v1857 = vsel %vm1046, %v1851, 0
        %1859 = vmatprep.subr.mxu0 0.0
        %1860 = vmatpush1.msra.mxu0 0.0
        %1861 = vmatprep.subr.mxu0 0.0
        %1862 = vmatpush1.msra.mxu0 0.0
        %1863 = vmatprep.subr.mxu0 0.0
        %1864 = vmatpush1.msra.mxu0 0.0
        %1865 = vmatprep.subr.mxu0 0.0
        %1866 = vmatpush1.msra.mxu0 0.0
        %1867 = vmatprep.subr.mxu0 0.0
        %1868 = vmatpush1.msra.mxu0 0.0
        %1869 = vmatprep.subr.mxu0 0.0
        %1870 = vmatpush1.msra.mxu0 0.0
        %1871 = vmatprep.subr.mxu0 0.0
        %1872 = vmatpush1.msra.mxu0 0.0
        %1873 = vmatprep.subr.mxu0 0.0
        %1874 = vmatpush1.msra.mxu0 0.0
        %1875 = vmatprep.subr.mxu0 0.0
        %1876 = vmatpush1.msra.mxu0 0.0
        %1877 = vmatprep.subr.mxu0 0.0
        %1878 = vmatpush1.msra.mxu0 0.0
        %1879 = vmatprep.subr.mxu0 0.0
        %1880 = vmatpush1.msra.mxu0 0.0
        %1881 = vmatprep.subr.mxu0 0.0
        %1882 = vmatpush1.msra.mxu0 0.0
        %1883 = vmatprep.subr.mxu0 0.0
        %1884 = vmatpush1.msra.mxu0 %v1855
        %1885 = vmatprep.subr.mxu0 0.0
        %1886 = vmatpush1.msra.mxu0 %v1854
        %1887 = vmatprep.subr.mxu0 0.0
        %1888 = vmatpush1.msra.mxu0 %v1853
        %1889 = vmatprep.subr.mxu0 0.0
        %1890 = vmatpush1.msra.mxu0 %v1852
        %1891 = vmatprep.subr.mxu0 0.0
        %1892 = vmatpush2.msra.mxu0 0.0
        %1893 = vmatprep.subr.mxu0 0.0
        %1894 = vmatpush2.msra.mxu0 0.0
        %1895 = vmatprep.subr.mxu0 0.0
        %1896 = vmatpush2.msra.mxu0 0.0
        %1897 = vmatprep.subr.mxu0 0.0
        %1898 = vmatpush2.msra.mxu0 0.0
        %1899 = vmatprep.subr.mxu0 0.0
        %1900 = vmatpush2.msra.mxu0 0.0
        %1901 = vmatprep.subr.mxu0 0.0
        %1902 = vmatpush2.msra.mxu0 0.0
        %1903 = vmatprep.subr.mxu0 0.0
        %1904 = vmatpush2.msra.mxu0 0.0
        %1905 = vmatprep.subr.mxu0 0.0
        %1906 = vmatpush2.msra.mxu0 0.0
        %1907 = vmatprep.subr.mxu0 0.0
        %1908 = vmatpush2.msra.mxu0 0.0
        %1909 = vmatprep.subr.mxu0 0.0
        %1910 = vmatpush2.msra.mxu0 0.0
        %1911 = vmatprep.subr.mxu0 0.0
        %1912 = vmatpush2.msra.mxu0 0.0
        %1913 = vmatprep.subr.mxu0 0.0
        %1914 = vmatpush2.msra.mxu0 0.0
        %1915 = vmatprep.subr.mxu0 0.0
        %1916 = vmatpush2.msra.mxu0 0.0
        %1917 = vmatprep.subr.mxu0 0.0
        %1918 = vmatpush2.msra.mxu0 0.0
        %1919 = vmatprep.subr.mxu0 0.0
        %1920 = vmatpush2.msra.mxu0 0.0
        %1921 = vmatprep.subr.mxu0 0.0
        %1922 = vmatpush2.msra.mxu0 0.0
        %1923 = vmatprep.mubr.f32.mxu0 0.0
        %1924 = vmatmul.mubr.f32.gmra.mxu0 %v1857
        %v1925 = vpop.f32.mrf.mxu0
        %v1926 = vadd.f32 0.0, %v1925
        %v1927 = vpop.f32.mrf.mxu0
        %1928 = vdwg.mxu0
        %v1929 = vadd.f32 %v1037, %v1926
        %v1930 = vld [vmem:[#allocation14] sm:$0x1]
        %v1932 = vlaneseq
        %v1933 = vshrl.u32 %v1932, 7
        %v1934 = vsub.s32 0, %v1933
        %v1935 = vrot.slane %v1930, %v1934
        %v1937 = vadd.f32 %v1929, %v1935
        %v1938 = vld [vmem:[#allocation15] sm:$0x1]
        %v1939 = vld [vmem:[#allocation17] sm:$0x1]
        %v1940 = vsel %vm1046, %v1937, 0.0
        %1941 = vadd.xlane.f32.xlu0 %v1940
        %v1942 = vpop.xlane.xlu0 %1941
        %v1943 = vmul.f32 %v1942, %v1050
        %v1944 = vsub.f32 %v1937, %v1943
        %v1945 = vmul.f32 %v1944, %v1944
        %v1946 = vsel %vm1046, %v1945, 0.0
        %1947 = vadd.xlane.f32.xlu0 %v1946
        %v1948 = vpop.xlane.xlu0 %1947
        %v1949 = vmul.f32 %v1948, 0.032258064
        %v1950 = vrsqrt.pop %v1949
        %v1951 = vmul.f32 %v1949, %v1950
        %vm1952 = vcmp.eq.f32.partialorder %v1949, inf
        %v1953 = vsel %vm1952, %v1949, %v1951
        %vm1954 = vcmp.eq.f32.partialorder %v1949, 0.0
        %v1955 = vand.u32 %v1949, 2147483648
        %v1956 = vsel %vm1954, %v1955, %v1953
        %v1958 = vlaneseq
        %v1959 = vshrl.u32 %v1958, 7
        %v1960 = vsub.s32 0, %v1959
        %v1961 = vrot.slane %v1938, %v1960
        %v1963 = vmul.f32 %v1961, %v1944
        %v1964 = vadd.f32 %v1956, 1e-06
        %v1965 = vrcp.pop %v1964
        %v1966 = vmul.f32 %v1963, %v1965
        %v1968 = vlaneseq
        %v1969 = vshrl.u32 %v1968, 7
        %v1970 = vsub.s32 0, %v1969
        %v1971 = vrot.slane %v1939, %v1970
        %v1973 = vadd.f32 %v1966, %v1971
        %v1974 = vld [vmem:[%s11] sm:$0xff]
        %v1975 = vld [vmem:[%s11 + $0x8] sm:$0xff]
        %v1976 = vld [vmem:[%s11 + $0x10] sm:$0xff]
        %v1977 = vld [vmem:[%s11 + $0x18] sm:$0xff]
        %v1978 = vld [vmem:[#allocation18] sm:$0x1]
        %v1980 = vlaneseq
        %v1981 = vshrl.u32 %v1980, 7
        %v1982 = vsub.s32 0, %v1981
        %v1983 = vrot.slane %v1978, %v1982
        %v1986 = vsel %vm1046, %v1973, 0
        %1988 = vmatprep.subr.mxu0 0.0
        %1989 = vmatpush1.msra.mxu0 0.0
        %1990 = vmatprep.subr.mxu0 0.0
        %1991 = vmatpush1.msra.mxu0 0.0
        %1992 = vmatprep.subr.mxu0 0.0
        %1993 = vmatpush1.msra.mxu0 0.0
        %1994 = vmatprep.subr.mxu0 0.0
        %1995 = vmatpush1.msra.mxu0 0.0
        %1996 = vmatprep.subr.mxu0 0.0
        %1997 = vmatpush1.msra.mxu0 0.0
        %1998 = vmatprep.subr.mxu0 0.0
        %1999 = vmatpush1.msra.mxu0 0.0
        %2000 = vmatprep.subr.mxu0 0.0
        %2001 = vmatpush1.msra.mxu0 0.0
        %2002 = vmatprep.subr.mxu0 0.0
        %2003 = vmatpush1.msra.mxu0 0.0
        %2004 = vmatprep.subr.mxu0 0.0
        %2005 = vmatpush1.msra.mxu0 0.0
        %2006 = vmatprep.subr.mxu0 0.0
        %2007 = vmatpush1.msra.mxu0 0.0
        %2008 = vmatprep.subr.mxu0 0.0
        %2009 = vmatpush1.msra.mxu0 0.0
        %2010 = vmatprep.subr.mxu0 0.0
        %2011 = vmatpush1.msra.mxu0 0.0
        %2012 = vmatprep.subr.mxu0 0.0
        %2013 = vmatpush1.msra.mxu0 %v1977
        %2014 = vmatprep.subr.mxu0 0.0
        %2015 = vmatpush1.msra.mxu0 %v1976
        %2016 = vmatprep.subr.mxu0 0.0
        %2017 = vmatpush1.msra.mxu0 %v1975
        %2018 = vmatprep.subr.mxu0 0.0
        %2019 = vmatpush1.msra.mxu0 %v1974
        %2020 = vmatprep.subr.mxu0 0.0
        %2021 = vmatpush2.msra.mxu0 0.0
        %2022 = vmatprep.subr.mxu0 0.0
        %2023 = vmatpush2.msra.mxu0 0.0
        %2024 = vmatprep.subr.mxu0 0.0
        %2025 = vmatpush2.msra.mxu0 0.0
        %2026 = vmatprep.subr.mxu0 0.0
        %2027 = vmatpush2.msra.mxu0 0.0
        %2028 = vmatprep.subr.mxu0 0.0
        %2029 = vmatpush2.msra.mxu0 0.0
        %2030 = vmatprep.subr.mxu0 0.0
        %2031 = vmatpush2.msra.mxu0 0.0
        %2032 = vmatprep.subr.mxu0 0.0
        %2033 = vmatpush2.msra.mxu0 0.0
        %2034 = vmatprep.subr.mxu0 0.0
        %2035 = vmatpush2.msra.mxu0 0.0
        %2036 = vmatprep.subr.mxu0 0.0
        %2037 = vmatpush2.msra.mxu0 0.0
        %2038 = vmatprep.subr.mxu0 0.0
        %2039 = vmatpush2.msra.mxu0 0.0
        %2040 = vmatprep.subr.mxu0 0.0
        %2041 = vmatpush2.msra.mxu0 0.0
        %2042 = vmatprep.subr.mxu0 0.0
        %2043 = vmatpush2.msra.mxu0 0.0
        %2044 = vmatprep.subr.mxu0 0.0
        %2045 = vmatpush2.msra.mxu0 0.0
        %2046 = vmatprep.subr.mxu0 0.0
        %2047 = vmatpush2.msra.mxu0 0.0
        %2048 = vmatprep.subr.mxu0 0.0
        %2049 = vmatpush2.msra.mxu0 0.0
        %2050 = vmatprep.subr.mxu0 0.0
        %2051 = vmatpush2.msra.mxu0 0.0
        %2052 = vmatprep.mubr.f32.mxu0 0.0
        %2053 = vmatmul.mubr.f32.gmra.mxu0 %v1986
        %v2054 = vpop.f32.mrf.mxu0
        %v2055 = vadd.f32 %v1983, %v2054
        %v2056 = vpop.f32.mrf.mxu0
        %2057 = vdwg.mxu0
        %v2058 = vmax.f32 %v2055, 0.0
        %v2059 = vld [vmem:[%s13] sm:$0xff]
        %v2060 = vld [vmem:[%s13 + $0x8] sm:$0xff]
        %v2061 = vld [vmem:[%s13 + $0x10] sm:$0xff]
        %v2062 = vld [vmem:[%s13 + $0x18] sm:$0xff]
        %v2063 = vld [vmem:[%s13 + $0x20] sm:$0xff]
        %v2064 = vld [vmem:[%s13 + $0x28] sm:$0xff]
        %v2065 = vld [vmem:[%s13 + $0x30] sm:$0xff]
        %v2066 = vld [vmem:[%s13 + $0x38] sm:$0xff]
        %v2067 = vld [vmem:[#allocation20] sm:$0x1]
        %v2069 = vlaneseq
        %v2070 = vshrl.u32 %v2069, 7
        %v2071 = vsub.s32 0, %v2070
        %v2072 = vrot.slane %v2067, %v2071
        %vm2074 = vcmask 523264
        %v2076 = vsel %vm2074, %v2058, 0
        %2078 = vmatprep.subr.mxu0 0.0
        %2079 = vmatpush1.msra.mxu0 0.0
        %2080 = vmatprep.subr.mxu0 0.0
        %2081 = vmatpush1.msra.mxu0 0.0
        %2082 = vmatprep.subr.mxu0 0.0
        %2083 = vmatpush1.msra.mxu0 0.0
        %2084 = vmatprep.subr.mxu0 0.0
        %2085 = vmatpush1.msra.mxu0 0.0
        %2086 = vmatprep.subr.mxu0 0.0
        %2087 = vmatpush1.msra.mxu0 0.0
        %2088 = vmatprep.subr.mxu0 0.0
        %2089 = vmatpush1.msra.mxu0 0.0
        %2090 = vmatprep.subr.mxu0 0.0
        %2091 = vmatpush1.msra.mxu0 0.0
        %2092 = vmatprep.subr.mxu0 0.0
        %2093 = vmatpush1.msra.mxu0 0.0
        %2094 = vmatprep.subr.mxu0 0.0
        %2095 = vmatpush1.msra.mxu0 %v2066
        %2096 = vmatprep.subr.mxu0 0.0
        %2097 = vmatpush1.msra.mxu0 %v2065
        %2098 = vmatprep.subr.mxu0 0.0
        %2099 = vmatpush1.msra.mxu0 %v2064
        %2100 = vmatprep.subr.mxu0 0.0
        %2101 = vmatpush1.msra.mxu0 %v2063
        %2102 = vmatprep.subr.mxu0 0.0
        %2103 = vmatpush1.msra.mxu0 %v2062
        %2104 = vmatprep.subr.mxu0 0.0
        %2105 = vmatpush1.msra.mxu0 %v2061
        %2106 = vmatprep.subr.mxu0 0.0
        %2107 = vmatpush1.msra.mxu0 %v2060
        %2108 = vmatprep.subr.mxu0 0.0
        %2109 = vmatpush1.msra.mxu0 %v2059
        %2110 = vmatprep.subr.mxu0 0.0
        %2111 = vmatpush2.msra.mxu0 0.0
        %2112 = vmatprep.subr.mxu0 0.0
        %2113 = vmatpush2.msra.mxu0 0.0
        %2114 = vmatprep.subr.mxu0 0.0
        %2115 = vmatpush2.msra.mxu0 0.0
        %2116 = vmatprep.subr.mxu0 0.0
        %2117 = vmatpush2.msra.mxu0 0.0
        %2118 = vmatprep.subr.mxu0 0.0
        %2119 = vmatpush2.msra.mxu0 0.0
        %2120 = vmatprep.subr.mxu0 0.0
        %2121 = vmatpush2.msra.mxu0 0.0
        %2122 = vmatprep.subr.mxu0 0.0
        %2123 = vmatpush2.msra.mxu0 0.0
        %2124 = vmatprep.subr.mxu0 0.0
        %2125 = vmatpush2.msra.mxu0 0.0
        %2126 = vmatprep.subr.mxu0 0.0
        %2127 = vmatpush2.msra.mxu0 0.0
        %2128 = vmatprep.subr.mxu0 0.0
        %2129 = vmatpush2.msra.mxu0 0.0
        %2130 = vmatprep.subr.mxu0 0.0
        %2131 = vmatpush2.msra.mxu0 0.0
        %2132 = vmatprep.subr.mxu0 0.0
        %2133 = vmatpush2.msra.mxu0 0.0
        %2134 = vmatprep.subr.mxu0 0.0
        %2135 = vmatpush2.msra.mxu0 0.0
        %2136 = vmatprep.subr.mxu0 0.0
        %2137 = vmatpush2.msra.mxu0 0.0
        %2138 = vmatprep.subr.mxu0 0.0
        %2139 = vmatpush2.msra.mxu0 0.0
        %2140 = vmatprep.subr.mxu0 0.0
        %2141 = vmatpush2.msra.mxu0 0.0
        %2142 = vmatprep.mubr.f32.mxu0 0.0
        %2143 = vmatmul.mubr.f32.gmra.mxu0 %v2076
        %v2144 = vpop.f32.mrf.mxu0
        %v2145 = vadd.f32 %v2072, %v2144
        %v2146 = vpop.f32.mrf.mxu0
        %2147 = vdwg.mxu0
        %v2148 = vadd.f32 %v1937, %v2145
        %v2149 = vld [vmem:[#allocation21] sm:$0x1]
        %v2150 = vld [vmem:[#allocation23] sm:$0x1]
        %v2152 = vlaneseq
        %v2153 = vshrl.u32 %v2152, 7
        %v2154 = vsub.s32 0, %v2153
        %v2155 = vrot.slane %v2149, %v2154
        %v2157 = vmul.f32 %v2155, %v1052
        %v2158 = vmul.f32 %v2157, %v1073
        %v2160 = vlaneseq
        %v2161 = vshrl.u32 %v2160, 7
        %v2162 = vsub.s32 0, %v2161
        %v2163 = vrot.slane %v2150, %v2162
        %v2165 = vadd.f32 %v2158, %v2163
        %v2166 = vld [vmem:[%s17] sm:$0xff]
        %v2167 = vld [vmem:[%s17 + $0x8] sm:$0xff]
        %v2168 = vld [vmem:[%s17 + $0x10] sm:$0xff]
        %v2169 = vld [vmem:[%s17 + $0x18] sm:$0xff]
        %v2170 = vld [vmem:[#allocation24] sm:$0x1]
        %v2172 = vlaneseq
        %v2173 = vshrl.u32 %v2172, 7
        %v2174 = vsub.s32 0, %v2173
        %v2175 = vrot.slane %v2170, %v2174
        %v2178 = vsel %vm1046, %v2165, 0
        %2180 = vmatprep.subr.mxu0 0.0
        %2181 = vmatpush1.msra.mxu0 0.0
        %2182 = vmatprep.subr.mxu0 0.0
        %2183 = vmatpush1.msra.mxu0 0.0
        %2184 = vmatprep.subr.mxu0 0.0
        %2185 = vmatpush1.msra.mxu0 0.0
        %2186 = vmatprep.subr.mxu0 0.0
        %2187 = vmatpush1.msra.mxu0 0.0
        %2188 = vmatprep.subr.mxu0 0.0
        %2189 = vmatpush1.msra.mxu0 0.0
        %2190 = vmatprep.subr.mxu0 0.0
        %2191 = vmatpush1.msra.mxu0 0.0
        %2192 = vmatprep.subr.mxu0 0.0
        %2193 = vmatpush1.msra.mxu0 0.0
        %2194 = vmatprep.subr.mxu0 0.0
        %2195 = vmatpush1.msra.mxu0 0.0
        %2196 = vmatprep.subr.mxu0 0.0
        %2197 = vmatpush1.msra.mxu0 0.0
        %2198 = vmatprep.subr.mxu0 0.0
        %2199 = vmatpush1.msra.mxu0 0.0
        %2200 = vmatprep.subr.mxu0 0.0
        %2201 = vmatpush1.msra.mxu0 0.0
        %2202 = vmatprep.subr.mxu0 0.0
        %2203 = vmatpush1.msra.mxu0 0.0
        %2204 = vmatprep.subr.mxu0 0.0
        %2205 = vmatpush1.msra.mxu0 %v2169
        %2206 = vmatprep.subr.mxu0 0.0
        %2207 = vmatpush1.msra.mxu0 %v2168
        %2208 = vmatprep.subr.mxu0 0.0
        %2209 = vmatpush1.msra.mxu0 %v2167
        %2210 = vmatprep.subr.mxu0 0.0
        %2211 = vmatpush1.msra.mxu0 %v2166
        %2212 = vmatprep.subr.mxu0 0.0
        %2213 = vmatpush2.msra.mxu0 0.0
        %2214 = vmatprep.subr.mxu0 0.0
        %2215 = vmatpush2.msra.mxu0 0.0
        %2216 = vmatprep.subr.mxu0 0.0
        %2217 = vmatpush2.msra.mxu0 0.0
        %2218 = vmatprep.subr.mxu0 0.0
        %2219 = vmatpush2.msra.mxu0 0.0
        %2220 = vmatprep.subr.mxu0 0.0
        %2221 = vmatpush2.msra.mxu0 0.0
        %2222 = vmatprep.subr.mxu0 0.0
        %2223 = vmatpush2.msra.mxu0 0.0
        %2224 = vmatprep.subr.mxu0 0.0
        %2225 = vmatpush2.msra.mxu0 0.0
        %2226 = vmatprep.subr.mxu0 0.0
        %2227 = vmatpush2.msra.mxu0 0.0
        %2228 = vmatprep.subr.mxu0 0.0
        %2229 = vmatpush2.msra.mxu0 0.0
        %2230 = vmatprep.subr.mxu0 0.0
        %2231 = vmatpush2.msra.mxu0 0.0
        %2232 = vmatprep.subr.mxu0 0.0
        %2233 = vmatpush2.msra.mxu0 0.0
        %2234 = vmatprep.subr.mxu0 0.0
        %2235 = vmatpush2.msra.mxu0 0.0
        %2236 = vmatprep.subr.mxu0 0.0
        %2237 = vmatpush2.msra.mxu0 0.0
        %2238 = vmatprep.subr.mxu0 0.0
        %2239 = vmatpush2.msra.mxu0 0.0
        %2240 = vmatprep.subr.mxu0 0.0
        %2241 = vmatpush2.msra.mxu0 0.0
        %2242 = vmatprep.subr.mxu0 0.0
        %2243 = vmatpush2.msra.mxu0 0.0
        %2244 = vmatprep.mubr.f32.mxu0 0.0
        %2245 = vmatmul.mubr.f32.gmra.mxu0 %v2178
        %v2246 = vpop.f32.mrf.mxu0
        %v2247 = vadd.f32 %v2175, %v2246
        %v2248 = vpop.f32.mrf.mxu0
        %2249 = vdwg.mxu0
        %v2251 = vlaneseq
        %v2252 = vshrl.u32 %v2251, 7
        %v2253 = vsub.s32 0, %v2252
        %v2254 = vrot.slane %v1043, %v2253
        %2257 = vrot.lane.b32.xlu0 %v2247, 96
        %v2258 = vpop.permute.xlu0 %2257
        %v2259 = vsel %vm1175, %v2247, 0
        %v2261 = vsel %vm1175, %v2258, 0
        %2263 = vmatprep.subr.mxu0 0.0
        %2264 = vmatpush1.xpose.msra.mxu0 0.0
        %2265 = vmatprep.subr.mxu0 0.0
        %2266 = vmatpush1.xpose.msra.mxu0 0.0
        %2267 = vmatprep.subr.mxu0 0.0
        %2268 = vmatpush1.xpose.msra.mxu0 0.0
        %2269 = vmatprep.subr.mxu0 0.0
        %2270 = vmatpush1.xpose.msra.mxu0 0.0
        %2271 = vmatprep.subr.mxu0 0.0
        %2272 = vmatpush1.xpose.msra.mxu0 0.0
        %2273 = vmatprep.subr.mxu0 0.0
        %2274 = vmatpush1.xpose.msra.mxu0 0.0
        %2275 = vmatprep.subr.mxu0 0.0
        %2276 = vmatpush1.xpose.msra.mxu0 0.0
        %2277 = vmatprep.subr.mxu0 0.0
        %2278 = vmatpush1.xpose.msra.mxu0 0.0
        %2279 = vmatprep.subr.mxu0 0.0
        %2280 = vmatpush1.xpose.msra.mxu0 0.0
        %2281 = vmatprep.subr.mxu0 0.0
        %2282 = vmatpush1.xpose.msra.mxu0 0.0
        %2283 = vmatprep.subr.mxu0 0.0
        %2284 = vmatpush1.xpose.msra.mxu0 0.0
        %2285 = vmatprep.subr.mxu0 0.0
        %2286 = vmatpush1.xpose.msra.mxu0 0.0
        %2287 = vmatprep.subr.mxu0 0.0
        %2288 = vmatpush1.xpose.msra.mxu0 0.0
        %2289 = vmatprep.subr.mxu0 0.0
        %2290 = vmatpush1.xpose.msra.mxu0 0.0
        %2291 = vmatprep.subr.mxu0 0.0
        %2292 = vmatpush1.xpose.msra.mxu0 0.0
        %2293 = vmatprep.subr.mxu0 0.0
        %2294 = vmatpush1.xpose.msra.mxu0 %v2261
        %2295 = vmatprep.subr.mxu0 0.0
        %2296 = vmatpush2.xpose.msra.mxu0 0.0
        %2297 = vmatprep.subr.mxu0 0.0
        %2298 = vmatpush2.xpose.msra.mxu0 0.0
        %2299 = vmatprep.subr.mxu0 0.0
        %2300 = vmatpush2.xpose.msra.mxu0 0.0
        %2301 = vmatprep.subr.mxu0 0.0
        %2302 = vmatpush2.xpose.msra.mxu0 0.0
        %2303 = vmatprep.subr.mxu0 0.0
        %2304 = vmatpush2.xpose.msra.mxu0 0.0
        %2305 = vmatprep.subr.mxu0 0.0
        %2306 = vmatpush2.xpose.msra.mxu0 0.0
        %2307 = vmatprep.subr.mxu0 0.0
        %2308 = vmatpush2.xpose.msra.mxu0 0.0
        %2309 = vmatprep.subr.mxu0 0.0
        %2310 = vmatpush2.xpose.msra.mxu0 0.0
        %2311 = vmatprep.subr.mxu0 0.0
        %2312 = vmatpush2.xpose.msra.mxu0 0.0
        %2313 = vmatprep.subr.mxu0 0.0
        %2314 = vmatpush2.xpose.msra.mxu0 0.0
        %2315 = vmatprep.subr.mxu0 0.0
        %2316 = vmatpush2.xpose.msra.mxu0 0.0
        %2317 = vmatprep.subr.mxu0 0.0
        %2318 = vmatpush2.xpose.msra.mxu0 0.0
        %2319 = vmatprep.subr.mxu0 0.0
        %2320 = vmatpush2.xpose.msra.mxu0 0.0
        %2321 = vmatprep.subr.mxu0 0.0
        %2322 = vmatpush2.xpose.msra.mxu0 0.0
        %2323 = vmatprep.subr.mxu0 0.0
        %2324 = vmatpush2.xpose.msra.mxu0 0.0
        %2325 = vmatprep.subr.mxu0 0.0
        %2326 = vmatpush2.xpose.msra.mxu0 0.0
        %2327 = vmatprep.mubr.f32.mxu0 0.0
        %2328 = vmatmul.mubr.f32.gmra.mxu0 %v2259
        %v2329 = vpop.f32.mrf.mxu0
        %v2330 = vadd.f32 %v2254, %v2329
        %v2331 = vpop.f32.mrf.mxu0
        %2332 = vdwg.mxu0
        %v2333 = vsel %vm1175, %v2330, -inf
        %2334 = vmax.xlane.f32.xlu0 %v2333
        %v2335 = vpop.xlane.xlu0 %2334
        %v2336 = vsub.f32 %v2330, %v2335
        %v2337 = vmul.f32 %v2336, 1.442695
        %v2338 = vpow.pop %v2337
        %v2339 = vsel %vm1175, %v2338, 0.0
        %2340 = vadd.xlane.f32.xlu0 %v2339
        %v2341 = vpop.xlane.xlu0 %2340
        %v2342 = vrcp.pop %v2341
        %v2343 = vmul.f32 %v2338, %v2342
        %2344 = vrot.lane.b32.xlu0 %v2247, 64
        %v2345 = vpop.permute.xlu0 %2344
        %v2348 = vsel %vm1175, %v2343, 0
        %2350 = vmatprep.subr.mxu0 0.0
        %2351 = vmatpush1.msra.mxu0 0.0
        %2352 = vmatprep.subr.mxu0 0.0
        %2353 = vmatpush1.msra.mxu0 0.0
        %2354 = vmatprep.subr.mxu0 0.0
        %2355 = vmatpush1.msra.mxu0 0.0
        %2356 = vmatprep.subr.mxu0 0.0
        %2357 = vmatpush1.msra.mxu0 0.0
        %2358 = vmatprep.subr.mxu0 0.0
        %2359 = vmatpush1.msra.mxu0 0.0
        %2360 = vmatprep.subr.mxu0 0.0
        %2361 = vmatpush1.msra.mxu0 0.0
        %2362 = vmatprep.subr.mxu0 0.0
        %2363 = vmatpush1.msra.mxu0 0.0
        %2364 = vmatprep.subr.mxu0 0.0
        %2365 = vmatpush1.msra.mxu0 0.0
        %2366 = vmatprep.subr.mxu0 0.0
        %2367 = vmatpush1.msra.mxu0 0.0
        %2368 = vmatprep.subr.mxu0 0.0
        %2369 = vmatpush1.msra.mxu0 0.0
        %2370 = vmatprep.subr.mxu0 0.0
        %2371 = vmatpush1.msra.mxu0 0.0
        %2372 = vmatprep.subr.mxu0 0.0
        %2373 = vmatpush1.msra.mxu0 0.0
        %2374 = vmatprep.subr.mxu0 0.0
        %2375 = vmatpush1.msra.mxu0 0.0
        %2376 = vmatprep.subr.mxu0 0.0
        %2377 = vmatpush1.msra.mxu0 0.0
        %2378 = vmatprep.subr.mxu0 0.0
        %2379 = vmatpush1.msra.mxu0 0.0
        %2380 = vmatprep.subr.mxu0 0.0
        %2381 = vmatpush1.msra.mxu0 %v2345
        %2382 = vmatprep.subr.mxu0 0.0
        %2383 = vmatpush2.msra.mxu0 0.0
        %2384 = vmatprep.subr.mxu0 0.0
        %2385 = vmatpush2.msra.mxu0 0.0
        %2386 = vmatprep.subr.mxu0 0.0
        %2387 = vmatpush2.msra.mxu0 0.0
        %2388 = vmatprep.subr.mxu0 0.0
        %2389 = vmatpush2.msra.mxu0 0.0
        %2390 = vmatprep.subr.mxu0 0.0
        %2391 = vmatpush2.msra.mxu0 0.0
        %2392 = vmatprep.subr.mxu0 0.0
        %2393 = vmatpush2.msra.mxu0 0.0
        %2394 = vmatprep.subr.mxu0 0.0
        %2395 = vmatpush2.msra.mxu0 0.0
        %2396 = vmatprep.subr.mxu0 0.0
        %2397 = vmatpush2.msra.mxu0 0.0
        %2398 = vmatprep.subr.mxu0 0.0
        %2399 = vmatpush2.msra.mxu0 0.0
        %2400 = vmatprep.subr.mxu0 0.0
        %2401 = vmatpush2.msra.mxu0 0.0
        %2402 = vmatprep.subr.mxu0 0.0
        %2403 = vmatpush2.msra.mxu0 0.0
        %2404 = vmatprep.subr.mxu0 0.0
        %2405 = vmatpush2.msra.mxu0 0.0
        %2406 = vmatprep.subr.mxu0 0.0
        %2407 = vmatpush2.msra.mxu0 0.0
        %2408 = vmatprep.subr.mxu0 0.0
        %2409 = vmatpush2.msra.mxu0 0.0
        %2410 = vmatprep.subr.mxu0 0.0
        %2411 = vmatpush2.msra.mxu0 0.0
        %2412 = vmatprep.subr.mxu0 0.0
        %2413 = vmatpush2.msra.mxu0 0.0
        %2414 = vmatprep.mubr.f32.mxu0 0.0
        %2415 = vmatmul.mubr.f32.gmra.mxu0 %v2348
        %v2416 = vpop.f32.mrf.mxu0
        %v2417 = vadd.f32 0.0, %v2416
        %v2418 = vpop.f32.mrf.mxu0
        %2419 = vdwg.mxu0
        %2420 = vst.msk [vmem:[#allocation2] sm:$0xff] %vm1175, %v2417
        %2421 = vrot.lane.b32.xlu0 %v2247, 120
        %v2422 = vpop.permute.xlu0 %2421
        %2423 = vrot.lane.b32.xlu0 %v2247, 88
        %v2424 = vpop.permute.xlu0 %2423
        %v2425 = vsel %vm1175, %v2422, 0
        %v2427 = vsel %vm1175, %v2424, 0
        %2429 = vmatprep.subr.mxu0 0.0
        %2430 = vmatpush1.xpose.msra.mxu0 0.0
        %2431 = vmatprep.subr.mxu0 0.0
        %2432 = vmatpush1.xpose.msra.mxu0 0.0
        %2433 = vmatprep.subr.mxu0 0.0
        %2434 = vmatpush1.xpose.msra.mxu0 0.0
        %2435 = vmatprep.subr.mxu0 0.0
        %2436 = vmatpush1.xpose.msra.mxu0 0.0
        %2437 = vmatprep.subr.mxu0 0.0
        %2438 = vmatpush1.xpose.msra.mxu0 0.0
        %2439 = vmatprep.subr.mxu0 0.0
        %2440 = vmatpush1.xpose.msra.mxu0 0.0
        %2441 = vmatprep.subr.mxu0 0.0
        %2442 = vmatpush1.xpose.msra.mxu0 0.0
        %2443 = vmatprep.subr.mxu0 0.0
        %2444 = vmatpush1.xpose.msra.mxu0 0.0
        %2445 = vmatprep.subr.mxu0 0.0
        %2446 = vmatpush1.xpose.msra.mxu0 0.0
        %2447 = vmatprep.subr.mxu0 0.0
        %2448 = vmatpush1.xpose.msra.mxu0 0.0
        %2449 = vmatprep.subr.mxu0 0.0
        %2450 = vmatpush1.xpose.msra.mxu0 0.0
        %2451 = vmatprep.subr.mxu0 0.0
        %2452 = vmatpush1.xpose.msra.mxu0 0.0
        %2453 = vmatprep.subr.mxu0 0.0
        %2454 = vmatpush1.xpose.msra.mxu0 0.0
        %2455 = vmatprep.subr.mxu0 0.0
        %2456 = vmatpush1.xpose.msra.mxu0 0.0
        %2457 = vmatprep.subr.mxu0 0.0
        %2458 = vmatpush1.xpose.msra.mxu0 0.0
        %2459 = vmatprep.subr.mxu0 0.0
        %2460 = vmatpush1.xpose.msra.mxu0 %v2427
        %2461 = vmatprep.subr.mxu0 0.0
        %2462 = vmatpush2.xpose.msra.mxu0 0.0
        %2463 = vmatprep.subr.mxu0 0.0
        %2464 = vmatpush2.xpose.msra.mxu0 0.0
        %2465 = vmatprep.subr.mxu0 0.0
        %2466 = vmatpush2.xpose.msra.mxu0 0.0
        %2467 = vmatprep.subr.mxu0 0.0
        %2468 = vmatpush2.xpose.msra.mxu0 0.0
        %2469 = vmatprep.subr.mxu0 0.0
        %2470 = vmatpush2.xpose.msra.mxu0 0.0
        %2471 = vmatprep.subr.mxu0 0.0
        %2472 = vmatpush2.xpose.msra.mxu0 0.0
        %2473 = vmatprep.subr.mxu0 0.0
        %2474 = vmatpush2.xpose.msra.mxu0 0.0
        %2475 = vmatprep.subr.mxu0 0.0
        %2476 = vmatpush2.xpose.msra.mxu0 0.0
        %2477 = vmatprep.subr.mxu0 0.0
        %2478 = vmatpush2.xpose.msra.mxu0 0.0
        %2479 = vmatprep.subr.mxu0 0.0
        %2480 = vmatpush2.xpose.msra.mxu0 0.0
        %2481 = vmatprep.subr.mxu0 0.0
        %2482 = vmatpush2.xpose.msra.mxu0 0.0
        %2483 = vmatprep.subr.mxu0 0.0
        %2484 = vmatpush2.xpose.msra.mxu0 0.0
        %2485 = vmatprep.subr.mxu0 0.0
        %2486 = vmatpush2.xpose.msra.mxu0 0.0
        %2487 = vmatprep.subr.mxu0 0.0
        %2488 = vmatpush2.xpose.msra.mxu0 0.0
        %2489 = vmatprep.subr.mxu0 0.0
        %2490 = vmatpush2.xpose.msra.mxu0 0.0
        %2491 = vmatprep.subr.mxu0 0.0
        %2492 = vmatpush2.xpose.msra.mxu0 0.0
        %2493 = vmatprep.mubr.f32.mxu0 0.0
        %2494 = vmatmul.mubr.f32.gmra.mxu0 %v2425
        %v2495 = vpop.f32.mrf.mxu0
        %v2496 = vadd.f32 %v2254, %v2495
        %v2497 = vpop.f32.mrf.mxu0
        %2498 = vdwg.mxu0
        %v2499 = vsel %vm1175, %v2496, -inf
        %2500 = vmax.xlane.f32.xlu0 %v2499
        %v2501 = vpop.xlane.xlu0 %2500
        %v2502 = vsub.f32 %v2496, %v2501
        %v2503 = vmul.f32 %v2502, 1.442695
        %v2504 = vpow.pop %v2503
        %v2505 = vsel %vm1175, %v2504, 0.0
        %2506 = vadd.xlane.f32.xlu0 %v2505
        %v2507 = vpop.xlane.xlu0 %2506
        %v2508 = vrcp.pop %v2507
        %v2509 = vmul.f32 %v2504, %v2508
        %2510 = vrot.lane.b32.xlu0 %v2247, 56
        %v2511 = vpop.permute.xlu0 %2510
        %v2514 = vsel %vm1175, %v2509, 0
        %2516 = vmatprep.subr.mxu0 0.0
        %2517 = vmatpush1.msra.mxu0 0.0
        %2518 = vmatprep.subr.mxu0 0.0
        %2519 = vmatpush1.msra.mxu0 0.0
        %2520 = vmatprep.subr.mxu0 0.0
        %2521 = vmatpush1.msra.mxu0 0.0
        %2522 = vmatprep.subr.mxu0 0.0
        %2523 = vmatpush1.msra.mxu0 0.0
        %2524 = vmatprep.subr.mxu0 0.0
        %2525 = vmatpush1.msra.mxu0 0.0
        %2526 = vmatprep.subr.mxu0 0.0
        %2527 = vmatpush1.msra.mxu0 0.0
        %2528 = vmatprep.subr.mxu0 0.0
        %2529 = vmatpush1.msra.mxu0 0.0
        %2530 = vmatprep.subr.mxu0 0.0
        %2531 = vmatpush1.msra.mxu0 0.0
        %2532 = vmatprep.subr.mxu0 0.0
        %2533 = vmatpush1.msra.mxu0 0.0
        %2534 = vmatprep.subr.mxu0 0.0
        %2535 = vmatpush1.msra.mxu0 0.0
        %2536 = vmatprep.subr.mxu0 0.0
        %2537 = vmatpush1.msra.mxu0 0.0
        %2538 = vmatprep.subr.mxu0 0.0
        %2539 = vmatpush1.msra.mxu0 0.0
        %2540 = vmatprep.subr.mxu0 0.0
        %2541 = vmatpush1.msra.mxu0 0.0
        %2542 = vmatprep.subr.mxu0 0.0
        %2543 = vmatpush1.msra.mxu0 0.0
        %2544 = vmatprep.subr.mxu0 0.0
        %2545 = vmatpush1.msra.mxu0 0.0
        %2546 = vmatprep.subr.mxu0 0.0
        %2547 = vmatpush1.msra.mxu0 %v2511
        %2548 = vmatprep.subr.mxu0 0.0
        %2549 = vmatpush2.msra.mxu0 0.0
        %2550 = vmatprep.subr.mxu0 0.0
        %2551 = vmatpush2.msra.mxu0 0.0
        %2552 = vmatprep.subr.mxu0 0.0
        %2553 = vmatpush2.msra.mxu0 0.0
        %2554 = vmatprep.subr.mxu0 0.0
        %2555 = vmatpush2.msra.mxu0 0.0
        %2556 = vmatprep.subr.mxu0 0.0
        %2557 = vmatpush2.msra.mxu0 0.0
        %2558 = vmatprep.subr.mxu0 0.0
        %2559 = vmatpush2.msra.mxu0 0.0
        %2560 = vmatprep.subr.mxu0 0.0
        %2561 = vmatpush2.msra.mxu0 0.0
        %2562 = vmatprep.subr.mxu0 0.0
        %2563 = vmatpush2.msra.mxu0 0.0
        %2564 = vmatprep.subr.mxu0 0.0
        %2565 = vmatpush2.msra.mxu0 0.0
        %2566 = vmatprep.subr.mxu0 0.0
        %2567 = vmatpush2.msra.mxu0 0.0
        %2568 = vmatprep.subr.mxu0 0.0
        %2569 = vmatpush2.msra.mxu0 0.0
        %2570 = vmatprep.subr.mxu0 0.0
        %2571 = vmatpush2.msra.mxu0 0.0
        %2572 = vmatprep.subr.mxu0 0.0
        %2573 = vmatpush2.msra.mxu0 0.0
        %2574 = vmatprep.subr.mxu0 0.0
        %2575 = vmatpush2.msra.mxu0 0.0
        %2576 = vmatprep.subr.mxu0 0.0
        %2577 = vmatpush2.msra.mxu0 0.0
        %2578 = vmatprep.subr.mxu0 0.0
        %2579 = vmatpush2.msra.mxu0 0.0
        %2580 = vmatprep.mubr.f32.mxu0 0.0
        %2581 = vmatmul.mubr.f32.gmra.mxu0 %v2514
        %v2582 = vpop.f32.mrf.mxu0
        %v2583 = vadd.f32 0.0, %v2582
        %v2584 = vpop.f32.mrf.mxu0
        %2585 = vdwg.mxu0
        %2587 = vrot.lane.b32.xlu0 %v2583, 8
        %v2588 = vpop.permute.xlu0 %2587
        %2590 = vst.msk [vmem:[#allocation2] sm:$0xff] %vm1507, %v2588
        %2591 = vrot.lane.b32.xlu0 %v2247, 112
        %v2592 = vpop.permute.xlu0 %2591
        %2593 = vrot.lane.b32.xlu0 %v2247, 80
        %v2594 = vpop.permute.xlu0 %2593
        %v2595 = vsel %vm1175, %v2592, 0
        %v2597 = vsel %vm1175, %v2594, 0
        %2599 = vmatprep.subr.mxu0 0.0
        %2600 = vmatpush1.xpose.msra.mxu0 0.0
        %2601 = vmatprep.subr.mxu0 0.0
        %2602 = vmatpush1.xpose.msra.mxu0 0.0
        %2603 = vmatprep.subr.mxu0 0.0
        %2604 = vmatpush1.xpose.msra.mxu0 0.0
        %2605 = vmatprep.subr.mxu0 0.0
        %2606 = vmatpush1.xpose.msra.mxu0 0.0
        %2607 = vmatprep.subr.mxu0 0.0
        %2608 = vmatpush1.xpose.msra.mxu0 0.0
        %2609 = vmatprep.subr.mxu0 0.0
        %2610 = vmatpush1.xpose.msra.mxu0 0.0
        %2611 = vmatprep.subr.mxu0 0.0
        %2612 = vmatpush1.xpose.msra.mxu0 0.0
        %2613 = vmatprep.subr.mxu0 0.0
        %2614 = vmatpush1.xpose.msra.mxu0 0.0
        %2615 = vmatprep.subr.mxu0 0.0
        %2616 = vmatpush1.xpose.msra.mxu0 0.0
        %2617 = vmatprep.subr.mxu0 0.0
        %2618 = vmatpush1.xpose.msra.mxu0 0.0
        %2619 = vmatprep.subr.mxu0 0.0
        %2620 = vmatpush1.xpose.msra.mxu0 0.0
        %2621 = vmatprep.subr.mxu0 0.0
        %2622 = vmatpush1.xpose.msra.mxu0 0.0
        %2623 = vmatprep.subr.mxu0 0.0
        %2624 = vmatpush1.xpose.msra.mxu0 0.0
        %2625 = vmatprep.subr.mxu0 0.0
        %2626 = vmatpush1.xpose.msra.mxu0 0.0
        %2627 = vmatprep.subr.mxu0 0.0
        %2628 = vmatpush1.xpose.msra.mxu0 0.0
        %2629 = vmatprep.subr.mxu0 0.0
        %2630 = vmatpush1.xpose.msra.mxu0 %v2597
        %2631 = vmatprep.subr.mxu0 0.0
        %2632 = vmatpush2.xpose.msra.mxu0 0.0
        %2633 = vmatprep.subr.mxu0 0.0
        %2634 = vmatpush2.xpose.msra.mxu0 0.0
        %2635 = vmatprep.subr.mxu0 0.0
        %2636 = vmatpush2.xpose.msra.mxu0 0.0
        %2637 = vmatprep.subr.mxu0 0.0
        %2638 = vmatpush2.xpose.msra.mxu0 0.0
        %2639 = vmatprep.subr.mxu0 0.0
        %2640 = vmatpush2.xpose.msra.mxu0 0.0
        %2641 = vmatprep.subr.mxu0 0.0
        %2642 = vmatpush2.xpose.msra.mxu0 0.0
        %2643 = vmatprep.subr.mxu0 0.0
        %2644 = vmatpush2.xpose.msra.mxu0 0.0
        %2645 = vmatprep.subr.mxu0 0.0
        %2646 = vmatpush2.xpose.msra.mxu0 0.0
        %2647 = vmatprep.subr.mxu0 0.0
        %2648 = vmatpush2.xpose.msra.mxu0 0.0
        %2649 = vmatprep.subr.mxu0 0.0
        %2650 = vmatpush2.xpose.msra.mxu0 0.0
        %2651 = vmatprep.subr.mxu0 0.0
        %2652 = vmatpush2.xpose.msra.mxu0 0.0
        %2653 = vmatprep.subr.mxu0 0.0
        %2654 = vmatpush2.xpose.msra.mxu0 0.0
        %2655 = vmatprep.subr.mxu0 0.0
        %2656 = vmatpush2.xpose.msra.mxu0 0.0
        %2657 = vmatprep.subr.mxu0 0.0
        %2658 = vmatpush2.xpose.msra.mxu0 0.0
        %2659 = vmatprep.subr.mxu0 0.0
        %2660 = vmatpush2.xpose.msra.mxu0 0.0
        %2661 = vmatprep.subr.mxu0 0.0
        %2662 = vmatpush2.xpose.msra.mxu0 0.0
        %2663 = vmatprep.mubr.f32.mxu0 0.0
        %2664 = vmatmul.mubr.f32.gmra.mxu0 %v2595
        %v2665 = vpop.f32.mrf.mxu0
        %v2666 = vadd.f32 %v2254, %v2665
        %v2667 = vpop.f32.mrf.mxu0
        %2668 = vdwg.mxu0
        %v2669 = vsel %vm1175, %v2666, -inf
        %2670 = vmax.xlane.f32.xlu0 %v2669
        %v2671 = vpop.xlane.xlu0 %2670
        %v2672 = vsub.f32 %v2666, %v2671
        %v2673 = vmul.f32 %v2672, 1.442695
        %v2674 = vpow.pop %v2673
        %v2675 = vsel %vm1175, %v2674, 0.0
        %2676 = vadd.xlane.f32.xlu0 %v2675
        %v2677 = vpop.xlane.xlu0 %2676
        %v2678 = vrcp.pop %v2677
        %v2679 = vmul.f32 %v2674, %v2678
        %2680 = vrot.lane.b32.xlu0 %v2247, 48
        %v2681 = vpop.permute.xlu0 %2680
        %v2684 = vsel %vm1175, %v2679, 0
        %2686 = vmatprep.subr.mxu0 0.0
        %2687 = vmatpush1.msra.mxu0 0.0
        %2688 = vmatprep.subr.mxu0 0.0
        %2689 = vmatpush1.msra.mxu0 0.0
        %2690 = vmatprep.subr.mxu0 0.0
        %2691 = vmatpush1.msra.mxu0 0.0
        %2692 = vmatprep.subr.mxu0 0.0
        %2693 = vmatpush1.msra.mxu0 0.0
        %2694 = vmatprep.subr.mxu0 0.0
        %2695 = vmatpush1.msra.mxu0 0.0
        %2696 = vmatprep.subr.mxu0 0.0
        %2697 = vmatpush1.msra.mxu0 0.0
        %2698 = vmatprep.subr.mxu0 0.0
        %2699 = vmatpush1.msra.mxu0 0.0
        %2700 = vmatprep.subr.mxu0 0.0
        %2701 = vmatpush1.msra.mxu0 0.0
        %2702 = vmatprep.subr.mxu0 0.0
        %2703 = vmatpush1.msra.mxu0 0.0
        %2704 = vmatprep.subr.mxu0 0.0
        %2705 = vmatpush1.msra.mxu0 0.0
        %2706 = vmatprep.subr.mxu0 0.0
        %2707 = vmatpush1.msra.mxu0 0.0
        %2708 = vmatprep.subr.mxu0 0.0
        %2709 = vmatpush1.msra.mxu0 0.0
        %2710 = vmatprep.subr.mxu0 0.0
        %2711 = vmatpush1.msra.mxu0 0.0
        %2712 = vmatprep.subr.mxu0 0.0
        %2713 = vmatpush1.msra.mxu0 0.0
        %2714 = vmatprep.subr.mxu0 0.0
        %2715 = vmatpush1.msra.mxu0 0.0
        %2716 = vmatprep.subr.mxu0 0.0
        %2717 = vmatpush1.msra.mxu0 %v2681
        %2718 = vmatprep.subr.mxu0 0.0
        %2719 = vmatpush2.msra.mxu0 0.0
        %2720 = vmatprep.subr.mxu0 0.0
        %2721 = vmatpush2.msra.mxu0 0.0
        %2722 = vmatprep.subr.mxu0 0.0
        %2723 = vmatpush2.msra.mxu0 0.0
        %2724 = vmatprep.subr.mxu0 0.0
        %2725 = vmatpush2.msra.mxu0 0.0
        %2726 = vmatprep.subr.mxu0 0.0
        %2727 = vmatpush2.msra.mxu0 0.0
        %2728 = vmatprep.subr.mxu0 0.0
        %2729 = vmatpush2.msra.mxu0 0.0
        %2730 = vmatprep.subr.mxu0 0.0
        %2731 = vmatpush2.msra.mxu0 0.0
        %2732 = vmatprep.subr.mxu0 0.0
        %2733 = vmatpush2.msra.mxu0 0.0
        %2734 = vmatprep.subr.mxu0 0.0
        %2735 = vmatpush2.msra.mxu0 0.0
        %2736 = vmatprep.subr.mxu0 0.0
        %2737 = vmatpush2.msra.mxu0 0.0
        %2738 = vmatprep.subr.mxu0 0.0
        %2739 = vmatpush2.msra.mxu0 0.0
        %2740 = vmatprep.subr.mxu0 0.0
        %2741 = vmatpush2.msra.mxu0 0.0
        %2742 = vmatprep.subr.mxu0 0.0
        %2743 = vmatpush2.msra.mxu0 0.0
        %2744 = vmatprep.subr.mxu0 0.0
        %2745 = vmatpush2.msra.mxu0 0.0
        %2746 = vmatprep.subr.mxu0 0.0
        %2747 = vmatpush2.msra.mxu0 0.0
        %2748 = vmatprep.subr.mxu0 0.0
        %2749 = vmatpush2.msra.mxu0 0.0
        %2750 = vmatprep.mubr.f32.mxu0 0.0
        %2751 = vmatmul.mubr.f32.gmra.mxu0 %v2684
        %v2752 = vpop.f32.mrf.mxu0
        %v2753 = vadd.f32 0.0, %v2752
        %v2754 = vpop.f32.mrf.mxu0
        %2755 = vdwg.mxu0
        %2757 = vrot.lane.b32.xlu0 %v2753, 16
        %v2758 = vpop.permute.xlu0 %2757
        %2760 = vst.msk [vmem:[#allocation2] sm:$0xff] %vm1678, %v2758
        %2761 = vrot.lane.b32.xlu0 %v2247, 104
        %v2762 = vpop.permute.xlu0 %2761
        %2763 = vrot.lane.b32.xlu0 %v2247, 72
        %v2764 = vpop.permute.xlu0 %2763
        %v2765 = vsel %vm1175, %v2762, 0
        %v2767 = vsel %vm1175, %v2764, 0
        %2769 = vmatprep.subr.mxu0 0.0
        %2770 = vmatpush1.xpose.msra.mxu0 0.0
        %2771 = vmatprep.subr.mxu0 0.0
        %2772 = vmatpush1.xpose.msra.mxu0 0.0
        %2773 = vmatprep.subr.mxu0 0.0
        %2774 = vmatpush1.xpose.msra.mxu0 0.0
        %2775 = vmatprep.subr.mxu0 0.0
        %2776 = vmatpush1.xpose.msra.mxu0 0.0
        %2777 = vmatprep.subr.mxu0 0.0
        %2778 = vmatpush1.xpose.msra.mxu0 0.0
        %2779 = vmatprep.subr.mxu0 0.0
        %2780 = vmatpush1.xpose.msra.mxu0 0.0
        %2781 = vmatprep.subr.mxu0 0.0
        %2782 = vmatpush1.xpose.msra.mxu0 0.0
        %2783 = vmatprep.subr.mxu0 0.0
        %2784 = vmatpush1.xpose.msra.mxu0 0.0
        %2785 = vmatprep.subr.mxu0 0.0
        %2786 = vmatpush1.xpose.msra.mxu0 0.0
        %2787 = vmatprep.subr.mxu0 0.0
        %2788 = vmatpush1.xpose.msra.mxu0 0.0
        %2789 = vmatprep.subr.mxu0 0.0
        %2790 = vmatpush1.xpose.msra.mxu0 0.0
        %2791 = vmatprep.subr.mxu0 0.0
        %2792 = vmatpush1.xpose.msra.mxu0 0.0
        %2793 = vmatprep.subr.mxu0 0.0
        %2794 = vmatpush1.xpose.msra.mxu0 0.0
        %2795 = vmatprep.subr.mxu0 0.0
        %2796 = vmatpush1.xpose.msra.mxu0 0.0
        %2797 = vmatprep.subr.mxu0 0.0
        %2798 = vmatpush1.xpose.msra.mxu0 0.0
        %2799 = vmatprep.subr.mxu0 0.0
        %2800 = vmatpush1.xpose.msra.mxu0 %v2767
        %2801 = vmatprep.subr.mxu0 0.0
        %2802 = vmatpush2.xpose.msra.mxu0 0.0
        %2803 = vmatprep.subr.mxu0 0.0
        %2804 = vmatpush2.xpose.msra.mxu0 0.0
        %2805 = vmatprep.subr.mxu0 0.0
        %2806 = vmatpush2.xpose.msra.mxu0 0.0
        %2807 = vmatprep.subr.mxu0 0.0
        %2808 = vmatpush2.xpose.msra.mxu0 0.0
        %2809 = vmatprep.subr.mxu0 0.0
        %2810 = vmatpush2.xpose.msra.mxu0 0.0
        %2811 = vmatprep.subr.mxu0 0.0
        %2812 = vmatpush2.xpose.msra.mxu0 0.0
        %2813 = vmatprep.subr.mxu0 0.0
        %2814 = vmatpush2.xpose.msra.mxu0 0.0
        %2815 = vmatprep.subr.mxu0 0.0
        %2816 = vmatpush2.xpose.msra.mxu0 0.0
        %2817 = vmatprep.subr.mxu0 0.0
        %2818 = vmatpush2.xpose.msra.mxu0 0.0
        %2819 = vmatprep.subr.mxu0 0.0
        %2820 = vmatpush2.xpose.msra.mxu0 0.0
        %2821 = vmatprep.subr.mxu0 0.0
        %2822 = vmatpush2.xpose.msra.mxu0 0.0
        %2823 = vmatprep.subr.mxu0 0.0
        %2824 = vmatpush2.xpose.msra.mxu0 0.0
        %2825 = vmatprep.subr.mxu0 0.0
        %2826 = vmatpush2.xpose.msra.mxu0 0.0
        %2827 = vmatprep.subr.mxu0 0.0
        %2828 = vmatpush2.xpose.msra.mxu0 0.0
        %2829 = vmatprep.subr.mxu0 0.0
        %2830 = vmatpush2.xpose.msra.mxu0 0.0
        %2831 = vmatprep.subr.mxu0 0.0
        %2832 = vmatpush2.xpose.msra.mxu0 0.0
        %2833 = vmatprep.mubr.f32.mxu0 0.0
        %2834 = vmatmul.mubr.f32.gmra.mxu0 %v2765
        %v2835 = vpop.f32.mrf.mxu0
        %v2836 = vadd.f32 %v2254, %v2835
        %v2837 = vpop.f32.mrf.mxu0
        %2838 = vdwg.mxu0
        %v2839 = vsel %vm1175, %v2836, -inf
        %2840 = vmax.xlane.f32.xlu0 %v2839
        %v2841 = vpop.xlane.xlu0 %2840
        %v2842 = vsub.f32 %v2836, %v2841
        %v2843 = vmul.f32 %v2842, 1.442695
        %v2844 = vpow.pop %v2843
        %v2845 = vsel %vm1175, %v2844, 0.0
        %2846 = vadd.xlane.f32.xlu0 %v2845
        %v2847 = vpop.xlane.xlu0 %2846
        %v2848 = vrcp.pop %v2847
        %v2849 = vmul.f32 %v2844, %v2848
        %2850 = vrot.lane.b32.xlu0 %v2247, 40
        %v2851 = vpop.permute.xlu0 %2850
        %v2854 = vsel %vm1175, %v2849, 0
        %2856 = vmatprep.subr.mxu0 0.0
        %2857 = vmatpush1.msra.mxu0 0.0
        %2858 = vmatprep.subr.mxu0 0.0
        %2859 = vmatpush1.msra.mxu0 0.0
        %2860 = vmatprep.subr.mxu0 0.0
        %2861 = vmatpush1.msra.mxu0 0.0
        %2862 = vmatprep.subr.mxu0 0.0
        %2863 = vmatpush1.msra.mxu0 0.0
        %2864 = vmatprep.subr.mxu0 0.0
        %2865 = vmatpush1.msra.mxu0 0.0
        %2866 = vmatprep.subr.mxu0 0.0
        %2867 = vmatpush1.msra.mxu0 0.0
        %2868 = vmatprep.subr.mxu0 0.0
        %2869 = vmatpush1.msra.mxu0 0.0
        %2870 = vmatprep.subr.mxu0 0.0
        %2871 = vmatpush1.msra.mxu0 0.0
        %2872 = vmatprep.subr.mxu0 0.0
        %2873 = vmatpush1.msra.mxu0 0.0
        %2874 = vmatprep.subr.mxu0 0.0
        %2875 = vmatpush1.msra.mxu0 0.0
        %2876 = vmatprep.subr.mxu0 0.0
        %2877 = vmatpush1.msra.mxu0 0.0
        %2878 = vmatprep.subr.mxu0 0.0
        %2879 = vmatpush1.msra.mxu0 0.0
        %2880 = vmatprep.subr.mxu0 0.0
        %2881 = vmatpush1.msra.mxu0 0.0
        %2882 = vmatprep.subr.mxu0 0.0
        %2883 = vmatpush1.msra.mxu0 0.0
        %2884 = vmatprep.subr.mxu0 0.0
        %2885 = vmatpush1.msra.mxu0 0.0
        %2886 = vmatprep.subr.mxu0 0.0
        %2887 = vmatpush1.msra.mxu0 %v2851
        %2888 = vmatprep.subr.mxu0 0.0
        %2889 = vmatpush2.msra.mxu0 0.0
        %2890 = vmatprep.subr.mxu0 0.0
        %2891 = vmatpush2.msra.mxu0 0.0
        %2892 = vmatprep.subr.mxu0 0.0
        %2893 = vmatpush2.msra.mxu0 0.0
        %2894 = vmatprep.subr.mxu0 0.0
        %2895 = vmatpush2.msra.mxu0 0.0
        %2896 = vmatprep.subr.mxu0 0.0
        %2897 = vmatpush2.msra.mxu0 0.0
        %2898 = vmatprep.subr.mxu0 0.0
        %2899 = vmatpush2.msra.mxu0 0.0
        %2900 = vmatprep.subr.mxu0 0.0
        %2901 = vmatpush2.msra.mxu0 0.0
        %2902 = vmatprep.subr.mxu0 0.0
        %2903 = vmatpush2.msra.mxu0 0.0
        %2904 = vmatprep.subr.mxu0 0.0
        %2905 = vmatpush2.msra.mxu0 0.0
        %2906 = vmatprep.subr.mxu0 0.0
        %2907 = vmatpush2.msra.mxu0 0.0
        %2908 = vmatprep.subr.mxu0 0.0
        %2909 = vmatpush2.msra.mxu0 0.0
        %2910 = vmatprep.subr.mxu0 0.0
        %2911 = vmatpush2.msra.mxu0 0.0
        %2912 = vmatprep.subr.mxu0 0.0
        %2913 = vmatpush2.msra.mxu0 0.0
        %2914 = vmatprep.subr.mxu0 0.0
        %2915 = vmatpush2.msra.mxu0 0.0
        %2916 = vmatprep.subr.mxu0 0.0
        %2917 = vmatpush2.msra.mxu0 0.0
        %2918 = vmatprep.subr.mxu0 0.0
        %2919 = vmatpush2.msra.mxu0 0.0
        %2920 = vmatprep.mubr.f32.mxu0 0.0
        %2921 = vmatmul.mubr.f32.gmra.mxu0 %v2854
        %v2922 = vpop.f32.mrf.mxu0
        %v2923 = vadd.f32 0.0, %v2922
        %v2924 = vpop.f32.mrf.mxu0
        %2925 = vdwg.mxu0
        %2927 = vrot.lane.b32.xlu0 %v2923, 24
        %v2928 = vpop.permute.xlu0 %2927
        %2930 = vst.msk [vmem:[#allocation2] sm:$0xff] %vm1849, %v2928
        %v2931 = vld [vmem:[#allocation2] sm:$0xff]
        %v2932 = vld [vmem:[%s19] sm:$0xff]
        %v2933 = vld [vmem:[%s19 + $0x8] sm:$0xff]
        %v2934 = vld [vmem:[%s19 + $0x10] sm:$0xff]
        %v2935 = vld [vmem:[%s19 + $0x18] sm:$0xff]
        %v2937 = vsel %vm1046, %v2931, 0
        %2939 = vmatprep.subr.mxu0 0.0
        %2940 = vmatpush1.msra.mxu0 0.0
        %2941 = vmatprep.subr.mxu0 0.0
        %2942 = vmatpush1.msra.mxu0 0.0
        %2943 = vmatprep.subr.mxu0 0.0
        %2944 = vmatpush1.msra.mxu0 0.0
        %2945 = vmatprep.subr.mxu0 0.0
        %2946 = vmatpush1.msra.mxu0 0.0
        %2947 = vmatprep.subr.mxu0 0.0
        %2948 = vmatpush1.msra.mxu0 0.0
        %2949 = vmatprep.subr.mxu0 0.0
        %2950 = vmatpush1.msra.mxu0 0.0
        %2951 = vmatprep.subr.mxu0 0.0
        %2952 = vmatpush1.msra.mxu0 0.0
        %2953 = vmatprep.subr.mxu0 0.0
        %2954 = vmatpush1.msra.mxu0 0.0
        %2955 = vmatprep.subr.mxu0 0.0
        %2956 = vmatpush1.msra.mxu0 0.0
        %2957 = vmatprep.subr.mxu0 0.0
        %2958 = vmatpush1.msra.mxu0 0.0
        %2959 = vmatprep.subr.mxu0 0.0
        %2960 = vmatpush1.msra.mxu0 0.0
        %2961 = vmatprep.subr.mxu0 0.0
        %2962 = vmatpush1.msra.mxu0 0.0
        %2963 = vmatprep.subr.mxu0 0.0
        %2964 = vmatpush1.msra.mxu0 %v2935
        %2965 = vmatprep.subr.mxu0 0.0
        %2966 = vmatpush1.msra.mxu0 %v2934
        %2967 = vmatprep.subr.mxu0 0.0
        %2968 = vmatpush1.msra.mxu0 %v2933
        %2969 = vmatprep.subr.mxu0 0.0
        %2970 = vmatpush1.msra.mxu0 %v2932
        %2971 = vmatprep.subr.mxu0 0.0
        %2972 = vmatpush2.msra.mxu0 0.0
        %2973 = vmatprep.subr.mxu0 0.0
        %2974 = vmatpush2.msra.mxu0 0.0
        %2975 = vmatprep.subr.mxu0 0.0
        %2976 = vmatpush2.msra.mxu0 0.0
        %2977 = vmatprep.subr.mxu0 0.0
        %2978 = vmatpush2.msra.mxu0 0.0
        %2979 = vmatprep.subr.mxu0 0.0
        %2980 = vmatpush2.msra.mxu0 0.0
        %2981 = vmatprep.subr.mxu0 0.0
        %2982 = vmatpush2.msra.mxu0 0.0
        %2983 = vmatprep.subr.mxu0 0.0
        %2984 = vmatpush2.msra.mxu0 0.0
        %2985 = vmatprep.subr.mxu0 0.0
        %2986 = vmatpush2.msra.mxu0 0.0
        %2987 = vmatprep.subr.mxu0 0.0
        %2988 = vmatpush2.msra.mxu0 0.0
        %2989 = vmatprep.subr.mxu0 0.0
        %2990 = vmatpush2.msra.mxu0 0.0
        %2991 = vmatprep.subr.mxu0 0.0
        %2992 = vmatpush2.msra.mxu0 0.0
        %2993 = vmatprep.subr.mxu0 0.0
        %2994 = vmatpush2.msra.mxu0 0.0
        %2995 = vmatprep.subr.mxu0 0.0
        %2996 = vmatpush2.msra.mxu0 0.0
        %2997 = vmatprep.subr.mxu0 0.0
        %2998 = vmatpush2.msra.mxu0 0.0
        %2999 = vmatprep.subr.mxu0 0.0
        %3000 = vmatpush2.msra.mxu0 0.0
        %3001 = vmatprep.subr.mxu0 0.0
        %3002 = vmatpush2.msra.mxu0 0.0
        %3003 = vmatprep.mubr.f32.mxu0 0.0
        %3004 = vmatmul.mubr.f32.gmra.mxu0 %v2937
        %v3005 = vpop.f32.mrf.mxu0
        %v3006 = vadd.f32 0.0, %v3005
        %v3007 = vpop.f32.mrf.mxu0
        %3008 = vdwg.mxu0
        %v3009 = vadd.f32 %v1037, %v3006
        %v3010 = vld [vmem:[%s20] sm:$0x1]
        %v3012 = vlaneseq
        %v3013 = vshrl.u32 %v3012, 7
        %v3014 = vsub.s32 0, %v3013
        %v3015 = vrot.slane %v3010, %v3014
        %v3017 = vadd.f32 %v3009, %v3015
        %v3018 = vld [vmem:[%s21] sm:$0x1]
        %v3019 = vld [vmem:[%s22] sm:$0x1]
        %v3020 = vsel %vm1046, %v3017, 0.0
        %3021 = vadd.xlane.f32.xlu0 %v3020
        %v3022 = vpop.xlane.xlu0 %3021
        %v3023 = vmul.f32 %v3022, %v1050
        %v3024 = vsub.f32 %v3017, %v3023
        %v3025 = vmul.f32 %v3024, %v3024
        %v3026 = vsel %vm1046, %v3025, 0.0
        %3027 = vadd.xlane.f32.xlu0 %v3026
        %v3028 = vpop.xlane.xlu0 %3027
        %v3029 = vmul.f32 %v3028, 0.032258064
        %v3030 = vrsqrt.pop %v3029
        %v3031 = vmul.f32 %v3029, %v3030
        %vm3032 = vcmp.eq.f32.partialorder %v3029, inf
        %v3033 = vsel %vm3032, %v3029, %v3031
        %vm3034 = vcmp.eq.f32.partialorder %v3029, 0.0
        %v3035 = vand.u32 %v3029, 2147483648
        %v3036 = vsel %vm3034, %v3035, %v3033
        %v3038 = vlaneseq
        %v3039 = vshrl.u32 %v3038, 7
        %v3040 = vsub.s32 0, %v3039
        %v3041 = vrot.slane %v3018, %v3040
        %v3043 = vmul.f32 %v3041, %v3024
        %v3044 = vadd.f32 %v3036, 1e-06
        %v3045 = vrcp.pop %v3044
        %v3046 = vmul.f32 %v3043, %v3045
        %v3048 = vlaneseq
        %v3049 = vshrl.u32 %v3048, 7
        %v3050 = vsub.s32 0, %v3049
        %v3051 = vrot.slane %v3019, %v3050
        %v3053 = vadd.f32 %v3046, %v3051
        %v3054 = vld [vmem:[%s23] sm:$0xff]
        %v3055 = vld [vmem:[%s23 + $0x8] sm:$0xff]
        %v3056 = vld [vmem:[%s23 + $0x10] sm:$0xff]
        %v3057 = vld [vmem:[%s23 + $0x18] sm:$0xff]
        %v3058 = vld [vmem:[%s24] sm:$0x1]
        %v3060 = vlaneseq
        %v3061 = vshrl.u32 %v3060, 7
        %v3062 = vsub.s32 0, %v3061
        %v3063 = vrot.slane %v3058, %v3062
        %v3066 = vsel %vm1046, %v3053, 0
        %3068 = vmatprep.subr.mxu0 0.0
        %3069 = vmatpush1.msra.mxu0 0.0
        %3070 = vmatprep.subr.mxu0 0.0
        %3071 = vmatpush1.msra.mxu0 0.0
        %3072 = vmatprep.subr.mxu0 0.0
        %3073 = vmatpush1.msra.mxu0 0.0
        %3074 = vmatprep.subr.mxu0 0.0
        %3075 = vmatpush1.msra.mxu0 0.0
        %3076 = vmatprep.subr.mxu0 0.0
        %3077 = vmatpush1.msra.mxu0 0.0
        %3078 = vmatprep.subr.mxu0 0.0
        %3079 = vmatpush1.msra.mxu0 0.0
        %3080 = vmatprep.subr.mxu0 0.0
        %3081 = vmatpush1.msra.mxu0 0.0
        %3082 = vmatprep.subr.mxu0 0.0
        %3083 = vmatpush1.msra.mxu0 0.0
        %3084 = vmatprep.subr.mxu0 0.0
        %3085 = vmatpush1.msra.mxu0 0.0
        %3086 = vmatprep.subr.mxu0 0.0
        %3087 = vmatpush1.msra.mxu0 0.0
        %3088 = vmatprep.subr.mxu0 0.0
        %3089 = vmatpush1.msra.mxu0 0.0
        %3090 = vmatprep.subr.mxu0 0.0
        %3091 = vmatpush1.msra.mxu0 0.0
        %3092 = vmatprep.subr.mxu0 0.0
        %3093 = vmatpush1.msra.mxu0 %v3057
        %3094 = vmatprep.subr.mxu0 0.0
        %3095 = vmatpush1.msra.mxu0 %v3056
        %3096 = vmatprep.subr.mxu0 0.0
        %3097 = vmatpush1.msra.mxu0 %v3055
        %3098 = vmatprep.subr.mxu0 0.0
        %3099 = vmatpush1.msra.mxu0 %v3054
        %3100 = vmatprep.subr.mxu0 0.0
        %3101 = vmatpush2.msra.mxu0 0.0
        %3102 = vmatprep.subr.mxu0 0.0
        %3103 = vmatpush2.msra.mxu0 0.0
        %3104 = vmatprep.subr.mxu0 0.0
        %3105 = vmatpush2.msra.mxu0 0.0
        %3106 = vmatprep.subr.mxu0 0.0
        %3107 = vmatpush2.msra.mxu0 0.0
        %3108 = vmatprep.subr.mxu0 0.0
        %3109 = vmatpush2.msra.mxu0 0.0
        %3110 = vmatprep.subr.mxu0 0.0
        %3111 = vmatpush2.msra.mxu0 0.0
        %3112 = vmatprep.subr.mxu0 0.0
        %3113 = vmatpush2.msra.mxu0 0.0
        %3114 = vmatprep.subr.mxu0 0.0
        %3115 = vmatpush2.msra.mxu0 0.0
        %3116 = vmatprep.subr.mxu0 0.0
        %3117 = vmatpush2.msra.mxu0 0.0
        %3118 = vmatprep.subr.mxu0 0.0
        %3119 = vmatpush2.msra.mxu0 0.0
        %3120 = vmatprep.subr.mxu0 0.0
        %3121 = vmatpush2.msra.mxu0 0.0
        %3122 = vmatprep.subr.mxu0 0.0
        %3123 = vmatpush2.msra.mxu0 0.0
        %3124 = vmatprep.subr.mxu0 0.0
        %3125 = vmatpush2.msra.mxu0 0.0
        %3126 = vmatprep.subr.mxu0 0.0
        %3127 = vmatpush2.msra.mxu0 0.0
        %3128 = vmatprep.subr.mxu0 0.0
        %3129 = vmatpush2.msra.mxu0 0.0
        %3130 = vmatprep.subr.mxu0 0.0
        %3131 = vmatpush2.msra.mxu0 0.0
        %3132 = vmatprep.mubr.f32.mxu0 0.0
        %3133 = vmatmul.mubr.f32.gmra.mxu0 %v3066
        %v3134 = vpop.f32.mrf.mxu0
        %v3135 = vadd.f32 %v3063, %v3134
        %v3136 = vpop.f32.mrf.mxu0
        %3137 = vdwg.mxu0
        %v3138 = vmax.f32 %v3135, 0.0
        %v3139 = vld [vmem:[%s25] sm:$0xff]
        %v3140 = vld [vmem:[%s25 + $0x8] sm:$0xff]
        %v3141 = vld [vmem:[%s25 + $0x10] sm:$0xff]
        %v3142 = vld [vmem:[%s25 + $0x18] sm:$0xff]
        %v3143 = vld [vmem:[%s25 + $0x20] sm:$0xff]
        %v3144 = vld [vmem:[%s25 + $0x28] sm:$0xff]
        %v3145 = vld [vmem:[%s25 + $0x30] sm:$0xff]
        %v3146 = vld [vmem:[%s25 + $0x38] sm:$0xff]
        %v3147 = vld [vmem:[%s26] sm:$0x1]
        %v3149 = vlaneseq
        %v3150 = vshrl.u32 %v3149, 7
        %v3151 = vsub.s32 0, %v3150
        %v3152 = vrot.slane %v3147, %v3151
        %v3155 = vsel %vm2074, %v3138, 0
        %3157 = vmatprep.subr.mxu0 0.0
        %3158 = vmatpush1.msra.mxu0 0.0
        %3159 = vmatprep.subr.mxu0 0.0
        %3160 = vmatpush1.msra.mxu0 0.0
        %3161 = vmatprep.subr.mxu0 0.0
        %3162 = vmatpush1.msra.mxu0 0.0
        %3163 = vmatprep.subr.mxu0 0.0
        %3164 = vmatpush1.msra.mxu0 0.0
        %3165 = vmatprep.subr.mxu0 0.0
        %3166 = vmatpush1.msra.mxu0 0.0
        %3167 = vmatprep.subr.mxu0 0.0
        %3168 = vmatpush1.msra.mxu0 0.0
        %3169 = vmatprep.subr.mxu0 0.0
        %3170 = vmatpush1.msra.mxu0 0.0
        %3171 = vmatprep.subr.mxu0 0.0
        %3172 = vmatpush1.msra.mxu0 0.0
        %3173 = vmatprep.subr.mxu0 0.0
        %3174 = vmatpush1.msra.mxu0 %v3146
        %3175 = vmatprep.subr.mxu0 0.0
        %3176 = vmatpush1.msra.mxu0 %v3145
        %3177 = vmatprep.subr.mxu0 0.0
        %3178 = vmatpush1.msra.mxu0 %v3144
        %3179 = vmatprep.subr.mxu0 0.0
        %3180 = vmatpush1.msra.mxu0 %v3143
        %3181 = vmatprep.subr.mxu0 0.0
        %3182 = vmatpush1.msra.mxu0 %v3142
        %3183 = vmatprep.subr.mxu0 0.0
        %3184 = vmatpush1.msra.mxu0 %v3141
        %3185 = vmatprep.subr.mxu0 0.0
        %3186 = vmatpush1.msra.mxu0 %v3140
        %3187 = vmatprep.subr.mxu0 0.0
        %3188 = vmatpush1.msra.mxu0 %v3139
        %3189 = vmatprep.subr.mxu0 0.0
        %3190 = vmatpush2.msra.mxu0 0.0
        %3191 = vmatprep.subr.mxu0 0.0
        %3192 = vmatpush2.msra.mxu0 0.0
        %3193 = vmatprep.subr.mxu0 0.0
        %3194 = vmatpush2.msra.mxu0 0.0
        %3195 = vmatprep.subr.mxu0 0.0
        %3196 = vmatpush2.msra.mxu0 0.0
        %3197 = vmatprep.subr.mxu0 0.0
        %3198 = vmatpush2.msra.mxu0 0.0
        %3199 = vmatprep.subr.mxu0 0.0
        %3200 = vmatpush2.msra.mxu0 0.0
        %3201 = vmatprep.subr.mxu0 0.0
        %3202 = vmatpush2.msra.mxu0 0.0
        %3203 = vmatprep.subr.mxu0 0.0
        %3204 = vmatpush2.msra.mxu0 0.0
        %3205 = vmatprep.subr.mxu0 0.0
        %3206 = vmatpush2.msra.mxu0 0.0
        %3207 = vmatprep.subr.mxu0 0.0
        %3208 = vmatpush2.msra.mxu0 0.0
        %3209 = vmatprep.subr.mxu0 0.0
        %3210 = vmatpush2.msra.mxu0 0.0
        %3211 = vmatprep.subr.mxu0 0.0
        %3212 = vmatpush2.msra.mxu0 0.0
        %3213 = vmatprep.subr.mxu0 0.0
        %3214 = vmatpush2.msra.mxu0 0.0
        %3215 = vmatprep.subr.mxu0 0.0
        %3216 = vmatpush2.msra.mxu0 0.0
        %3217 = vmatprep.subr.mxu0 0.0
        %3218 = vmatpush2.msra.mxu0 0.0
        %3219 = vmatprep.subr.mxu0 0.0
        %3220 = vmatpush2.msra.mxu0 0.0
        %3221 = vmatprep.mubr.f32.mxu0 0.0
        %3222 = vmatmul.mubr.f32.gmra.mxu0 %v3155
        %v3223 = vpop.f32.mrf.mxu0
        %v3224 = vadd.f32 %v3152, %v3223
        %v3225 = vpop.f32.mrf.mxu0
        %3226 = vdwg.mxu0
        %v3227 = vadd.f32 %v3017, %v3224
        %v3228 = vadd.f32 %v2148, %v3227
        %3229 = vst.msk [vmem:[%s1036] sm:$0xff] %vm1046, %v3228
        %s3230 = sand.u32 %s643, 1
        %s3231 = scalar_lea.sflag [#allocation5], %s3230
        %s3232 = sand.u32 %s643, 1
        %s3233 = smul.addr %s3232, 8
        %s3234 = scalar_lea.vmem [#allocation26], %s3233
        // Predicated region
        $region185: #{tpu_custom_call.1} parent=127 // pred_check
          %p3235 = pneg %p653
        $region186: #{tpu_custom_call.1} parent=127 // pred_check_branch
          %3237 = sbr.rel (%p3235) target = $region188
        $region187: #{tpu_custom_call.1} parent=127 // pred_region
          %s3239 = ssub.s32 128, 128
          %3240 = vsyncadd %s3231, %s3239
          %s3241 = smul.addr %s53, 128
          %s3242 = scalar_lea.hbm %s27, %s3241
          %s3244 = sshll.u32 %s3234, 4
          %s3245 = int_to_ptr.vmem [resolvable:$true] %s3244
          %3247 = dma.vmem_to_hbm [thread:$0]  %s3245, 128, %s3242, %s3231
        $region188: #{tpu_custom_call.1} parent=127 // pred_fallthru
          _
      $region128: #{tpu_custom_call.1} parent=5 // pred_fallthru
        _
      %p3248 = scmp.le.s32.totalorder 2, %s48
      // Predicated region
      $region189: #{tpu_custom_call.1} parent=5 // pred_check
        %p3249 = pneg %p3248
      $region190: #{tpu_custom_call.1} parent=5 // pred_check_branch
        %3251 = sbr.rel (%p3249) target = $region192
      $region191: #{tpu_custom_call.1} parent=5 // pred_region
        %s3252 = ssub.s32 %s48, 2
        // Predicated region
        $region193: #{tpu_custom_call.1} parent=191 // pred_check
          %p3253 = pneg %p659
        $region194: #{tpu_custom_call.1} parent=191 // pred_check_branch
          %3255 = sbr.rel (%p3253) target = $region196
        $region195: #{tpu_custom_call.1} parent=191 // pred_region
          %s3256 = sand.u32 %s644, 1
          %s3257 = scalar_lea.sflag [#allocation5], %s3256
          %s3258 = sand.u32 %s644, 1
          %s3259 = smul.addr %s3258, 8
          %s3260 = scalar_lea.vmem [#allocation26], %s3259
          %3261 = dma.done %s3257, 128
        $region196: #{tpu_custom_call.1} parent=191 // pred_fallthru
          _
      $region192: #{tpu_custom_call.1} parent=5 // pred_fallthru
        _
    $region6: #{tpu_custom_call.1} parent=1 // loop_footer
      %s52 = sadd.s32 1, %s48
    $region7: #{tpu_custom_call.1} parent=1 // loop_footer_branch
      %47 = sbr.rel target = $region3
    $region8: #{tpu_custom_call.1} parent=1 // loop_exit
      _
    %3262 = vsyncpa [#allocation4], 1
    %s3263 = scalar_lea.sflag [#allocation4], 1
    %3264 = vsyncpa %s3263, 1
    %3265 = vsyncpa [#allocation7], 1
    %s3266 = scalar_lea.sflag [#allocation7], 1
    %3267 = vsyncpa %s3266, 1
    %3268 = vsyncpa [#allocation10], 1
    %3269 = vsyncpa [#allocation13], 1
    %3270 = vsyncpa [#allocation16], 1
    %3271 = vsyncpa [#allocation19], 1
    %3272 = vsyncpa [#allocation22], 1
    %3273 = vsyncpa [#allocation25], 1
    %3274 = vsyncpa [#allocation5], 1
    %s3275 = scalar_lea.sflag [#allocation5], 1
    %3276 = vsyncpa %s3275, 1

</llo_original>
